<compile_context>
chip_gen: v7x
topology: tpu7x:2x2x1
jax: 0.10.0
libtpu: 0.0.40
codegen_flags: <defaults>
</compile_context>

<pallas_src>
import jax
import jax.numpy as jnp
from jax import lax
from jax.experimental import pallas as pl
from jax.experimental.pallas import tpu as pltpu

LANE = 128


def _round_up(x, m):
    return (x + m - 1) // m * m


def _basic_block_kernel(x_ref, w1_ref, b1_ref, w2_ref, b2_ref, out_ref,
                        xpad_ref, mid_ref):
    # Kernel-view shapes:
    #   x_ref   : (H, W, Cp)      whole image (resident across the H-tile axis)
    #   w*_ref  : (9*Cp, Cp)      3x3 taps stacked along K, BN scale folded in
    #   b*_ref  : (1, Cp)         folded BN shift
    #   out_ref : (TH, W, Cp)     one H-tile of the output
    #   xpad_ref: (H+2, W+2, Cp)  VMEM scratch: zero halo + input interior
    #   mid_ref : (H+2, W+2, Cp)  VMEM scratch: zero halo + conv1/bn1/relu interior
    t = pl.program_id(1)
    H, W, Cp = x_ref.shape
    TH = out_ref.shape[0]
    dn = (((2,), (0,)), ((), ()))  # contract last dim of patches with dim 0 of W

    @pl.when(t == 0)
    def _prologue():
        # Zero only the 1-element halo border (interior is fully overwritten
        # below; doing this per image keeps the "parallel" N axis safe).
        zrow = jnp.zeros((1, W + 2, Cp), jnp.float32)
        zcol = jnp.zeros((H + 2, 1, Cp), jnp.float32)
        xpad_ref[0:1, :, :] = zrow
        xpad_ref[H + 1:H + 2, :, :] = zrow
        xpad_ref[:, 0:1, :] = zcol
        xpad_ref[:, W + 1:W + 2, :] = zcol
        mid_ref[0:1, :, :] = zrow
        mid_ref[H + 1:H + 2, :, :] = zrow
        mid_ref[:, 0:1, :] = zcol
        mid_ref[:, W + 1:W + 2, :] = zcol

        # In-kernel halo: copy the unpadded input into the scratch interior.
        xpad_ref[1:H + 1, 1:W + 1, :] = x_ref[...].astype(jnp.float32)

        # conv1 (3x3, stride 1, pad 1) + folded BN1 + ReLU as a single MXU
        # matmul: stack the 9 shifted taps along channels -> K = 9*Cp.
        taps1 = [xpad_ref[dy:dy + H, dx:dx + W, :]
                 for dy in range(3) for dx in range(3)]
        p1 = jnp.concatenate(taps1, axis=-1)                     # (H, W, 9*Cp)
        y1 = lax.dot_general(p1.astype(w1_ref.dtype), w1_ref[...], dn,
                             preferred_element_type=jnp.float32) + b1_ref[...]
        mid_ref[1:H + 1, 1:W + 1, :] = jnp.maximum(y1, 0.0)

    # conv2 (+ folded BN2) for this H-tile, again one matmul with K = 9*Cp.
    r0 = pl.multiple_of(t * TH, TH)
    mwin = mid_ref[pl.ds(r0, TH + 2), :, :]                      # (TH+2, W+2, Cp)
    taps2 = [mwin[dy:dy + TH, dx:dx + W, :]
             for dy in range(3) for dx in range(3)]
    p2 = jnp.concatenate(taps2, axis=-1)                         # (TH, W, 9*Cp)
    y2 = lax.dot_general(p2.astype(w2_ref.dtype), w2_ref[...], dn,
                         preferred_element_type=jnp.float32) + b2_ref[...]

    # residual add (stride=1 / no-downsample path) + ReLU, lane-dense store.
    res = x_ref[pl.ds(r0, TH), :, :].astype(jnp.float32)
    out_ref[...] = jnp.maximum(y2 + res, 0.0).astype(out_ref.dtype)


def _fold_bn(bn_params, eps):
    gamma, beta, mean, var = bn_params
    scale = gamma / jnp.sqrt(var + eps)
    shift = beta - mean * scale
    return scale, shift


def prepare_basic_block_params(w1, bn1, w2, bn2, cp, eps=1e-5,
                               compute_dtype=jnp.float32):
    """Fold BN scale into conv weights, flatten 3x3 taps, pad channels to cp."""
    c_in, c_out = w1.shape[2], w1.shape[3]
    assert c_in == c_out, "stride=1 / no-downsample BasicBlock needs Cin == Cout"
    s1, b1 = _fold_bn(bn1, eps)
    s2, b2 = _fold_bn(bn2, eps)
    w1s = (w1 * s1[None, None, None, :]).astype(jnp.float32)
    w2s = (w2 * s2[None, None, None, :]).astype(jnp.float32)

    def pad_and_flatten(w):
        w = jnp.pad(w, ((0, 0), (0, 0),
                        (0, cp - w.shape[2]), (0, cp - w.shape[3])))
        return w.reshape(9 * cp, cp).astype(compute_dtype)

    w1p = pad_and_flatten(w1s)
    w2p = pad_and_flatten(w2s)
    b1p = jnp.pad(b1, (0, cp - c_out)).reshape(1, cp).astype(jnp.float32)
    b2p = jnp.pad(b2, (0, cp - c_out)).reshape(1, cp).astype(jnp.float32)
    return (w1p, b1p, w2p, b2p)


def basic_block(x_nhwc_p, params, *, tile_h=8):
    """One BasicBlock (stride=1, no downsample) on channel-padded NHWC input."""
    w1p, b1p, w2p, b2p = params
    N, H, W, Cp = x_nhwc_p.shape
    assert Cp % LANE == 0 and W % 8 == 0
    assert w1p.shape == (9 * Cp, Cp) and w2p.shape == (9 * Cp, Cp)

    th = tile_h if (tile_h <= H and H % tile_h == 0) else H
    T = H // th

    itm = jnp.dtype(x_nhwc_p.dtype).itemsize
    wit = jnp.dtype(w1p.dtype).itemsize
    est = (2 * H * W * Cp * itm              # double-buffered input block
           + 2 * th * W * Cp * itm           # double-buffered output block
           + 2 * 2 * 9 * Cp * Cp * wit       # both weight blocks (buffered)
           + 2 * (H + 2) * (W + 2) * Cp * 4  # halo scratches
           + 2 * 9 * H * W * Cp * 4)         # tap/concat temporaries
    vmem_limit = int(min(64 * 2 ** 20, max(32 * 2 ** 20, 2 * est)))

    grid_spec = pltpu.PrefetchScalarGridSpec(
        num_scalar_prefetch=0,
        grid=(N, T),
        in_specs=[
            pl.BlockSpec((None, H, W, Cp), lambda n, t: (n, 0, 0, 0)),
            pl.BlockSpec((9 * Cp, Cp), lambda n, t: (0, 0)),
            pl.BlockSpec((1, Cp), lambda n, t: (0, 0)),
            pl.BlockSpec((9 * Cp, Cp), lambda n, t: (0, 0)),
            pl.BlockSpec((1, Cp), lambda n, t: (0, 0)),
        ],
        out_specs=pl.BlockSpec((None, th, W, Cp), lambda n, t: (n, t, 0, 0)),
        scratch_shapes=[
            pltpu.VMEM((H + 2, W + 2, Cp), jnp.float32),   # padded input
            pltpu.VMEM((H + 2, W + 2, Cp), jnp.float32),   # padded conv1 output
        ],
    )
    return pl.pallas_call(
        _basic_block_kernel,
        out_shape=jax.ShapeDtypeStruct((N, H, W, Cp), x_nhwc_p.dtype),
        grid_spec=grid_spec,
        compiler_params=pltpu.CompilerParams(
            dimension_semantics=("parallel", "arbitrary"),
            vmem_limit_bytes=vmem_limit),
    )(x_nhwc_p, w1p, b1p, w2p, b2p)


def hrnet_branch_forward(x_nchw, block_params_list, *, tile_h=8):
    """`self.branches[i](x[i])`: chain of stride-1 BasicBlocks. NCHW in/out."""
    N, C, H, W = x_nchw.shape
    cp = _round_up(C, LANE)
    x = jnp.transpose(x_nchw, (0, 2, 3, 1))                 # NCHW -> NHWC
    x = jnp.pad(x, ((0, 0), (0, 0), (0, 0), (0, cp - C)))   # lane-dense channels
    for params in block_params_list:
        x = basic_block(x, params, tile_h=tile_h)
    return jnp.transpose(x[..., :C], (0, 3, 1, 2))          # back to NCHW


# ----------------------------- pure-JAX reference -----------------------------
def _bn_ref(y, p, eps):
    g, b, m, v = p
    return (y - m) / jnp.sqrt(v + eps) * g + b


def basic_block_reference(x_nhwc, w1, bn1, w2, bn2, eps=1e-5):
    dn = ("NHWC", "HWIO", "NHWC")
    y = lax.conv_general_dilated(x_nhwc, w1, (1, 1), "SAME", dimension_numbers=dn)
    y = jax.nn.relu(_bn_ref(y, bn1, eps))
    y = lax.conv_general_dilated(y, w2, (1, 1), "SAME", dimension_numbers=dn)
    return jax.nn.relu(_bn_ref(y, bn2, eps) + x_nhwc)


def hrnet_branch_reference(x_nchw, raw_params_list, eps=1e-5):
    x = jnp.transpose(x_nchw, (0, 2, 3, 1))
    for (w1, bn1, w2, bn2) in raw_params_list:
        x = basic_block_reference(x, w1, bn1, w2, bn2, eps)
    return jnp.transpose(x, (0, 3, 1, 2))


if __name__ == "__main__":
    key = jax.random.PRNGKey(0)
    N = 2
    num_blocks = 2
    eps = 1e-5
    # Two HRNet branches (C, H, W): high-res 32ch @ 16x16, low-res 64ch @ 8x8.
    branch_cfgs = [(32, 16, 16), (64, 8, 8)]

    for b_idx, (C, H, W) in enumerate(branch_cfgs):
        key, kx = jax.random.split(key)
        x = jax.random.normal(kx, (N, C, H, W), jnp.float32)

        cp = _round_up(C, LANE)
        raw_params, prepped = [], []
        for _ in range(num_blocks):
            key, k1, k2, k3, k4, k5, k6, k7, k8, k9, k10 = jax.random.split(key, 11)
            w1 = 0.1 * jax.random.normal(k1, (3, 3, C, C), jnp.float32)
            w2 = 0.1 * jax.random.normal(k2, (3, 3, C, C), jnp.float32)
            bn1 = (jax.random.uniform(k3, (C,), jnp.float32, 0.5, 1.5),
                   0.1 * jax.random.normal(k4, (C,), jnp.float32),
                   0.1 * jax.random.normal(k5, (C,), jnp.float32),
                   jax.random.uniform(k6, (C,), jnp.float32, 0.5, 1.5))
            bn2 = (jax.random.uniform(k7, (C,), jnp.float32, 0.5, 1.5),
                   0.1 * jax.random.normal(k8, (C,), jnp.float32),
                   0.1 * jax.random.normal(k9, (C,), jnp.float32),
                   jax.random.uniform(k10, (C,), jnp.float32, 0.5, 1.5))
            raw_params.append((w1, bn1, w2, bn2))
            prepped.append(prepare_basic_block_params(w1, bn1, w2, bn2, cp, eps))

        out = jax.block_until_ready(hrnet_branch_forward(x, prepped, tile_h=8))
        ref = jax.block_until_ready(hrnet_branch_reference(x, raw_params, eps))
        assert out.shape == ref.shape
        err = float(jnp.max(jnp.abs(out - ref)))
        assert jnp.allclose(out, ref, rtol=1e-3, atol=1e-3), (
            f"branch {b_idx}: max abs err {err}")

    print("KERNEL_OK")
</pallas_src>

<mosaic_0001>
module attributes {stable_mosaic.version = 11 : i64} {
  func.func @_basic_block_kernel(%arg0: i32, %arg1: i32, %arg2: memref<1x16x16x128xf32, #tpu.memory_space<vmem>>, %arg3: memref<1152x128xf32, #tpu.memory_space<vmem>>, %arg4: memref<1x128xf32, #tpu.memory_space<vmem>>, %arg5: memref<1152x128xf32, #tpu.memory_space<vmem>>, %arg6: memref<1x128xf32, #tpu.memory_space<vmem>>, %arg7: memref<1x8x16x128xf32, #tpu.memory_space<vmem>>, %arg8: memref<18x18x128xf32, #tpu.memory_space<vmem>>, %arg9: memref<18x18x128xf32, #tpu.memory_space<vmem>>) attributes {dimension_semantics = [#tpu.dimension_semantics<parallel>, #tpu.dimension_semantics<arbitrary>], iteration_bounds = array<i64: 2, 2>, scalar_prefetch = 0 : i64, scratch_operands = 2 : i64, tpu.core_type = #tpu.core_type<tc>, window_params = [{transform_indices = @transform_0, window_bounds = array<i64: 1, 16, 16, 128>}, {pipeline_mode = #tpu.pipeline_mode<synchronous>, transform_indices = @transform_1, window_bounds = array<i64: 1152, 128>}, {pipeline_mode = #tpu.pipeline_mode<synchronous>, transform_indices = @transform_2, window_bounds = array<i64: 1, 128>}, {pipeline_mode = #tpu.pipeline_mode<synchronous>, transform_indices = @transform_3, window_bounds = array<i64: 1152, 128>}, {pipeline_mode = #tpu.pipeline_mode<synchronous>, transform_indices = @transform_4, window_bounds = array<i64: 1, 128>}, {transform_indices = @transform_5, window_bounds = array<i64: 1, 8, 16, 128>}]} {
    %c0_i32 = arith.constant 0 : i32
    %0 = arith.cmpi eq, %arg1, %c0_i32 : i32
    %1 = arith.extui %0 : i1 to i32
    %c0_i32_0 = arith.constant 0 : i32
    %2 = arith.cmpi ne, %1, %c0_i32_0 : i32
    scf.if %2 {
      %cst_14 = arith.constant 0.000000e+00 : f32
      %32 = vector.broadcast %cst_14 : f32 to vector<1x18x128xf32>
      %cst_15 = arith.constant 0.000000e+00 : f32
      %33 = vector.broadcast %cst_15 : f32 to vector<18x1x128xf32>
      %c0_16 = arith.constant 0 : index
      %c0_17 = arith.constant 0 : index
      %c0_18 = arith.constant 0 : index
      %34 = vector.load %arg8[%c0_16, %c0_17, %c0_18] : memref<18x18x128xf32, #tpu.memory_space<vmem>>, vector<1x18x128xf32>
      tpu.vector_store %arg8[%c0_16, %c0_17, %c0_18], %32 {strides = array<i32>} : memref<18x18x128xf32, #tpu.memory_space<vmem>>, vector<1x18x128xf32>,
      %c17 = arith.constant 17 : index
      %c0_19 = arith.constant 0 : index
      %c0_20 = arith.constant 0 : index
      %35 = vector.load %arg8[%c17, %c0_19, %c0_20] : memref<18x18x128xf32, #tpu.memory_space<vmem>>, vector<1x18x128xf32>
      tpu.vector_store %arg8[%c17, %c0_19, %c0_20], %32 {strides = array<i32>} : memref<18x18x128xf32, #tpu.memory_space<vmem>>, vector<1x18x128xf32>,
      %c0_21 = arith.constant 0 : index
      %c0_22 = arith.constant 0 : index
      %c0_23 = arith.constant 0 : index
      %36 = vector.load %arg8[%c0_21, %c0_22, %c0_23] : memref<18x18x128xf32, #tpu.memory_space<vmem>>, vector<18x1x128xf32>
      tpu.vector_store %arg8[%c0_21, %c0_22, %c0_23], %33 {strides = array<i32>} : memref<18x18x128xf32, #tpu.memory_space<vmem>>, vector<18x1x128xf32>,
      %c0_24 = arith.constant 0 : index
      %c17_25 = arith.constant 17 : index
      %c0_26 = arith.constant 0 : index
      %37 = vector.load %arg8[%c0_24, %c17_25, %c0_26] : memref<18x18x128xf32, #tpu.memory_space<vmem>>, vector<18x1x128xf32>
      tpu.vector_store %arg8[%c0_24, %c17_25, %c0_26], %33 {strides = array<i32>} : memref<18x18x128xf32, #tpu.memory_space<vmem>>, vector<18x1x128xf32>,
      %c0_27 = arith.constant 0 : index
      %c0_28 = arith.constant 0 : index
      %c0_29 = arith.constant 0 : index
      %38 = vector.load %arg9[%c0_27, %c0_28, %c0_29] : memref<18x18x128xf32, #tpu.memory_space<vmem>>, vector<1x18x128xf32>
      tpu.vector_store %arg9[%c0_27, %c0_28, %c0_29], %32 {strides = array<i32>} : memref<18x18x128xf32, #tpu.memory_space<vmem>>, vector<1x18x128xf32>,
      %c17_30 = arith.constant 17 : index
      %c0_31 = arith.constant 0 : index
      %c0_32 = arith.constant 0 : index
      %39 = vector.load %arg9[%c17_30, %c0_31, %c0_32] : memref<18x18x128xf32, #tpu.memory_space<vmem>>, vector<1x18x128xf32>
      tpu.vector_store %arg9[%c17_30, %c0_31, %c0_32], %32 {strides = array<i32>} : memref<18x18x128xf32, #tpu.memory_space<vmem>>, vector<1x18x128xf32>,
      %c0_33 = arith.constant 0 : index
      %c0_34 = arith.constant 0 : index
      %c0_35 = arith.constant 0 : index
      %40 = vector.load %arg9[%c0_33, %c0_34, %c0_35] : memref<18x18x128xf32, #tpu.memory_space<vmem>>, vector<18x1x128xf32>
      tpu.vector_store %arg9[%c0_33, %c0_34, %c0_35], %33 {strides = array<i32>} : memref<18x18x128xf32, #tpu.memory_space<vmem>>, vector<18x1x128xf32>,
      %c0_36 = arith.constant 0 : index
      %c17_37 = arith.constant 17 : index
      %c0_38 = arith.constant 0 : index
      %41 = vector.load %arg9[%c0_36, %c17_37, %c0_38] : memref<18x18x128xf32, #tpu.memory_space<vmem>>, vector<18x1x128xf32>
      tpu.vector_store %arg9[%c0_36, %c17_37, %c0_38], %33 {strides = array<i32>} : memref<18x18x128xf32, #tpu.memory_space<vmem>>, vector<18x1x128xf32>,
      %c0_39 = arith.constant 0 : index
      %c0_40 = arith.constant 0 : index
      %c0_41 = arith.constant 0 : index
      %c0_42 = arith.constant 0 : index
      %42 = vector.load %arg2[%c0_39, %c0_40, %c0_41, %c0_42] : memref<1x16x16x128xf32, #tpu.memory_space<vmem>>, vector<1x16x16x128xf32>
      %43 = vector.shape_cast %42 : vector<1x16x16x128xf32> to vector<16x16x128xf32>
      %c1 = arith.constant 1 : index
      %c1_43 = arith.constant 1 : index
      %c0_44 = arith.constant 0 : index
      %44 = vector.load %arg8[%c1, %c1_43, %c0_44] : memref<18x18x128xf32, #tpu.memory_space<vmem>>, vector<16x16x128xf32>
      tpu.vector_store %arg8[%c1, %c1_43, %c0_44], %43 {strides = array<i32>} : memref<18x18x128xf32, #tpu.memory_space<vmem>>, vector<16x16x128xf32>,
      %c0_45 = arith.constant 0 : index
      %c0_46 = arith.constant 0 : index
      %c0_47 = arith.constant 0 : index
      %45 = vector.load %arg8[%c0_45, %c0_46, %c0_47] : memref<18x18x128xf32, #tpu.memory_space<vmem>>, vector<16x16x128xf32>
      %c0_48 = arith.constant 0 : index
      %c1_49 = arith.constant 1 : index
      %c0_50 = arith.constant 0 : index
      %46 = vector.load %arg8[%c0_48, %c1_49, %c0_50] : memref<18x18x128xf32, #tpu.memory_space<vmem>>, vector<16x16x128xf32>
      %c0_51 = arith.constant 0 : index
      %c2 = arith.constant 2 : index
      %c0_52 = arith.constant 0 : index
      %47 = vector.load %arg8[%c0_51, %c2, %c0_52] : memref<18x18x128xf32, #tpu.memory_space<vmem>>, vector<16x16x128xf32>
      %c1_53 = arith.constant 1 : index
      %c0_54 = arith.constant 0 : index
      %c0_55 = arith.constant 0 : index
      %48 = vector.load %arg8[%c1_53, %c0_54, %c0_55] : memref<18x18x128xf32, #tpu.memory_space<vmem>>, vector<16x16x128xf32>
      %c1_56 = arith.constant 1 : index
      %c1_57 = arith.constant 1 : index
      %c0_58 = arith.constant 0 : index
      %49 = vector.load %arg8[%c1_56, %c1_57, %c0_58] : memref<18x18x128xf32, #tpu.memory_space<vmem>>, vector<16x16x128xf32>
      %c1_59 = arith.constant 1 : index
      %c2_60 = arith.constant 2 : index
      %c0_61 = arith.constant 0 : index
      %50 = vector.load %arg8[%c1_59, %c2_60, %c0_61] : memref<18x18x128xf32, #tpu.memory_space<vmem>>, vector<16x16x128xf32>
      %c2_62 = arith.constant 2 : index
      %c0_63 = arith.constant 0 : index
      %c0_64 = arith.constant 0 : index
      %51 = vector.load %arg8[%c2_62, %c0_63, %c0_64] : memref<18x18x128xf32, #tpu.memory_space<vmem>>, vector<16x16x128xf32>
      %c2_65 = arith.constant 2 : index
      %c1_66 = arith.constant 1 : index
      %c0_67 = arith.constant 0 : index
      %52 = vector.load %arg8[%c2_65, %c1_66, %c0_67] : memref<18x18x128xf32, #tpu.memory_space<vmem>>, vector<16x16x128xf32>
      %c2_68 = arith.constant 2 : index
      %c2_69 = arith.constant 2 : index
      %c0_70 = arith.constant 0 : index
      %53 = vector.load %arg8[%c2_68, %c2_69, %c0_70] : memref<18x18x128xf32, #tpu.memory_space<vmem>>, vector<16x16x128xf32>
      %54 = tpu.concatenate %45, %46, %47, %48, %49, %50, %51, %52, %53 in 2 : vector<16x16x128xf32>, vector<16x16x128xf32>, vector<16x16x128xf32>, vector<16x16x128xf32>, vector<16x16x128xf32>, vector<16x16x128xf32>, vector<16x16x128xf32>, vector<16x16x128xf32>, vector<16x16x128xf32> -> vector<16x16x1152xf32>
      %c0_71 = arith.constant 0 : index
      %c0_72 = arith.constant 0 : index
      %55 = vector.load %arg3[%c0_71, %c0_72] : memref<1152x128xf32, #tpu.memory_space<vmem>>, vector<1152x128xf32>
      %cst_73 = arith.constant dense<0.000000e+00> : vector<16x16x128xf32>
      %56 = tpu.matmul %54, %55, %cst_73 {dimension_numbers = #tpu.dot_dimension_numbers<[2], [0], [0, 1], [1], [0, 0, 0, 1, 1, 1], [], []>} : vector<16x16x1152xf32>, vector<1152x128xf32>, vector<16x16x128xf32> -> vector<16x16x128xf32>
      %c0_74 = arith.constant 0 : index
      %c0_75 = arith.constant 0 : index
      %57 = vector.load %arg4[%c0_74, %c0_75] : memref<1x128xf32, #tpu.memory_space<vmem>>, vector<1x128xf32>
      %58 = vector.shape_cast %57 : vector<1x128xf32> to vector<1x1x128xf32>
      %59 = vector.broadcast %58 : vector<1x1x128xf32> to vector<16x16x128xf32>
      %60 = arith.addf %56, %59 : vector<16x16x128xf32>
      %cst_76 = arith.constant 0.000000e+00 : f32
      %61 = vector.broadcast %cst_76 : f32 to vector<16x16x128xf32>
      %62 = arith.maximumf %60, %61 : vector<16x16x128xf32>
      %c1_77 = arith.constant 1 : index
      %c1_78 = arith.constant 1 : index
      %c0_79 = arith.constant 0 : index
      %63 = vector.load %arg9[%c1_77, %c1_78, %c0_79] : memref<18x18x128xf32, #tpu.memory_space<vmem>>, vector<16x16x128xf32>
      tpu.vector_store %arg9[%c1_77, %c1_78, %c0_79], %62 {strides = array<i32>} : memref<18x18x128xf32, #tpu.memory_space<vmem>>, vector<16x16x128xf32>,
    } else {
    }
    %c8_i32 = arith.constant 8 : i32
    %3 = arith.muli %arg1, %c8_i32 : i32
    %4 = tpu.assume_multiple %3, 8 : i32
    %5 = arith.index_cast %4 : i32 to index
    %c0 = arith.constant 0 : index
    %c0_1 = arith.constant 0 : index
    %6 = vector.load %arg9[%5, %c0, %c0_1] : memref<18x18x128xf32, #tpu.memory_space<vmem>>, vector<10x18x128xf32>
    %7 = vector.extract_strided_slice %6 {offsets = [0, 0, 0], sizes = [8, 16, 128], strides = [1, 1, 1]} : vector<10x18x128xf32> to vector<8x16x128xf32>
    %8 = vector.extract_strided_slice %6 {offsets = [0, 1, 0], sizes = [8, 16, 128], strides = [1, 1, 1]} : vector<10x18x128xf32> to vector<8x16x128xf32>
    %9 = vector.extract_strided_slice %6 {offsets = [0, 2, 0], sizes = [8, 16, 128], strides = [1, 1, 1]} : vector<10x18x128xf32> to vector<8x16x128xf32>
    %10 = vector.extract_strided_slice %6 {offsets = [1, 0, 0], sizes = [8, 16, 128], strides = [1, 1, 1]} : vector<10x18x128xf32> to vector<8x16x128xf32>
    %11 = vector.extract_strided_slice %6 {offsets = [1, 1, 0], sizes = [8, 16, 128], strides = [1, 1, 1]} : vector<10x18x128xf32> to vector<8x16x128xf32>
    %12 = vector.extract_strided_slice %6 {offsets = [1, 2, 0], sizes = [8, 16, 128], strides = [1, 1, 1]} : vector<10x18x128xf32> to vector<8x16x128xf32>
    %13 = vector.extract_strided_slice %6 {offsets = [2, 0, 0], sizes = [8, 16, 128], strides = [1, 1, 1]} : vector<10x18x128xf32> to vector<8x16x128xf32>
    %14 = vector.extract_strided_slice %6 {offsets = [2, 1, 0], sizes = [8, 16, 128], strides = [1, 1, 1]} : vector<10x18x128xf32> to vector<8x16x128xf32>
    %15 = vector.extract_strided_slice %6 {offsets = [2, 2, 0], sizes = [8, 16, 128], strides = [1, 1, 1]} : vector<10x18x128xf32> to vector<8x16x128xf32>
    %16 = tpu.concatenate %7, %8, %9, %10, %11, %12, %13, %14, %15 in 2 : vector<8x16x128xf32>, vector<8x16x128xf32>, vector<8x16x128xf32>, vector<8x16x128xf32>, vector<8x16x128xf32>, vector<8x16x128xf32>, vector<8x16x128xf32>, vector<8x16x128xf32>, vector<8x16x128xf32> -> vector<8x16x1152xf32>
    %c0_2 = arith.constant 0 : index
    %c0_3 = arith.constant 0 : index
    %17 = vector.load %arg5[%c0_2, %c0_3] : memref<1152x128xf32, #tpu.memory_space<vmem>>, vector<1152x128xf32>
    %cst = arith.constant dense<0.000000e+00> : vector<8x16x128xf32>
    %18 = tpu.matmul %16, %17, %cst {dimension_numbers = #tpu.dot_dimension_numbers<[2], [0], [0, 1], [1], [0, 0, 0, 1, 1, 1], [], []>} : vector<8x16x1152xf32>, vector<1152x128xf32>, vector<8x16x128xf32> -> vector<8x16x128xf32>
    %c0_4 = arith.constant 0 : index
    %c0_5 = arith.constant 0 : index
    %19 = vector.load %arg6[%c0_4, %c0_5] : memref<1x128xf32, #tpu.memory_space<vmem>>, vector<1x128xf32>
    %20 = vector.shape_cast %19 : vector<1x128xf32> to vector<1x1x128xf32>
    %21 = vector.broadcast %20 : vector<1x1x128xf32> to vector<8x16x128xf32>
    %22 = arith.addf %18, %21 : vector<8x16x128xf32>
    %c0_6 = arith.constant 0 : index
    %23 = arith.index_cast %4 : i32 to index
    %c0_7 = arith.constant 0 : index
    %c0_8 = arith.constant 0 : index
    %24 = vector.load %arg2[%c0_6, %23, %c0_7, %c0_8] : memref<1x16x16x128xf32, #tpu.memory_space<vmem>>, vector<1x8x16x128xf32>
    %25 = vector.shape_cast %24 : vector<1x8x16x128xf32> to vector<8x16x128xf32>
    %26 = arith.addf %22, %25 : vector<8x16x128xf32>
    %cst_9 = arith.constant 0.000000e+00 : f32
    %27 = vector.broadcast %cst_9 : f32 to vector<8x16x128xf32>
    %28 = arith.maximumf %26, %27 : vector<8x16x128xf32>
    %c0_10 = arith.constant 0 : index
    %c0_11 = arith.constant 0 : index
    %c0_12 = arith.constant 0 : index
    %c0_13 = arith.constant 0 : index
    %29 = vector.load %arg7[%c0_10, %c0_11, %c0_12, %c0_13] : memref<1x8x16x128xf32, #tpu.memory_space<vmem>>, vector<1x8x16x128xf32>
    %30 = vector.shape_cast %29 : vector<1x8x16x128xf32> to vector<8x16x128xf32>
    %31 = vector.shape_cast %28 : vector<8x16x128xf32> to vector<1x8x16x128xf32>
    tpu.vector_store %arg7[%c0_10, %c0_11, %c0_12, %c0_13], %31 {strides = array<i32>} : memref<1x8x16x128xf32, #tpu.memory_space<vmem>>, vector<1x8x16x128xf32>,
    return
  }
  func.func @transform_0(%arg0: i32, %arg1: i32) -> (i32, i32, i32, i32) {
    %c0_i32 = arith.constant 0 : i32
    %c0_i32_0 = arith.constant 0 : i32
    %c0_i32_1 = arith.constant 0 : i32
    %c0_i32_2 = arith.constant 0 : i32
    return %arg0, %c0_i32, %c0_i32_0, %c0_i32_1 : i32, i32, i32, i32
  }
  func.func @transform_1(%arg0: i32, %arg1: i32) -> (i32, i32) {
    %c0_i32 = arith.constant 0 : i32
    %c0_i32_0 = arith.constant 0 : i32
    %c0_i32_1 = arith.constant 0 : i32
    return %c0_i32, %c0_i32_0 : i32, i32
  }
  func.func @transform_2(%arg0: i32, %arg1: i32) -> (i32, i32) {
    %c0_i32 = arith.constant 0 : i32
    %c0_i32_0 = arith.constant 0 : i32
    %c0_i32_1 = arith.constant 0 : i32
    return %c0_i32, %c0_i32_0 : i32, i32
  }
  func.func @transform_3(%arg0: i32, %arg1: i32) -> (i32, i32) {
    %c0_i32 = arith.constant 0 : i32
    %c0_i32_0 = arith.constant 0 : i32
    %c0_i32_1 = arith.constant 0 : i32
    return %c0_i32, %c0_i32_0 : i32, i32
  }
  func.func @transform_4(%arg0: i32, %arg1: i32) -> (i32, i32) {
    %c0_i32 = arith.constant 0 : i32
    %c0_i32_0 = arith.constant 0 : i32
    %c0_i32_1 = arith.constant 0 : i32
    return %c0_i32, %c0_i32_0 : i32, i32
  }
  func.func @transform_5(%arg0: i32, %arg1: i32) -> (i32, i32, i32, i32) {
    %c0_i32 = arith.constant 0 : i32
    %c0_i32_0 = arith.constant 0 : i32
    %c0_i32_1 = arith.constant 0 : i32
    return %arg0, %arg1, %c0_i32, %c0_i32_0 : i32, i32, i32, i32
  }
}

</mosaic_0001>

<llo_original>
// kernel: tpu_custom_call.1
$region0: #{tpu_custom_call.1}
  #allocation0 [shape = 'u32[]', space=smem, size = 0x4, offset = 0x4, fixed_abs, tag = 'smem constant byte address 0x4 - core index']
  #allocation1 [shape = 'u32[144,128]{1,0:T(1,128)}', space=vmem, size = 0x12000, scoped, tag = 'internal scratch']
  #allocation2 [shape = 'f32[18,18,128]{2,1,0:T(8,128)}', space=vmem, size = 0x36000, scoped, tag = 'scratch operand']
  #allocation3 [shape = 'f32[18,18,128]{2,1,0:T(8,128)}', space=vmem, size = 0x36000, scoped, tag = 'scratch operand']
  %s0 = inlined_call_operand.hbm [shape: f32[2,16,16,128], index: 0, kind: input, shape index: {}]
  %s1 = inlined_call_operand.hbm [shape: f32[1152,128], index: 1, kind: input, shape index: {}]
  %s2 = inlined_call_operand.vmem [shape: f32[1,128], index: 2, kind: input, shape index: {}]
  %s3 = inlined_call_operand.hbm [shape: f32[1152,128], index: 3, kind: input, shape index: {}]
  %s4 = inlined_call_operand.vmem [shape: f32[1,128], index: 4, kind: input, shape index: {}]
  %s5 = inlined_call_operand.hbm [shape: f32[2,16,16,128], index: 5, kind: output, shape index: {}]
  %s6 = sld [smem:[#allocation0]]
  $region69: #{tpu_custom_call.1} parent=0
    _
  %s8 = ssub.s32 1, %s6
  %s9 = scalar_select 0, %s8, %s6
  $region1: #{tpu_custom_call.1} parent=0
    #allocation4 [shape = 'u8[262144]{0}', space=vmem, size = 0x40000, scoped, tag = 'input window, operand 0']
    #allocation5 [shape = 's32[2]{0}', space=sflag, size = 0x8, scoped, tag = 'scoped memory for tpu_custom_call.1']
    #allocation6 [shape = 's32[2]{0}', space=sflag, size = 0x8, scoped, tag = 'scoped memory for tpu_custom_call.1']
    #allocation7 [shape = 'u8[589824]{0}', space=vmem, size = 0x90000, scoped, tag = 'input window, operand 1, single buffered']
    #allocation8 [shape = 's32[1]{0}', space=sflag, size = 0x4, scoped, tag = 'scoped memory for tpu_custom_call.1']
    #allocation9 [shape = 'u8[589824]{0}', space=vmem, size = 0x90000, scoped, tag = 'input window, operand 3, single buffered']
    #allocation10 [shape = 'u8[131072]{0}', space=vmem, size = 0x20000, scoped, tag = 'output window, operand 0']
    %10 = vsyncpa [#allocation5], 0
    %s11 = scalar_lea.sflag [#allocation5], 1
    %12 = vsyncpa %s11, 0
    %13 = vsyncpa [#allocation8], 0
    %14 = vsyncpa [#allocation6], 0
    %s15 = scalar_lea.sflag [#allocation6], 1
    %16 = vsyncpa %s15, 0
    loop: start=0, step=1, limit=6
    $region2: #{tpu_custom_call.1} parent=1 // loop_pre_header
      _
    $region3: #{tpu_custom_call.1} parent=1 // loop_header
      %s18 = sphi 0, %s22
      %p19 = scmp.ge.s32.totalorder %s18, 6
      %s25 = sphi 0, %s37
      %s26 = sphi 0, %s33
      %s27 = sphi 0, %s25
      %s28 = sphi 0, %s26
      %s29 = sphi 0, %s27
      %s30 = sphi 0, %s28
      %s40 = sphi 0, %s42
      %s43 = sphi 0, %s40
      %s44 = sphi 0, %s43
      %s60 = sphi 0, %s44
      %s64 = sphi 0, %s64
      %s66 = sphi 0, %s64
      %s67 = sphi 0, %s66
      %s81 = sphi 0, %s67
      %s85 = sphi 0, %s85
      %s87 = sphi 0, %s85
      %s88 = sphi 0, %s87
      %s102 = sphi 0, %s88
      %s106 = sphi 0, %s106
      %s108 = sphi 0, %s106
      %s109 = sphi 0, %s108
      %s123 = sphi 0, %s109
      %s127 = sphi 0, %s127
      %s129 = sphi 0, %s127
      %s130 = sphi 0, %s129
      %s144 = sphi 0, %s130
      %s152 = sphi 0, %s154
      %s155 = sphi 0, %s152
      %s156 = sphi 0, %s155
      %s172 = sphi 0, %s156
    $region4: #{tpu_custom_call.1} parent=1 // loop_header_branch
      %21 = sbr.rel (%p19) target = $region8
    $region5: #{tpu_custom_call.1} parent=1 // loop_body
      %s23 = ssub.s32 %s18, 1
      %s24 = ssub.s32 %s18, 2
      %s31 = sadd.s32 1, %s26
      %p32 = scmp.ge.s32.totalorder %s31, 2
      %s33 = scalar_select %p32, 0, %s31
      %s34 = sadd.s32 1, %s25
      %s35 = scalar_select %p32, %s34, %s25
      %p36 = scmp.ge.s32.totalorder %s35, 2
      %s37 = scalar_select %p36, 0, %s35
      %s38 = ssub.s32 %s25, %s37
      %p39 = scmp.eq.s32.totalorder %s38, 0
      %s41 = sadd.s32 %s40, 1
      %s42 = scalar_select %p39, %s40, %s41
      %p45 = pneg %p39
      %p46 = scmp.eq.s32.totalorder %s18, 3
      %p47 = por %p45, %p46
      %p48 = scmp.ne.s32.totalorder %s40, %s43
      %p49 = scmp.eq.s32.totalorder %s18, 0
      %p50 = por %p48, %p49
      %p51 = scmp.ne.s32.totalorder %s40, %s43
      %p52 = scmp.eq.s32.totalorder %s23, 3
      %p53 = por %p51, %p52
      %p54 = scmp.ne.s32.totalorder %s43, %s44
      %p55 = scmp.eq.s32.totalorder %s23, 0
      %p56 = por %p54, %p55
      %p57 = scmp.ne.s32.totalorder %s43, %s44
      %p58 = scmp.eq.s32.totalorder %s24, 3
      %p59 = por %p57, %p58
      %p61 = scmp.ne.s32.totalorder %s44, %s60
      %p62 = scmp.eq.s32.totalorder %s24, 0
      %p63 = por %p61, %p62
      %s65 = sadd.s32 %s64, 1
      %p68 = scmp.eq.s32.totalorder %s18, 3
      %p69 = scmp.ne.s32.totalorder %s64, %s66
      %p70 = scmp.eq.s32.totalorder %s18, 0
      %p71 = por %p69, %p70
      %p72 = scmp.ne.s32.totalorder %s64, %s66
      %p73 = scmp.eq.s32.totalorder %s23, 3
      %p74 = por %p72, %p73
      %p75 = scmp.ne.s32.totalorder %s66, %s67
      %p76 = scmp.eq.s32.totalorder %s23, 0
      %p77 = por %p75, %p76
      %p78 = scmp.ne.s32.totalorder %s66, %s67
      %p79 = scmp.eq.s32.totalorder %s24, 3
      %p80 = por %p78, %p79
      %p82 = scmp.ne.s32.totalorder %s67, %s81
      %p83 = scmp.eq.s32.totalorder %s24, 0
      %p84 = por %p82, %p83
      %s86 = sadd.s32 %s85, 1
      %p89 = scmp.eq.s32.totalorder %s18, 3
      %p90 = scmp.ne.s32.totalorder %s85, %s87
      %p91 = scmp.eq.s32.totalorder %s18, 0
      %p92 = por %p90, %p91
      %p93 = scmp.ne.s32.totalorder %s85, %s87
      %p94 = scmp.eq.s32.totalorder %s23, 3
      %p95 = por %p93, %p94
      %p96 = scmp.ne.s32.totalorder %s87, %s88
      %p97 = scmp.eq.s32.totalorder %s23, 0
      %p98 = por %p96, %p97
      %p99 = scmp.ne.s32.totalorder %s87, %s88
      %p100 = scmp.eq.s32.totalorder %s24, 3
      %p101 = por %p99, %p100
      %p103 = scmp.ne.s32.totalorder %s88, %s102
      %p104 = scmp.eq.s32.totalorder %s24, 0
      %p105 = por %p103, %p104
      %s107 = sadd.s32 %s106, 1
      %p110 = scmp.eq.s32.totalorder %s18, 3
      %p111 = scmp.ne.s32.totalorder %s106, %s108
      %p112 = scmp.eq.s32.totalorder %s18, 0
      %p113 = por %p111, %p112
      %p114 = scmp.ne.s32.totalorder %s106, %s108
      %p115 = scmp.eq.s32.totalorder %s23, 3
      %p116 = por %p114, %p115
      %p117 = scmp.ne.s32.totalorder %s108, %s109
      %p118 = scmp.eq.s32.totalorder %s23, 0
      %p119 = por %p117, %p118
      %p120 = scmp.ne.s32.totalorder %s108, %s109
      %p121 = scmp.eq.s32.totalorder %s24, 3
      %p122 = por %p120, %p121
      %p124 = scmp.ne.s32.totalorder %s109, %s123
      %p125 = scmp.eq.s32.totalorder %s24, 0
      %p126 = por %p124, %p125
      %s128 = sadd.s32 %s127, 1
      %p131 = scmp.eq.s32.totalorder %s18, 3
      %p132 = scmp.ne.s32.totalorder %s127, %s129
      %p133 = scmp.eq.s32.totalorder %s18, 0
      %p134 = por %p132, %p133
      %p135 = scmp.ne.s32.totalorder %s127, %s129
      %p136 = scmp.eq.s32.totalorder %s23, 3
      %p137 = por %p135, %p136
      %p138 = scmp.ne.s32.totalorder %s129, %s130
      %p139 = scmp.eq.s32.totalorder %s23, 0
      %p140 = por %p138, %p139
      %p141 = scmp.ne.s32.totalorder %s129, %s130
      %p142 = scmp.eq.s32.totalorder %s24, 3
      %p143 = por %p141, %p142
      %p145 = scmp.ne.s32.totalorder %s130, %s144
      %p146 = scmp.eq.s32.totalorder %s24, 0
      %p147 = por %p145, %p146
      %s148 = ssub.s32 %s25, %s37
      %s149 = ssub.s32 %s26, %s33
      %s150 = sor.u32 %s148, %s149
      %p151 = scmp.eq.s32.totalorder %s150, 0
      %s153 = sadd.s32 %s152, 1
      %s154 = scalar_select %p151, %s152, %s153
      %p157 = pneg %p151
      %p158 = scmp.eq.s32.totalorder %s18, 3
      %p159 = por %p157, %p158
      %p160 = scmp.ne.s32.totalorder %s152, %s155
      %p161 = scmp.eq.s32.totalorder %s18, 0
      %p162 = por %p160, %p161
      %p163 = scmp.ne.s32.totalorder %s152, %s155
      %p164 = scmp.eq.s32.totalorder %s23, 3
      %p165 = por %p163, %p164
      %p166 = scmp.ne.s32.totalorder %s155, %s156
      %p167 = scmp.eq.s32.totalorder %s23, 0
      %p168 = por %p166, %p167
      %p169 = scmp.ne.s32.totalorder %s155, %s156
      %p170 = scmp.eq.s32.totalorder %s24, 3
      %p171 = por %p169, %p170
      %p173 = scmp.ne.s32.totalorder %s156, %s172
      %p174 = scmp.eq.s32.totalorder %s24, 0
      %p175 = por %p173, %p174
      %p176 = scmp.le.s32.totalorder 1, %s18
      %p177 = scmp.lt.s32.totalorder %s18, 5
      %p178 = pnand %p176, %p177
      %p179 = pneg %p178
      // Predicated region
      $region9: #{tpu_custom_call.1} parent=5 // pred_check
        _
      $region10: #{tpu_custom_call.1} parent=5 // pred_check_branch
        %181 = sbr.rel (%p178) target = $region12
      $region11: #{tpu_custom_call.1} parent=5 // pred_region
        %s182 = ssub.s32 %s18, 1
        // Predicated region
        $region13: #{tpu_custom_call.1} parent=11 // pred_check
          %p183 = pneg %p77
        $region14: #{tpu_custom_call.1} parent=11 // pred_check_branch
          %185 = sbr.rel (%p183) target = $region16
        $region15: #{tpu_custom_call.1} parent=11 // pred_region
          %s187 = ssub.s32 18432, 18432
          %188 = vsyncadd [#allocation8], %s187
          %s189 = sshll.u32 [#allocation7], 4
          %s190 = int_to_ptr.vmem [resolvable:$true] %s189
          %195 = dma.hbm_to_vmem [thread:$0]  %s1, 18432, %s190, [#allocation8], 128, 128, 8
        $region16: #{tpu_custom_call.1} parent=11 // pred_fallthru
          _
        // Predicated region
        $region17: #{tpu_custom_call.1} parent=11 // pred_check
          %p196 = pneg %p98
        $region18: #{tpu_custom_call.1} parent=11 // pred_check_branch
          %198 = sbr.rel (%p196) target = $region20
        $region19: #{tpu_custom_call.1} parent=11 // pred_region
          _
        $region20: #{tpu_custom_call.1} parent=11 // pred_fallthru
          _
        // Predicated region
        $region21: #{tpu_custom_call.1} parent=11 // pred_check
          %p199 = pneg %p119
        $region22: #{tpu_custom_call.1} parent=11 // pred_check_branch
          %201 = sbr.rel (%p199) target = $region24
        $region23: #{tpu_custom_call.1} parent=11 // pred_region
          %s203 = ssub.s32 18432, 18432
          %204 = vsyncadd [#allocation8], %s203
          %s205 = sshll.u32 [#allocation9], 4
          %s206 = int_to_ptr.vmem [resolvable:$true] %s205
          %211 = dma.hbm_to_vmem [thread:$0]  %s3, 18432, %s206, [#allocation8], 128, 128, 8
        $region24: #{tpu_custom_call.1} parent=11 // pred_fallthru
          _
        // Predicated region
        $region25: #{tpu_custom_call.1} parent=11 // pred_check
          %p212 = pneg %p140
        $region26: #{tpu_custom_call.1} parent=11 // pred_check_branch
          %214 = sbr.rel (%p212) target = $region28
        $region27: #{tpu_custom_call.1} parent=11 // pred_region
          _
        $region28: #{tpu_custom_call.1} parent=11 // pred_fallthru
          _
      $region12: #{tpu_custom_call.1} parent=5 // pred_fallthru
        _
      %p215 = scmp.lt.s32.totalorder %s18, 4
      // Predicated region
      $region29: #{tpu_custom_call.1} parent=5 // pred_check
        %p216 = pneg %p215
      $region30: #{tpu_custom_call.1} parent=5 // pred_check_branch
        %218 = sbr.rel (%p216) target = $region32
      $region31: #{tpu_custom_call.1} parent=5 // pred_region
        // Predicated region
        $region33: #{tpu_custom_call.1} parent=31 // pred_check
          %p219 = pneg %p50
        $region34: #{tpu_custom_call.1} parent=31 // pred_check_branch
          %221 = sbr.rel (%p219) target = $region36
        $region35: #{tpu_custom_call.1} parent=31 // pred_region
          %s222 = sand.u32 %s40, 1
          %s223 = scalar_lea.sflag [#allocation5], %s222
          %s224 = sand.u32 %s40, 1
          %s225 = smul.addr %s224, 256
          %s226 = scalar_lea.vmem [#allocation4], %s225
          %s228 = ssub.s32 4096, 4096
          %229 = vsyncadd %s223, %s228
          %s230 = smul.addr %s25, 32
          %s231 = smul.addr %s230, 128
          %s232 = scalar_lea.hbm %s0, %s231
          %s233 = sshll.u32 %s226, 4
          %s234 = int_to_ptr.vmem [resolvable:$true] %s233
          %239 = dma.hbm_to_vmem [thread:$0]  %s232, 4096, %s234, %s223, 128, 128, 8
        $region36: #{tpu_custom_call.1} parent=31 // pred_fallthru
          _
      $region32: #{tpu_custom_call.1} parent=5 // pred_fallthru
        _
      %p240 = scmp.le.s32.totalorder 1, %s18
      %p241 = scmp.lt.s32.totalorder %s18, 5
      %p242 = pnand %p240, %p241
      %p243 = pneg %p242
      // Predicated region
      $region37: #{tpu_custom_call.1} parent=5 // pred_check
        _
      $region38: #{tpu_custom_call.1} parent=5 // pred_check_branch
        %245 = sbr.rel (%p242) target = $region40
      $region39: #{tpu_custom_call.1} parent=5 // pred_region
        %s246 = ssub.s32 %s18, 1
        %s247 = sand.u32 %s43, 1
        %s248 = scalar_lea.sflag [#allocation5], %s247
        %s249 = sand.u32 %s43, 1
        %s250 = smul.addr %s249, 256
        %s251 = scalar_lea.vmem [#allocation4], %s250
        // Predicated region
        $region41: #{tpu_custom_call.1} parent=39 // pred_check
          %p252 = pneg %p56
        $region42: #{tpu_custom_call.1} parent=39 // pred_check_branch
          %254 = sbr.rel (%p252) target = $region44
        $region43: #{tpu_custom_call.1} parent=39 // pred_region
          %255 = dma.done %s248, 4096
        $region44: #{tpu_custom_call.1} parent=39 // pred_fallthru
          _
        // Predicated region
        $region45: #{tpu_custom_call.1} parent=39 // pred_check
          %p256 = pneg %p77
        $region46: #{tpu_custom_call.1} parent=39 // pred_check_branch
          %258 = sbr.rel (%p256) target = $region48
        $region47: #{tpu_custom_call.1} parent=39 // pred_region
          %259 = dma.done [#allocation8], 18432
        $region48: #{tpu_custom_call.1} parent=39 // pred_fallthru
          _
        // Predicated region
        $region49: #{tpu_custom_call.1} parent=39 // pred_check
          %p260 = pneg %p119
        $region50: #{tpu_custom_call.1} parent=39 // pred_check_branch
          %262 = sbr.rel (%p260) target = $region52
        $region51: #{tpu_custom_call.1} parent=39 // pred_region
          %263 = dma.done [#allocation8], 18432
        $region52: #{tpu_custom_call.1} parent=39 // pred_fallthru
          _
        %s264 = sand.u32 %s43, 1
        %s265 = scalar_lea.sflag [#allocation5], %s264
        %s266 = sand.u32 %s43, 1
        %s267 = smul.addr %s266, 256
        %s268 = scalar_lea.vmem [#allocation4], %s267
        %p269 = pneg %p56
        %p270 = pneg %p53
        %p271 = pneg %p77
        %p272 = pneg %p74
        %p273 = pneg %p98
        %p274 = pneg %p95
        %p275 = pneg %p119
        %p276 = pneg %p116
        %p277 = pneg %p140
        %p278 = pneg %p137
        %p279 = pneg %p168
        %p280 = pneg %p165
        %s281 = sand.u32 %s155, 1
        %s282 = scalar_lea.sflag [#allocation6], %s281
        %s283 = sand.u32 %s155, 1
        %s284 = smul.addr %s283, 128
        %s285 = scalar_lea.vmem [#allocation10], %s284
        %s286 = smul.u32 8, %s28
        %p287 = scmp.eq.s32.totalorder %s28, 0
        // Predicated region
        $region53: #{tpu_custom_call.1} parent=39 // pred_check
          %p288 = pneg %p287
        $region54: #{tpu_custom_call.1} parent=39 // pred_check_branch
          %290 = sbr.rel (%p288) target = $region56
        $region55: #{tpu_custom_call.1} parent=39 // pred_region
          %291 = vst [vmem:[#allocation2] sm:$0xff] 0.0
          %292 = vst [vmem:[#allocation2 + $0x8] sm:$0xff] 0.0
          %293 = vst [vmem:[#allocation2 + $0x10] sm:$0x3] 0.0
          %s294 = scalar_lea.vmem [#allocation2], 408
          %295 = vst [vmem:[%s294] sm:$0xff] 0.0
          %296 = vst [vmem:[%s294 + $0x8] sm:$0xff] 0.0
          %297 = vst [vmem:[%s294 + $0x10] sm:$0x3] 0.0
          %298 = vst [vmem:[#allocation2] sm:$0x1] 0.0
          %299 = vst [vmem:[#allocation2 + $0x18] sm:$0x1] 0.0
          %300 = vst [vmem:[#allocation2 + $0x30] sm:$0x1] 0.0
          %301 = vst [vmem:[#allocation2 + $0x48] sm:$0x1] 0.0
          %302 = vst [vmem:[#allocation2 + $0x60] sm:$0x1] 0.0
          %303 = vst [vmem:[#allocation2 + $0x78] sm:$0x1] 0.0
          %304 = vst [vmem:[#allocation2 + $0x90] sm:$0x1] 0.0
          %305 = vst [vmem:[#allocation2 + $0xa8] sm:$0x1] 0.0
          %306 = vst [vmem:[#allocation2 + $0xc0] sm:$0x1] 0.0
          %307 = vst [vmem:[#allocation2 + $0xd8] sm:$0x1] 0.0
          %308 = vst [vmem:[#allocation2 + $0xf0] sm:$0x1] 0.0
          %309 = vst [vmem:[#allocation2 + $0x108] sm:$0x1] 0.0
          %310 = vst [vmem:[#allocation2 + $0x120] sm:$0x1] 0.0
          %311 = vst [vmem:[#allocation2 + $0x138] sm:$0x1] 0.0
          %312 = vst [vmem:[#allocation2 + $0x150] sm:$0x1] 0.0
          %313 = vst [vmem:[#allocation2 + $0x168] sm:$0x1] 0.0
          %314 = vst [vmem:[#allocation2 + $0x180] sm:$0x1] 0.0
          %315 = vst [vmem:[#allocation2 + $0x198] sm:$0x1] 0.0
          %316 = vst [vmem:[#allocation2 + $0x11] sm:$0x1] 0.0
          %317 = vst [vmem:[#allocation2 + $0x29] sm:$0x1] 0.0
          %318 = vst [vmem:[#allocation2 + $0x41] sm:$0x1] 0.0
          %319 = vst [vmem:[#allocation2 + $0x59] sm:$0x1] 0.0
          %320 = vst [vmem:[#allocation2 + $0x71] sm:$0x1] 0.0
          %321 = vst [vmem:[#allocation2 + $0x89] sm:$0x1] 0.0
          %322 = vst [vmem:[#allocation2 + $0xa1] sm:$0x1] 0.0
          %323 = vst [vmem:[#allocation2 + $0xb9] sm:$0x1] 0.0
          %324 = vst [vmem:[#allocation2 + $0xd1] sm:$0x1] 0.0
          %325 = vst [vmem:[#allocation2 + $0xe9] sm:$0x1] 0.0
          %326 = vst [vmem:[#allocation2 + $0x101] sm:$0x1] 0.0
          %327 = vst [vmem:[#allocation2 + $0x119] sm:$0x1] 0.0
          %328 = vst [vmem:[#allocation2 + $0x131] sm:$0x1] 0.0
          %329 = vst [vmem:[#allocation2 + $0x149] sm:$0x1] 0.0
          %330 = vst [vmem:[#allocation2 + $0x161] sm:$0x1] 0.0
          %331 = vst [vmem:[#allocation2 + $0x179] sm:$0x1] 0.0
          %332 = vst [vmem:[#allocation2 + $0x191] sm:$0x1] 0.0
          %333 = vst [vmem:[#allocation2 + $0x1a9] sm:$0x1] 0.0
          %334 = vst [vmem:[#allocation3] sm:$0xff] 0.0
          %335 = vst [vmem:[#allocation3 + $0x8] sm:$0xff] 0.0
          %336 = vst [vmem:[#allocation3 + $0x10] sm:$0x3] 0.0
          %s337 = scalar_lea.vmem [#allocation3], 408
          %338 = vst [vmem:[%s337] sm:$0xff] 0.0
          %339 = vst [vmem:[%s337 + $0x8] sm:$0xff] 0.0
          %340 = vst [vmem:[%s337 + $0x10] sm:$0x3] 0.0
          %341 = vst [vmem:[#allocation3] sm:$0x1] 0.0
          %342 = vst [vmem:[#allocation3 + $0x18] sm:$0x1] 0.0
          %343 = vst [vmem:[#allocation3 + $0x30] sm:$0x1] 0.0
          %344 = vst [vmem:[#allocation3 + $0x48] sm:$0x1] 0.0
          %345 = vst [vmem:[#allocation3 + $0x60] sm:$0x1] 0.0
          %346 = vst [vmem:[#allocation3 + $0x78] sm:$0x1] 0.0
          %347 = vst [vmem:[#allocation3 + $0x90] sm:$0x1] 0.0
          %348 = vst [vmem:[#allocation3 + $0xa8] sm:$0x1] 0.0
          %349 = vst [vmem:[#allocation3 + $0xc0] sm:$0x1] 0.0
          %350 = vst [vmem:[#allocation3 + $0xd8] sm:$0x1] 0.0
          %351 = vst [vmem:[#allocation3 + $0xf0] sm:$0x1] 0.0
          %352 = vst [vmem:[#allocation3 + $0x108] sm:$0x1] 0.0
          %353 = vst [vmem:[#allocation3 + $0x120] sm:$0x1] 0.0
          %354 = vst [vmem:[#allocation3 + $0x138] sm:$0x1] 0.0
          %355 = vst [vmem:[#allocation3 + $0x150] sm:$0x1] 0.0
          %356 = vst [vmem:[#allocation3 + $0x168] sm:$0x1] 0.0
          %357 = vst [vmem:[#allocation3 + $0x180] sm:$0x1] 0.0
          %358 = vst [vmem:[#allocation3 + $0x198] sm:$0x1] 0.0
          %359 = vst [vmem:[#allocation3 + $0x11] sm:$0x1] 0.0
          %360 = vst [vmem:[#allocation3 + $0x29] sm:$0x1] 0.0
          %361 = vst [vmem:[#allocation3 + $0x41] sm:$0x1] 0.0
          %362 = vst [vmem:[#allocation3 + $0x59] sm:$0x1] 0.0
          %363 = vst [vmem:[#allocation3 + $0x71] sm:$0x1] 0.0
          %364 = vst [vmem:[#allocation3 + $0x89] sm:$0x1] 0.0
          %365 = vst [vmem:[#allocation3 + $0xa1] sm:$0x1] 0.0
          %366 = vst [vmem:[#allocation3 + $0xb9] sm:$0x1] 0.0
          %367 = vst [vmem:[#allocation3 + $0xd1] sm:$0x1] 0.0
          %368 = vst [vmem:[#allocation3 + $0xe9] sm:$0x1] 0.0
          %369 = vst [vmem:[#allocation3 + $0x101] sm:$0x1] 0.0
          %370 = vst [vmem:[#allocation3 + $0x119] sm:$0x1] 0.0
          %371 = vst [vmem:[#allocation3 + $0x131] sm:$0x1] 0.0
          %372 = vst [vmem:[#allocation3 + $0x149] sm:$0x1] 0.0
          %373 = vst [vmem:[#allocation3 + $0x161] sm:$0x1] 0.0
          %374 = vst [vmem:[#allocation3 + $0x179] sm:$0x1] 0.0
          %375 = vst [vmem:[#allocation3 + $0x191] sm:$0x1] 0.0
          %376 = vst [vmem:[#allocation3 + $0x1a9] sm:$0x1] 0.0
          %v377 = vld [vmem:[%s251] sm:$0xff]
          %v378 = vld [vmem:[%s251 + $0x8] sm:$0xff]
          %v379 = vld [vmem:[%s251 + $0x10] sm:$0xff]
          %v380 = vld [vmem:[%s251 + $0x18] sm:$0xff]
          %v381 = vld [vmem:[%s251 + $0x20] sm:$0xff]
          %v382 = vld [vmem:[%s251 + $0x28] sm:$0xff]
          %v383 = vld [vmem:[%s251 + $0x30] sm:$0xff]
          %v384 = vld [vmem:[%s251 + $0x38] sm:$0xff]
          %v385 = vld [vmem:[%s251 + $0x40] sm:$0xff]
          %v386 = vld [vmem:[%s251 + $0x48] sm:$0xff]
          %v387 = vld [vmem:[%s251 + $0x50] sm:$0xff]
          %v388 = vld [vmem:[%s251 + $0x58] sm:$0xff]
          %v389 = vld [vmem:[%s251 + $0x60] sm:$0xff]
          %v390 = vld [vmem:[%s251 + $0x68] sm:$0xff]
          %v391 = vld [vmem:[%s251 + $0x70] sm:$0xff]
          %v392 = vld [vmem:[%s251 + $0x78] sm:$0xff]
          %v393 = vld [vmem:[%s251 + $0x80] sm:$0xff]
          %v394 = vld [vmem:[%s251 + $0x88] sm:$0xff]
          %v395 = vld [vmem:[%s251 + $0x90] sm:$0xff]
          %v396 = vld [vmem:[%s251 + $0x98] sm:$0xff]
          %v397 = vld [vmem:[%s251 + $0xa0] sm:$0xff]
          %v398 = vld [vmem:[%s251 + $0xa8] sm:$0xff]
          %v399 = vld [vmem:[%s251 + $0xb0] sm:$0xff]
          %v400 = vld [vmem:[%s251 + $0xb8] sm:$0xff]
          %v401 = vld [vmem:[%s251 + $0xc0] sm:$0xff]
          %v402 = vld [vmem:[%s251 + $0xc8] sm:$0xff]
          %v403 = vld [vmem:[%s251 + $0xd0] sm:$0xff]
          %v404 = vld [vmem:[%s251 + $0xd8] sm:$0xff]
          %v405 = vld [vmem:[%s251 + $0xe0] sm:$0xff]
          %v406 = vld [vmem:[%s251 + $0xe8] sm:$0xff]
          %v407 = vld [vmem:[%s251 + $0xf0] sm:$0xff]
          %v408 = vld [vmem:[%s251 + $0xf8] sm:$0xff]
          %s409 = scalar_lea.vmem [#allocation2], 24
          %410 = vst [vmem:[%s409 + $0x1] sm:$0xff] %v377
          %411 = vst [vmem:[%s409 + $0x9] sm:$0xff] %v378
          %412 = vst [vmem:[%s409 + $0x19] sm:$0xff] %v379
          %413 = vst [vmem:[%s409 + $0x21] sm:$0xff] %v380
          %414 = vst [vmem:[%s409 + $0x31] sm:$0xff] %v381
          %415 = vst [vmem:[%s409 + $0x39] sm:$0xff] %v382
          %416 = vst [vmem:[%s409 + $0x49] sm:$0xff] %v383
          %417 = vst [vmem:[%s409 + $0x51] sm:$0xff] %v384
          %418 = vst [vmem:[%s409 + $0x61] sm:$0xff] %v385
          %419 = vst [vmem:[%s409 + $0x69] sm:$0xff] %v386
          %420 = vst [vmem:[%s409 + $0x79] sm:$0xff] %v387
          %421 = vst [vmem:[%s409 + $0x81] sm:$0xff] %v388
          %422 = vst [vmem:[%s409 + $0x91] sm:$0xff] %v389
          %423 = vst [vmem:[%s409 + $0x99] sm:$0xff] %v390
          %424 = vst [vmem:[%s409 + $0xa9] sm:$0xff] %v391
          %425 = vst [vmem:[%s409 + $0xb1] sm:$0xff] %v392
          %426 = vst [vmem:[%s409 + $0xc1] sm:$0xff] %v393
          %427 = vst [vmem:[%s409 + $0xc9] sm:$0xff] %v394
          %428 = vst [vmem:[%s409 + $0xd9] sm:$0xff] %v395
          %429 = vst [vmem:[%s409 + $0xe1] sm:$0xff] %v396
          %430 = vst [vmem:[%s409 + $0xf1] sm:$0xff] %v397
          %431 = vst [vmem:[%s409 + $0xf9] sm:$0xff] %v398
          %432 = vst [vmem:[%s409 + $0x109] sm:$0xff] %v399
          %433 = vst [vmem:[%s409 + $0x111] sm:$0xff] %v400
          %434 = vst [vmem:[%s409 + $0x121] sm:$0xff] %v401
          %435 = vst [vmem:[%s409 + $0x129] sm:$0xff] %v402
          %436 = vst [vmem:[%s409 + $0x139] sm:$0xff] %v403
          %437 = vst [vmem:[%s409 + $0x141] sm:$0xff] %v404
          %438 = vst [vmem:[%s409 + $0x151] sm:$0xff] %v405
          %439 = vst [vmem:[%s409 + $0x159] sm:$0xff] %v406
          %440 = vst [vmem:[%s409 + $0x169] sm:$0xff] %v407
          %441 = vst [vmem:[%s409 + $0x171] sm:$0xff] %v408
          %v442 = vld [vmem:[#allocation2] sm:$0xff]
          %v443 = vld [vmem:[#allocation2 + $0x8] sm:$0xff]
          %v444 = vld [vmem:[#allocation2 + $0x18] sm:$0xff]
          %v445 = vld [vmem:[#allocation2 + $0x20] sm:$0xff]
          %v446 = vld [vmem:[#allocation2 + $0x30] sm:$0xff]
          %v447 = vld [vmem:[#allocation2 + $0x38] sm:$0xff]
          %v448 = vld [vmem:[#allocation2 + $0x48] sm:$0xff]
          %v449 = vld [vmem:[#allocation2 + $0x50] sm:$0xff]
          %v450 = vld [vmem:[#allocation2 + $0x60] sm:$0xff]
          %v451 = vld [vmem:[#allocation2 + $0x68] sm:$0xff]
          %v452 = vld [vmem:[#allocation2 + $0x78] sm:$0xff]
          %v453 = vld [vmem:[#allocation2 + $0x80] sm:$0xff]
          %v454 = vld [vmem:[#allocation2 + $0x90] sm:$0xff]
          %v455 = vld [vmem:[#allocation2 + $0x98] sm:$0xff]
          %v456 = vld [vmem:[#allocation2 + $0xa8] sm:$0xff]
          %v457 = vld [vmem:[#allocation2 + $0xb0] sm:$0xff]
          %v458 = vld [vmem:[#allocation2 + $0xc0] sm:$0xff]
          %v459 = vld [vmem:[#allocation2 + $0xc8] sm:$0xff]
          %v460 = vld [vmem:[#allocation2 + $0xd8] sm:$0xff]
          %v461 = vld [vmem:[#allocation2 + $0xe0] sm:$0xff]
          %v462 = vld [vmem:[#allocation2 + $0xf0] sm:$0xff]
          %v463 = vld [vmem:[#allocation2 + $0xf8] sm:$0xff]
          %v464 = vld [vmem:[#allocation2 + $0x108] sm:$0xff]
          %v465 = vld [vmem:[#allocation2 + $0x110] sm:$0xff]
          %v466 = vld [vmem:[#allocation2 + $0x120] sm:$0xff]
          %v467 = vld [vmem:[#allocation2 + $0x128] sm:$0xff]
          %v468 = vld [vmem:[#allocation2 + $0x138] sm:$0xff]
          %v469 = vld [vmem:[#allocation2 + $0x140] sm:$0xff]
          %v470 = vld [vmem:[#allocation2 + $0x150] sm:$0xff]
          %v471 = vld [vmem:[#allocation2 + $0x158] sm:$0xff]
          %v472 = vld [vmem:[#allocation2 + $0x168] sm:$0xff]
          %v473 = vld [vmem:[#allocation2 + $0x170] sm:$0xff]
          %v474 = vld [vmem:[#allocation2 + $0x1] sm:$0xff]
          %v475 = vld [vmem:[#allocation2 + $0x9] sm:$0xff]
          %v476 = vld [vmem:[#allocation2 + $0x19] sm:$0xff]
          %v477 = vld [vmem:[#allocation2 + $0x21] sm:$0xff]
          %v478 = vld [vmem:[#allocation2 + $0x31] sm:$0xff]
          %v479 = vld [vmem:[#allocation2 + $0x39] sm:$0xff]
          %v480 = vld [vmem:[#allocation2 + $0x49] sm:$0xff]
          %v481 = vld [vmem:[#allocation2 + $0x51] sm:$0xff]
          %v482 = vld [vmem:[#allocation2 + $0x61] sm:$0xff]
          %v483 = vld [vmem:[#allocation2 + $0x69] sm:$0xff]
          %v484 = vld [vmem:[#allocation2 + $0x79] sm:$0xff]
          %v485 = vld [vmem:[#allocation2 + $0x81] sm:$0xff]
          %v486 = vld [vmem:[#allocation2 + $0x91] sm:$0xff]
          %v487 = vld [vmem:[#allocation2 + $0x99] sm:$0xff]
          %v488 = vld [vmem:[#allocation2 + $0xa9] sm:$0xff]
          %v489 = vld [vmem:[#allocation2 + $0xb1] sm:$0xff]
          %v490 = vld [vmem:[#allocation2 + $0xc1] sm:$0xff]
          %v491 = vld [vmem:[#allocation2 + $0xc9] sm:$0xff]
          %v492 = vld [vmem:[#allocation2 + $0xd9] sm:$0xff]
          %v493 = vld [vmem:[#allocation2 + $0xe1] sm:$0xff]
          %v494 = vld [vmem:[#allocation2 + $0xf1] sm:$0xff]
          %v495 = vld [vmem:[#allocation2 + $0xf9] sm:$0xff]
          %v496 = vld [vmem:[#allocation2 + $0x109] sm:$0xff]
          %v497 = vld [vmem:[#allocation2 + $0x111] sm:$0xff]
          %v498 = vld [vmem:[#allocation2 + $0x121] sm:$0xff]
          %v499 = vld [vmem:[#allocation2 + $0x129] sm:$0xff]
          %v500 = vld [vmem:[#allocation2 + $0x139] sm:$0xff]
          %v501 = vld [vmem:[#allocation2 + $0x141] sm:$0xff]
          %v502 = vld [vmem:[#allocation2 + $0x151] sm:$0xff]
          %v503 = vld [vmem:[#allocation2 + $0x159] sm:$0xff]
          %v504 = vld [vmem:[#allocation2 + $0x169] sm:$0xff]
          %v505 = vld [vmem:[#allocation2 + $0x171] sm:$0xff]
          %v506 = vld [vmem:[#allocation2 + $0x2] sm:$0xff]
          %v507 = vld [vmem:[#allocation2 + $0xa] sm:$0xff]
          %v508 = vld [vmem:[#allocation2 + $0x1a] sm:$0xff]
          %v509 = vld [vmem:[#allocation2 + $0x22] sm:$0xff]
          %v510 = vld [vmem:[#allocation2 + $0x32] sm:$0xff]
          %v511 = vld [vmem:[#allocation2 + $0x3a] sm:$0xff]
          %v512 = vld [vmem:[#allocation2 + $0x4a] sm:$0xff]
          %v513 = vld [vmem:[#allocation2 + $0x52] sm:$0xff]
          %v514 = vld [vmem:[#allocation2 + $0x62] sm:$0xff]
          %v515 = vld [vmem:[#allocation2 + $0x6a] sm:$0xff]
          %v516 = vld [vmem:[#allocation2 + $0x7a] sm:$0xff]
          %v517 = vld [vmem:[#allocation2 + $0x82] sm:$0xff]
          %v518 = vld [vmem:[#allocation2 + $0x92] sm:$0xff]
          %v519 = vld [vmem:[#allocation2 + $0x9a] sm:$0xff]
          %v520 = vld [vmem:[#allocation2 + $0xaa] sm:$0xff]
          %v521 = vld [vmem:[#allocation2 + $0xb2] sm:$0xff]
          %v522 = vld [vmem:[#allocation2 + $0xc2] sm:$0xff]
          %v523 = vld [vmem:[#allocation2 + $0xca] sm:$0xff]
          %v524 = vld [vmem:[#allocation2 + $0xda] sm:$0xff]
          %v525 = vld [vmem:[#allocation2 + $0xe2] sm:$0xff]
          %v526 = vld [vmem:[#allocation2 + $0xf2] sm:$0xff]
          %v527 = vld [vmem:[#allocation2 + $0xfa] sm:$0xff]
          %v528 = vld [vmem:[#allocation2 + $0x10a] sm:$0xff]
          %v529 = vld [vmem:[#allocation2 + $0x112] sm:$0xff]
          %v530 = vld [vmem:[#allocation2 + $0x122] sm:$0xff]
          %v531 = vld [vmem:[#allocation2 + $0x12a] sm:$0xff]
          %v532 = vld [vmem:[#allocation2 + $0x13a] sm:$0xff]
          %v533 = vld [vmem:[#allocation2 + $0x142] sm:$0xff]
          %v534 = vld [vmem:[#allocation2 + $0x152] sm:$0xff]
          %v535 = vld [vmem:[#allocation2 + $0x15a] sm:$0xff]
          %v536 = vld [vmem:[#allocation2 + $0x16a] sm:$0xff]
          %v537 = vld [vmem:[#allocation2 + $0x172] sm:$0xff]
          %v538 = vld [vmem:[%s409] sm:$0xff]
          %v539 = vld [vmem:[%s409 + $0x8] sm:$0xff]
          %v540 = vld [vmem:[%s409 + $0x18] sm:$0xff]
          %v541 = vld [vmem:[%s409 + $0x20] sm:$0xff]
          %v542 = vld [vmem:[%s409 + $0x30] sm:$0xff]
          %v543 = vld [vmem:[%s409 + $0x38] sm:$0xff]
          %v544 = vld [vmem:[%s409 + $0x48] sm:$0xff]
          %v545 = vld [vmem:[%s409 + $0x50] sm:$0xff]
          %v546 = vld [vmem:[%s409 + $0x60] sm:$0xff]
          %v547 = vld [vmem:[%s409 + $0x68] sm:$0xff]
          %v548 = vld [vmem:[%s409 + $0x78] sm:$0xff]
          %v549 = vld [vmem:[%s409 + $0x80] sm:$0xff]
          %v550 = vld [vmem:[%s409 + $0x90] sm:$0xff]
          %v551 = vld [vmem:[%s409 + $0x98] sm:$0xff]
          %v552 = vld [vmem:[%s409 + $0xa8] sm:$0xff]
          %v553 = vld [vmem:[%s409 + $0xb0] sm:$0xff]
          %v554 = vld [vmem:[%s409 + $0xc0] sm:$0xff]
          %v555 = vld [vmem:[%s409 + $0xc8] sm:$0xff]
          %v556 = vld [vmem:[%s409 + $0xd8] sm:$0xff]
          %v557 = vld [vmem:[%s409 + $0xe0] sm:$0xff]
          %v558 = vld [vmem:[%s409 + $0xf0] sm:$0xff]
          %v559 = vld [vmem:[%s409 + $0xf8] sm:$0xff]
          %v560 = vld [vmem:[%s409 + $0x108] sm:$0xff]
          %v561 = vld [vmem:[%s409 + $0x110] sm:$0xff]
          %v562 = vld [vmem:[%s409 + $0x120] sm:$0xff]
          %v563 = vld [vmem:[%s409 + $0x128] sm:$0xff]
          %v564 = vld [vmem:[%s409 + $0x138] sm:$0xff]
          %v565 = vld [vmem:[%s409 + $0x140] sm:$0xff]
          %v566 = vld [vmem:[%s409 + $0x150] sm:$0xff]
          %v567 = vld [vmem:[%s409 + $0x158] sm:$0xff]
          %v568 = vld [vmem:[%s409 + $0x168] sm:$0xff]
          %v569 = vld [vmem:[%s409 + $0x170] sm:$0xff]
          %v570 = vld [vmem:[%s409 + $0x1] sm:$0xff]
          %v571 = vld [vmem:[%s409 + $0x9] sm:$0xff]
          %v572 = vld [vmem:[%s409 + $0x19] sm:$0xff]
          %v573 = vld [vmem:[%s409 + $0x21] sm:$0xff]
          %v574 = vld [vmem:[%s409 + $0x31] sm:$0xff]
          %v575 = vld [vmem:[%s409 + $0x39] sm:$0xff]
          %v576 = vld [vmem:[%s409 + $0x49] sm:$0xff]
          %v577 = vld [vmem:[%s409 + $0x51] sm:$0xff]
          %v578 = vld [vmem:[%s409 + $0x61] sm:$0xff]
          %v579 = vld [vmem:[%s409 + $0x69] sm:$0xff]
          %v580 = vld [vmem:[%s409 + $0x79] sm:$0xff]
          %v581 = vld [vmem:[%s409 + $0x81] sm:$0xff]
          %v582 = vld [vmem:[%s409 + $0x91] sm:$0xff]
          %v583 = vld [vmem:[%s409 + $0x99] sm:$0xff]
          %v584 = vld [vmem:[%s409 + $0xa9] sm:$0xff]
          %v585 = vld [vmem:[%s409 + $0xb1] sm:$0xff]
          %v586 = vld [vmem:[%s409 + $0xc1] sm:$0xff]
          %v587 = vld [vmem:[%s409 + $0xc9] sm:$0xff]
          %v588 = vld [vmem:[%s409 + $0xd9] sm:$0xff]
          %v589 = vld [vmem:[%s409 + $0xe1] sm:$0xff]
          %v590 = vld [vmem:[%s409 + $0xf1] sm:$0xff]
          %v591 = vld [vmem:[%s409 + $0xf9] sm:$0xff]
          %v592 = vld [vmem:[%s409 + $0x109] sm:$0xff]
          %v593 = vld [vmem:[%s409 + $0x111] sm:$0xff]
          %v594 = vld [vmem:[%s409 + $0x121] sm:$0xff]
          %v595 = vld [vmem:[%s409 + $0x129] sm:$0xff]
          %v596 = vld [vmem:[%s409 + $0x139] sm:$0xff]
          %v597 = vld [vmem:[%s409 + $0x141] sm:$0xff]
          %v598 = vld [vmem:[%s409 + $0x151] sm:$0xff]
          %v599 = vld [vmem:[%s409 + $0x159] sm:$0xff]
          %v600 = vld [vmem:[%s409 + $0x169] sm:$0xff]
          %v601 = vld [vmem:[%s409 + $0x171] sm:$0xff]
          %v602 = vld [vmem:[%s409 + $0x2] sm:$0xff]
          %v603 = vld [vmem:[%s409 + $0xa] sm:$0xff]
          %v604 = vld [vmem:[%s409 + $0x1a] sm:$0xff]
          %v605 = vld [vmem:[%s409 + $0x22] sm:$0xff]
          %v606 = vld [vmem:[%s409 + $0x32] sm:$0xff]
          %v607 = vld [vmem:[%s409 + $0x3a] sm:$0xff]
          %v608 = vld [vmem:[%s409 + $0x4a] sm:$0xff]
          %v609 = vld [vmem:[%s409 + $0x52] sm:$0xff]
          %v610 = vld [vmem:[%s409 + $0x62] sm:$0xff]
          %v611 = vld [vmem:[%s409 + $0x6a] sm:$0xff]
          %v612 = vld [vmem:[%s409 + $0x7a] sm:$0xff]
          %v613 = vld [vmem:[%s409 + $0x82] sm:$0xff]
          %v614 = vld [vmem:[%s409 + $0x92] sm:$0xff]
          %v615 = vld [vmem:[%s409 + $0x9a] sm:$0xff]
          %v616 = vld [vmem:[%s409 + $0xaa] sm:$0xff]
          %v617 = vld [vmem:[%s409 + $0xb2] sm:$0xff]
          %v618 = vld [vmem:[%s409 + $0xc2] sm:$0xff]
          %v619 = vld [vmem:[%s409 + $0xca] sm:$0xff]
          %v620 = vld [vmem:[%s409 + $0xda] sm:$0xff]
          %v621 = vld [vmem:[%s409 + $0xe2] sm:$0xff]
          %v622 = vld [vmem:[%s409 + $0xf2] sm:$0xff]
          %v623 = vld [vmem:[%s409 + $0xfa] sm:$0xff]
          %v624 = vld [vmem:[%s409 + $0x10a] sm:$0xff]
          %v625 = vld [vmem:[%s409 + $0x112] sm:$0xff]
          %v626 = vld [vmem:[%s409 + $0x122] sm:$0xff]
          %v627 = vld [vmem:[%s409 + $0x12a] sm:$0xff]
          %v628 = vld [vmem:[%s409 + $0x13a] sm:$0xff]
          %v629 = vld [vmem:[%s409 + $0x142] sm:$0xff]
          %v630 = vld [vmem:[%s409 + $0x152] sm:$0xff]
          %v631 = vld [vmem:[%s409 + $0x15a] sm:$0xff]
          %v632 = vld [vmem:[%s409 + $0x16a] sm:$0xff]
          %v633 = vld [vmem:[%s409 + $0x172] sm:$0xff]
          %s634 = scalar_lea.vmem [#allocation2], 48
          %v635 = vld [vmem:[%s634] sm:$0xff]
          %v636 = vld [vmem:[%s634 + $0x8] sm:$0xff]
          %v637 = vld [vmem:[%s634 + $0x18] sm:$0xff]
          %v638 = vld [vmem:[%s634 + $0x20] sm:$0xff]
          %v639 = vld [vmem:[%s634 + $0x30] sm:$0xff]
          %v640 = vld [vmem:[%s634 + $0x38] sm:$0xff]
          %v641 = vld [vmem:[%s634 + $0x48] sm:$0xff]
          %v642 = vld [vmem:[%s634 + $0x50] sm:$0xff]
          %v643 = vld [vmem:[%s634 + $0x60] sm:$0xff]
          %v644 = vld [vmem:[%s634 + $0x68] sm:$0xff]
          %v645 = vld [vmem:[%s634 + $0x78] sm:$0xff]
          %v646 = vld [vmem:[%s634 + $0x80] sm:$0xff]
          %v647 = vld [vmem:[%s634 + $0x90] sm:$0xff]
          %v648 = vld [vmem:[%s634 + $0x98] sm:$0xff]
          %v649 = vld [vmem:[%s634 + $0xa8] sm:$0xff]
          %v650 = vld [vmem:[%s634 + $0xb0] sm:$0xff]
          %v651 = vld [vmem:[%s634 + $0xc0] sm:$0xff]
          %v652 = vld [vmem:[%s634 + $0xc8] sm:$0xff]
          %v653 = vld [vmem:[%s634 + $0xd8] sm:$0xff]
          %v654 = vld [vmem:[%s634 + $0xe0] sm:$0xff]
          %v655 = vld [vmem:[%s634 + $0xf0] sm:$0xff]
          %v656 = vld [vmem:[%s634 + $0xf8] sm:$0xff]
          %v657 = vld [vmem:[%s634 + $0x108] sm:$0xff]
          %v658 = vld [vmem:[%s634 + $0x110] sm:$0xff]
          %v659 = vld [vmem:[%s634 + $0x120] sm:$0xff]
          %v660 = vld [vmem:[%s634 + $0x128] sm:$0xff]
          %v661 = vld [vmem:[%s634 + $0x138] sm:$0xff]
          %v662 = vld [vmem:[%s634 + $0x140] sm:$0xff]
          %v663 = vld [vmem:[%s634 + $0x150] sm:$0xff]
          %v664 = vld [vmem:[%s634 + $0x158] sm:$0xff]
          %v665 = vld [vmem:[%s634 + $0x168] sm:$0xff]
          %v666 = vld [vmem:[%s634 + $0x170] sm:$0xff]
          %v667 = vld [vmem:[%s634 + $0x1] sm:$0xff]
          %v668 = vld [vmem:[%s634 + $0x9] sm:$0xff]
          %v669 = vld [vmem:[%s634 + $0x19] sm:$0xff]
          %v670 = vld [vmem:[%s634 + $0x21] sm:$0xff]
          %v671 = vld [vmem:[%s634 + $0x31] sm:$0xff]
          %v672 = vld [vmem:[%s634 + $0x39] sm:$0xff]
          %v673 = vld [vmem:[%s634 + $0x49] sm:$0xff]
          %v674 = vld [vmem:[%s634 + $0x51] sm:$0xff]
          %v675 = vld [vmem:[%s634 + $0x61] sm:$0xff]
          %v676 = vld [vmem:[%s634 + $0x69] sm:$0xff]
          %v677 = vld [vmem:[%s634 + $0x79] sm:$0xff]
          %v678 = vld [vmem:[%s634 + $0x81] sm:$0xff]
          %v679 = vld [vmem:[%s634 + $0x91] sm:$0xff]
          %v680 = vld [vmem:[%s634 + $0x99] sm:$0xff]
          %v681 = vld [vmem:[%s634 + $0xa9] sm:$0xff]
          %v682 = vld [vmem:[%s634 + $0xb1] sm:$0xff]
          %v683 = vld [vmem:[%s634 + $0xc1] sm:$0xff]
          %v684 = vld [vmem:[%s634 + $0xc9] sm:$0xff]
          %v685 = vld [vmem:[%s634 + $0xd9] sm:$0xff]
          %v686 = vld [vmem:[%s634 + $0xe1] sm:$0xff]
          %v687 = vld [vmem:[%s634 + $0xf1] sm:$0xff]
          %v688 = vld [vmem:[%s634 + $0xf9] sm:$0xff]
          %v689 = vld [vmem:[%s634 + $0x109] sm:$0xff]
          %v690 = vld [vmem:[%s634 + $0x111] sm:$0xff]
          %v691 = vld [vmem:[%s634 + $0x121] sm:$0xff]
          %v692 = vld [vmem:[%s634 + $0x129] sm:$0xff]
          %v693 = vld [vmem:[%s634 + $0x139] sm:$0xff]
          %v694 = vld [vmem:[%s634 + $0x141] sm:$0xff]
          %v695 = vld [vmem:[%s634 + $0x151] sm:$0xff]
          %v696 = vld [vmem:[%s634 + $0x159] sm:$0xff]
          %v697 = vld [vmem:[%s634 + $0x169] sm:$0xff]
          %v698 = vld [vmem:[%s634 + $0x171] sm:$0xff]
          %v699 = vld [vmem:[%s634 + $0x2] sm:$0xff]
          %v700 = vld [vmem:[%s634 + $0xa] sm:$0xff]
          %v701 = vld [vmem:[%s634 + $0x1a] sm:$0xff]
          %v702 = vld [vmem:[%s634 + $0x22] sm:$0xff]
          %v703 = vld [vmem:[%s634 + $0x32] sm:$0xff]
          %v704 = vld [vmem:[%s634 + $0x3a] sm:$0xff]
          %v705 = vld [vmem:[%s634 + $0x4a] sm:$0xff]
          %v706 = vld [vmem:[%s634 + $0x52] sm:$0xff]
          %v707 = vld [vmem:[%s634 + $0x62] sm:$0xff]
          %v708 = vld [vmem:[%s634 + $0x6a] sm:$0xff]
          %v709 = vld [vmem:[%s634 + $0x7a] sm:$0xff]
          %v710 = vld [vmem:[%s634 + $0x82] sm:$0xff]
          %v711 = vld [vmem:[%s634 + $0x92] sm:$0xff]
          %v712 = vld [vmem:[%s634 + $0x9a] sm:$0xff]
          %v713 = vld [vmem:[%s634 + $0xaa] sm:$0xff]
          %v714 = vld [vmem:[%s634 + $0xb2] sm:$0xff]
          %v715 = vld [vmem:[%s634 + $0xc2] sm:$0xff]
          %v716 = vld [vmem:[%s634 + $0xca] sm:$0xff]
          %v717 = vld [vmem:[%s634 + $0xda] sm:$0xff]
          %v718 = vld [vmem:[%s634 + $0xe2] sm:$0xff]
          %v719 = vld [vmem:[%s634 + $0xf2] sm:$0xff]
          %v720 = vld [vmem:[%s634 + $0xfa] sm:$0xff]
          %v721 = vld [vmem:[%s634 + $0x10a] sm:$0xff]
          %v722 = vld [vmem:[%s634 + $0x112] sm:$0xff]
          %v723 = vld [vmem:[%s634 + $0x122] sm:$0xff]
          %v724 = vld [vmem:[%s634 + $0x12a] sm:$0xff]
          %v725 = vld [vmem:[%s634 + $0x13a] sm:$0xff]
          %v726 = vld [vmem:[%s634 + $0x142] sm:$0xff]
          %v727 = vld [vmem:[%s634 + $0x152] sm:$0xff]
          %v728 = vld [vmem:[%s634 + $0x15a] sm:$0xff]
          %v729 = vld [vmem:[%s634 + $0x16a] sm:$0xff]
          %v730 = vld [vmem:[%s634 + $0x172] sm:$0xff]
          %v731 = vld [vmem:[#allocation7] sm:$0xff]
          %v732 = vld [vmem:[#allocation7 + $0x8] sm:$0xff]
          %v733 = vld [vmem:[#allocation7 + $0x10] sm:$0xff]
          %v734 = vld [vmem:[#allocation7 + $0x18] sm:$0xff]
          %v735 = vld [vmem:[#allocation7 + $0x20] sm:$0xff]
          %v736 = vld [vmem:[#allocation7 + $0x28] sm:$0xff]
          %v737 = vld [vmem:[#allocation7 + $0x30] sm:$0xff]
          %v738 = vld [vmem:[#allocation7 + $0x38] sm:$0xff]
          %v739 = vld [vmem:[#allocation7 + $0x40] sm:$0xff]
          %v740 = vld [vmem:[#allocation7 + $0x48] sm:$0xff]
          %v741 = vld [vmem:[#allocation7 + $0x50] sm:$0xff]
          %v742 = vld [vmem:[#allocation7 + $0x58] sm:$0xff]
          %v743 = vld [vmem:[#allocation7 + $0x60] sm:$0xff]
          %v744 = vld [vmem:[#allocation7 + $0x68] sm:$0xff]
          %v745 = vld [vmem:[#allocation7 + $0x70] sm:$0xff]
          %v746 = vld [vmem:[#allocation7 + $0x78] sm:$0xff]
          %v747 = vld [vmem:[#allocation7 + $0x80] sm:$0xff]
          %v748 = vld [vmem:[#allocation7 + $0x88] sm:$0xff]
          %v749 = vld [vmem:[#allocation7 + $0x90] sm:$0xff]
          %v750 = vld [vmem:[#allocation7 + $0x98] sm:$0xff]
          %v751 = vld [vmem:[#allocation7 + $0xa0] sm:$0xff]
          %v752 = vld [vmem:[#allocation7 + $0xa8] sm:$0xff]
          %v753 = vld [vmem:[#allocation7 + $0xb0] sm:$0xff]
          %v754 = vld [vmem:[#allocation7 + $0xb8] sm:$0xff]
          %v755 = vld [vmem:[#allocation7 + $0xc0] sm:$0xff]
          %v756 = vld [vmem:[#allocation7 + $0xc8] sm:$0xff]
          %v757 = vld [vmem:[#allocation7 + $0xd0] sm:$0xff]
          %v758 = vld [vmem:[#allocation7 + $0xd8] sm:$0xff]
          %v759 = vld [vmem:[#allocation7 + $0xe0] sm:$0xff]
          %v760 = vld [vmem:[#allocation7 + $0xe8] sm:$0xff]
          %v761 = vld [vmem:[#allocation7 + $0xf0] sm:$0xff]
          %v762 = vld [vmem:[#allocation7 + $0xf8] sm:$0xff]
          %v763 = vld [vmem:[#allocation7 + $0x100] sm:$0xff]
          %v764 = vld [vmem:[#allocation7 + $0x108] sm:$0xff]
          %v765 = vld [vmem:[#allocation7 + $0x110] sm:$0xff]
          %v766 = vld [vmem:[#allocation7 + $0x118] sm:$0xff]
          %v767 = vld [vmem:[#allocation7 + $0x120] sm:$0xff]
          %v768 = vld [vmem:[#allocation7 + $0x128] sm:$0xff]
          %v769 = vld [vmem:[#allocation7 + $0x130] sm:$0xff]
          %v770 = vld [vmem:[#allocation7 + $0x138] sm:$0xff]
          %v771 = vld [vmem:[#allocation7 + $0x140] sm:$0xff]
          %v772 = vld [vmem:[#allocation7 + $0x148] sm:$0xff]
          %v773 = vld [vmem:[#allocation7 + $0x150] sm:$0xff]
          %v774 = vld [vmem:[#allocation7 + $0x158] sm:$0xff]
          %v775 = vld [vmem:[#allocation7 + $0x160] sm:$0xff]
          %v776 = vld [vmem:[#allocation7 + $0x168] sm:$0xff]
          %v777 = vld [vmem:[#allocation7 + $0x170] sm:$0xff]
          %v778 = vld [vmem:[#allocation7 + $0x178] sm:$0xff]
          %v779 = vld [vmem:[#allocation7 + $0x180] sm:$0xff]
          %v780 = vld [vmem:[#allocation7 + $0x188] sm:$0xff]
          %v781 = vld [vmem:[#allocation7 + $0x190] sm:$0xff]
          %v782 = vld [vmem:[#allocation7 + $0x198] sm:$0xff]
          %v783 = vld [vmem:[#allocation7 + $0x1a0] sm:$0xff]
          %v784 = vld [vmem:[#allocation7 + $0x1a8] sm:$0xff]
          %v785 = vld [vmem:[#allocation7 + $0x1b0] sm:$0xff]
          %v786 = vld [vmem:[#allocation7 + $0x1b8] sm:$0xff]
          %v787 = vld [vmem:[#allocation7 + $0x1c0] sm:$0xff]
          %v788 = vld [vmem:[#allocation7 + $0x1c8] sm:$0xff]
          %v789 = vld [vmem:[#allocation7 + $0x1d0] sm:$0xff]
          %v790 = vld [vmem:[#allocation7 + $0x1d8] sm:$0xff]
          %v791 = vld [vmem:[#allocation7 + $0x1e0] sm:$0xff]
          %v792 = vld [vmem:[#allocation7 + $0x1e8] sm:$0xff]
          %v793 = vld [vmem:[#allocation7 + $0x1f0] sm:$0xff]
          %v794 = vld [vmem:[#allocation7 + $0x1f8] sm:$0xff]
          %v795 = vld [vmem:[#allocation7 + $0x200] sm:$0xff]
          %v796 = vld [vmem:[#allocation7 + $0x208] sm:$0xff]
          %v797 = vld [vmem:[#allocation7 + $0x210] sm:$0xff]
          %v798 = vld [vmem:[#allocation7 + $0x218] sm:$0xff]
          %v799 = vld [vmem:[#allocation7 + $0x220] sm:$0xff]
          %v800 = vld [vmem:[#allocation7 + $0x228] sm:$0xff]
          %v801 = vld [vmem:[#allocation7 + $0x230] sm:$0xff]
          %v802 = vld [vmem:[#allocation7 + $0x238] sm:$0xff]
          %v803 = vld [vmem:[#allocation7 + $0x240] sm:$0xff]
          %v804 = vld [vmem:[#allocation7 + $0x248] sm:$0xff]
          %v805 = vld [vmem:[#allocation7 + $0x250] sm:$0xff]
          %v806 = vld [vmem:[#allocation7 + $0x258] sm:$0xff]
          %v807 = vld [vmem:[#allocation7 + $0x260] sm:$0xff]
          %v808 = vld [vmem:[#allocation7 + $0x268] sm:$0xff]
          %v809 = vld [vmem:[#allocation7 + $0x270] sm:$0xff]
          %v810 = vld [vmem:[#allocation7 + $0x278] sm:$0xff]
          %v811 = vld [vmem:[#allocation7 + $0x280] sm:$0xff]
          %v812 = vld [vmem:[#allocation7 + $0x288] sm:$0xff]
          %v813 = vld [vmem:[#allocation7 + $0x290] sm:$0xff]
          %v814 = vld [vmem:[#allocation7 + $0x298] sm:$0xff]
          %v815 = vld [vmem:[#allocation7 + $0x2a0] sm:$0xff]
          %v816 = vld [vmem:[#allocation7 + $0x2a8] sm:$0xff]
          %v817 = vld [vmem:[#allocation7 + $0x2b0] sm:$0xff]
          %v818 = vld [vmem:[#allocation7 + $0x2b8] sm:$0xff]
          %v819 = vld [vmem:[#allocation7 + $0x2c0] sm:$0xff]
          %v820 = vld [vmem:[#allocation7 + $0x2c8] sm:$0xff]
          %v821 = vld [vmem:[#allocation7 + $0x2d0] sm:$0xff]
          %v822 = vld [vmem:[#allocation7 + $0x2d8] sm:$0xff]
          %v823 = vld [vmem:[#allocation7 + $0x2e0] sm:$0xff]
          %v824 = vld [vmem:[#allocation7 + $0x2e8] sm:$0xff]
          %v825 = vld [vmem:[#allocation7 + $0x2f0] sm:$0xff]
          %v826 = vld [vmem:[#allocation7 + $0x2f8] sm:$0xff]
          %v827 = vld [vmem:[#allocation7 + $0x300] sm:$0xff]
          %v828 = vld [vmem:[#allocation7 + $0x308] sm:$0xff]
          %v829 = vld [vmem:[#allocation7 + $0x310] sm:$0xff]
          %v830 = vld [vmem:[#allocation7 + $0x318] sm:$0xff]
          %v831 = vld [vmem:[#allocation7 + $0x320] sm:$0xff]
          %v832 = vld [vmem:[#allocation7 + $0x328] sm:$0xff]
          %v833 = vld [vmem:[#allocation7 + $0x330] sm:$0xff]
          %v834 = vld [vmem:[#allocation7 + $0x338] sm:$0xff]
          %v835 = vld [vmem:[#allocation7 + $0x340] sm:$0xff]
          %v836 = vld [vmem:[#allocation7 + $0x348] sm:$0xff]
          %v837 = vld [vmem:[#allocation7 + $0x350] sm:$0xff]
          %v838 = vld [vmem:[#allocation7 + $0x358] sm:$0xff]
          %v839 = vld [vmem:[#allocation7 + $0x360] sm:$0xff]
          %v840 = vld [vmem:[#allocation7 + $0x368] sm:$0xff]
          %v841 = vld [vmem:[#allocation7 + $0x370] sm:$0xff]
          %v842 = vld [vmem:[#allocation7 + $0x378] sm:$0xff]
          %v843 = vld [vmem:[#allocation7 + $0x380] sm:$0xff]
          %v844 = vld [vmem:[#allocation7 + $0x388] sm:$0xff]
          %v845 = vld [vmem:[#allocation7 + $0x390] sm:$0xff]
          %v846 = vld [vmem:[#allocation7 + $0x398] sm:$0xff]
          %v847 = vld [vmem:[#allocation7 + $0x3a0] sm:$0xff]
          %v848 = vld [vmem:[#allocation7 + $0x3a8] sm:$0xff]
          %v849 = vld [vmem:[#allocation7 + $0x3b0] sm:$0xff]
          %v850 = vld [vmem:[#allocation7 + $0x3b8] sm:$0xff]
          %v851 = vld [vmem:[#allocation7 + $0x3c0] sm:$0xff]
          %v852 = vld [vmem:[#allocation7 + $0x3c8] sm:$0xff]
          %v853 = vld [vmem:[#allocation7 + $0x3d0] sm:$0xff]
          %v854 = vld [vmem:[#allocation7 + $0x3d8] sm:$0xff]
          %v855 = vld [vmem:[#allocation7 + $0x3e0] sm:$0xff]
          %v856 = vld [vmem:[#allocation7 + $0x3e8] sm:$0xff]
          %v857 = vld [vmem:[#allocation7 + $0x3f0] sm:$0xff]
          %v858 = vld [vmem:[#allocation7 + $0x3f8] sm:$0xff]
          %v859 = vld [vmem:[#allocation7 + $0x400] sm:$0xff]
          %v860 = vld [vmem:[#allocation7 + $0x408] sm:$0xff]
          %v861 = vld [vmem:[#allocation7 + $0x410] sm:$0xff]
          %v862 = vld [vmem:[#allocation7 + $0x418] sm:$0xff]
          %v863 = vld [vmem:[#allocation7 + $0x420] sm:$0xff]
          %v864 = vld [vmem:[#allocation7 + $0x428] sm:$0xff]
          %v865 = vld [vmem:[#allocation7 + $0x430] sm:$0xff]
          %v866 = vld [vmem:[#allocation7 + $0x438] sm:$0xff]
          %v867 = vld [vmem:[#allocation7 + $0x440] sm:$0xff]
          %v868 = vld [vmem:[#allocation7 + $0x448] sm:$0xff]
          %v869 = vld [vmem:[#allocation7 + $0x450] sm:$0xff]
          %v870 = vld [vmem:[#allocation7 + $0x458] sm:$0xff]
          %v871 = vld [vmem:[#allocation7 + $0x460] sm:$0xff]
          %v872 = vld [vmem:[#allocation7 + $0x468] sm:$0xff]
          %v873 = vld [vmem:[#allocation7 + $0x470] sm:$0xff]
          %v874 = vld [vmem:[#allocation7 + $0x478] sm:$0xff]
          %v875 = vld [vmem:[%s2] sm:$0x1]
          %v877 = vlaneseq
          %v878 = vshrl.u32 %v877, 7
          %v879 = vsub.s32 0, %v878
          %v880 = vrot.slane %v875, %v879
          %882 = vmatprep.subr.mxu0 0.0
          %883 = vmatpush1.msra.mxu0 %v731
          %884 = vmatprep.subr.mxu0 0.0
          %885 = vmatpush1.msra.mxu0 %v732
          %886 = vmatprep.subr.mxu0 0.0
          %887 = vmatpush1.msra.mxu0 %v733
          %888 = vmatprep.subr.mxu0 0.0
          %889 = vmatpush1.msra.mxu0 %v734
          %890 = vmatprep.subr.mxu0 0.0
          %891 = vmatpush1.msra.mxu0 %v735
          %892 = vmatprep.subr.mxu0 0.0
          %893 = vmatpush1.msra.mxu0 %v736
          %894 = vmatprep.subr.mxu0 0.0
          %895 = vmatpush1.msra.mxu0 %v737
          %896 = vmatprep.subr.mxu0 0.0
          %897 = vmatpush1.msra.mxu0 %v738
          %898 = vmatprep.subr.mxu0 0.0
          %899 = vmatpush1.msra.mxu0 %v739
          %900 = vmatprep.subr.mxu0 0.0
          %901 = vmatpush1.msra.mxu0 %v740
          %902 = vmatprep.subr.mxu0 0.0
          %903 = vmatpush1.msra.mxu0 %v741
          %904 = vmatprep.subr.mxu0 0.0
          %905 = vmatpush1.msra.mxu0 %v742
          %906 = vmatprep.subr.mxu0 0.0
          %907 = vmatpush1.msra.mxu0 %v743
          %908 = vmatprep.subr.mxu0 0.0
          %909 = vmatpush1.msra.mxu0 %v744
          %910 = vmatprep.subr.mxu0 0.0
          %911 = vmatpush1.msra.mxu0 %v745
          %912 = vmatprep.subr.mxu0 0.0
          %913 = vmatpush1.msra.mxu0 %v746
          %914 = vmatprep.subr.mxu0 0.0
          %915 = vmatpush1.msra.mxu0 %v747
          %916 = vmatprep.subr.mxu0 0.0
          %917 = vmatpush1.msra.mxu0 %v748
          %918 = vmatprep.subr.mxu0 0.0
          %919 = vmatpush1.msra.mxu0 %v749
          %920 = vmatprep.subr.mxu0 0.0
          %921 = vmatpush1.msra.mxu0 %v750
          %922 = vmatprep.subr.mxu0 0.0
          %923 = vmatpush1.msra.mxu0 %v751
          %924 = vmatprep.subr.mxu0 0.0
          %925 = vmatpush1.msra.mxu0 %v752
          %926 = vmatprep.subr.mxu0 0.0
          %927 = vmatpush1.msra.mxu0 %v753
          %928 = vmatprep.subr.mxu0 0.0
          %929 = vmatpush1.msra.mxu0 %v754
          %930 = vmatprep.subr.mxu0 0.0
          %931 = vmatpush1.msra.mxu0 %v755
          %932 = vmatprep.subr.mxu0 0.0
          %933 = vmatpush1.msra.mxu0 %v756
          %934 = vmatprep.subr.mxu0 0.0
          %935 = vmatpush1.msra.mxu0 %v757
          %936 = vmatprep.subr.mxu0 0.0
          %937 = vmatpush1.msra.mxu0 %v758
          %938 = vmatprep.subr.mxu0 0.0
          %939 = vmatpush1.msra.mxu0 %v759
          %940 = vmatprep.subr.mxu0 0.0
          %941 = vmatpush1.msra.mxu0 %v760
          %942 = vmatprep.subr.mxu0 0.0
          %943 = vmatpush1.msra.mxu0 %v761
          %944 = vmatprep.subr.mxu0 0.0
          %945 = vmatpush1.msra.mxu0 %v762
          %946 = vmatprep.mubr.f32.mxu0 %v474
          %947 = vmatmul.mubr.f32.gmra.mrb[0].mxu0 %v442
          %v948 = vpop.f32.mrb[0].mxu0
          %v949 = vadd.f32 %v880, %v948
          %v950 = vpop.f32.mrb[0].mxu0
          %951 = vmatprep.mubr.f32.mxu0 %v475
          %952 = vmatmul.mubr.f32.gmra.mrb[0].mxu0 %v443
          %v953 = vpop.f32.mrb[0].mxu0
          %v954 = vadd.f32 %v880, %v953
          %v955 = vpop.f32.mrb[0].mxu0
          %956 = vmatprep.mubr.f32.mxu0 %v476
          %957 = vmatmul.mubr.f32.gmra.mrb[0].mxu0 %v444
          %v958 = vpop.f32.mrb[0].mxu0
          %v959 = vadd.f32 %v880, %v958
          %v960 = vpop.f32.mrb[0].mxu0
          %961 = vmatprep.mubr.f32.mxu0 %v477
          %962 = vmatmul.mubr.f32.gmra.mrb[0].mxu0 %v445
          %v963 = vpop.f32.mrb[0].mxu0
          %v964 = vadd.f32 %v880, %v963
          %v965 = vpop.f32.mrb[0].mxu0
          %966 = vmatprep.mubr.f32.mxu0 %v478
          %967 = vmatmul.mubr.f32.gmra.mrb[0].mxu0 %v446
          %v968 = vpop.f32.mrb[0].mxu0
          %v969 = vadd.f32 %v880, %v968
          %v970 = vpop.f32.mrb[0].mxu0
          %971 = vmatprep.mubr.f32.mxu0 %v479
          %972 = vmatmul.mubr.f32.gmra.mrb[0].mxu0 %v447
          %v973 = vpop.f32.mrb[0].mxu0
          %v974 = vadd.f32 %v880, %v973
          %v975 = vpop.f32.mrb[0].mxu0
          %976 = vmatprep.mubr.f32.mxu0 %v480
          %977 = vmatmul.mubr.f32.gmra.mrb[0].mxu0 %v448
          %v978 = vpop.f32.mrb[0].mxu0
          %v979 = vadd.f32 %v880, %v978
          %v980 = vpop.f32.mrb[0].mxu0
          %981 = vmatprep.mubr.f32.mxu0 %v481
          %982 = vmatmul.mubr.f32.gmra.mrb[0].mxu0 %v449
          %v983 = vpop.f32.mrb[0].mxu0
          %v984 = vadd.f32 %v880, %v983
          %v985 = vpop.f32.mrb[0].mxu0
          %986 = vmatprep.mubr.f32.mxu0 %v482
          %987 = vmatmul.mubr.f32.gmra.mrb[0].mxu0 %v450
          %v988 = vpop.f32.mrb[0].mxu0
          %v989 = vadd.f32 %v880, %v988
          %v990 = vpop.f32.mrb[0].mxu0
          %991 = vmatprep.mubr.f32.mxu0 %v483
          %992 = vmatmul.mubr.f32.gmra.mrb[0].mxu0 %v451
          %v993 = vpop.f32.mrb[0].mxu0
          %v994 = vadd.f32 %v880, %v993
          %v995 = vpop.f32.mrb[0].mxu0
          %996 = vmatprep.mubr.f32.mxu0 %v484
          %997 = vmatmul.mubr.f32.gmra.mrb[0].mxu0 %v452
          %v998 = vpop.f32.mrb[0].mxu0
          %v999 = vadd.f32 %v880, %v998
          %v1000 = vpop.f32.mrb[0].mxu0
          %1001 = vmatprep.mubr.f32.mxu0 %v485
          %1002 = vmatmul.mubr.f32.gmra.mrb[0].mxu0 %v453
          %v1003 = vpop.f32.mrb[0].mxu0
          %v1004 = vadd.f32 %v880, %v1003
          %v1005 = vpop.f32.mrb[0].mxu0
          %1006 = vmatprep.mubr.f32.mxu0 %v486
          %1007 = vmatmul.mubr.f32.gmra.mrb[0].mxu0 %v454
          %v1008 = vpop.f32.mrb[0].mxu0
          %v1009 = vadd.f32 %v880, %v1008
          %v1010 = vpop.f32.mrb[0].mxu0
          %1011 = vmatprep.mubr.f32.mxu0 %v487
          %1012 = vmatmul.mubr.f32.gmra.mrb[0].mxu0 %v455
          %v1013 = vpop.f32.mrb[0].mxu0
          %v1014 = vadd.f32 %v880, %v1013
          %v1015 = vpop.f32.mrb[0].mxu0
          %1016 = vmatprep.mubr.f32.mxu0 %v488
          %1017 = vmatmul.mubr.f32.gmra.mrb[0].mxu0 %v456
          %v1018 = vpop.f32.mrb[0].mxu0
          %v1019 = vadd.f32 %v880, %v1018
          %v1020 = vpop.f32.mrb[0].mxu0
          %1021 = vmatprep.mubr.f32.mxu0 %v489
          %1022 = vmatmul.mubr.f32.gmra.mrb[0].mxu0 %v457
          %v1023 = vpop.f32.mrb[0].mxu0
          %v1024 = vadd.f32 %v880, %v1023
          %v1025 = vpop.f32.mrb[0].mxu0
          %1026 = vmatprep.mubr.f32.mxu0 %v490
          %1027 = vmatmul.mubr.f32.gmra.mrb[0].mxu0 %v458
          %v1028 = vpop.f32.mrb[0].mxu0
          %v1029 = vadd.f32 %v880, %v1028
          %v1030 = vpop.f32.mrb[0].mxu0
          %1031 = vmatprep.mubr.f32.mxu0 %v491
          %1032 = vmatmul.mubr.f32.gmra.mrb[0].mxu0 %v459
          %v1033 = vpop.f32.mrb[0].mxu0
          %v1034 = vadd.f32 %v880, %v1033
          %v1035 = vpop.f32.mrb[0].mxu0
          %1036 = vmatprep.mubr.f32.mxu0 %v492
          %1037 = vmatmul.mubr.f32.gmra.mrb[0].mxu0 %v460
          %v1038 = vpop.f32.mrb[0].mxu0
          %v1039 = vadd.f32 %v880, %v1038
          %v1040 = vpop.f32.mrb[0].mxu0
          %1041 = vmatprep.mubr.f32.mxu0 %v493
          %1042 = vmatmul.mubr.f32.gmra.mrb[0].mxu0 %v461
          %v1043 = vpop.f32.mrb[0].mxu0
          %v1044 = vadd.f32 %v880, %v1043
          %v1045 = vpop.f32.mrb[0].mxu0
          %1046 = vmatprep.mubr.f32.mxu0 %v494
          %1047 = vmatmul.mubr.f32.gmra.mrb[0].mxu0 %v462
          %v1048 = vpop.f32.mrb[0].mxu0
          %v1049 = vadd.f32 %v880, %v1048
          %v1050 = vpop.f32.mrb[0].mxu0
          %1051 = vmatprep.mubr.f32.mxu0 %v495
          %1052 = vmatmul.mubr.f32.gmra.mrb[0].mxu0 %v463
          %v1053 = vpop.f32.mrb[0].mxu0
          %v1054 = vadd.f32 %v880, %v1053
          %v1055 = vpop.f32.mrb[0].mxu0
          %1056 = vmatprep.mubr.f32.mxu0 %v496
          %1057 = vmatmul.mubr.f32.gmra.mrb[0].mxu0 %v464
          %v1058 = vpop.f32.mrb[0].mxu0
          %v1059 = vadd.f32 %v880, %v1058
          %v1060 = vpop.f32.mrb[0].mxu0
          %1061 = vmatprep.mubr.f32.mxu0 %v497
          %1062 = vmatmul.mubr.f32.gmra.mrb[0].mxu0 %v465
          %v1063 = vpop.f32.mrb[0].mxu0
          %v1064 = vadd.f32 %v880, %v1063
          %v1065 = vpop.f32.mrb[0].mxu0
          %1066 = vmatprep.mubr.f32.mxu0 %v498
          %1067 = vmatmul.mubr.f32.gmra.mrb[0].mxu0 %v466
          %v1068 = vpop.f32.mrb[0].mxu0
          %v1069 = vadd.f32 %v880, %v1068
          %v1070 = vpop.f32.mrb[0].mxu0
          %1071 = vmatprep.mubr.f32.mxu0 %v499
          %1072 = vmatmul.mubr.f32.gmra.mrb[0].mxu0 %v467
          %v1073 = vpop.f32.mrb[0].mxu0
          %v1074 = vadd.f32 %v880, %v1073
          %v1075 = vpop.f32.mrb[0].mxu0
          %1076 = vmatprep.mubr.f32.mxu0 %v500
          %1077 = vmatmul.mubr.f32.gmra.mrb[0].mxu0 %v468
          %v1078 = vpop.f32.mrb[0].mxu0
          %v1079 = vadd.f32 %v880, %v1078
          %v1080 = vpop.f32.mrb[0].mxu0
          %1081 = vmatprep.mubr.f32.mxu0 %v501
          %1082 = vmatmul.mubr.f32.gmra.mrb[0].mxu0 %v469
          %v1083 = vpop.f32.mrb[0].mxu0
          %v1084 = vadd.f32 %v880, %v1083
          %v1085 = vpop.f32.mrb[0].mxu0
          %1086 = vmatprep.mubr.f32.mxu0 %v502
          %1087 = vmatmul.mubr.f32.gmra.mrb[0].mxu0 %v470
          %v1088 = vpop.f32.mrb[0].mxu0
          %v1089 = vadd.f32 %v880, %v1088
          %v1090 = vpop.f32.mrb[0].mxu0
          %1091 = vmatprep.mubr.f32.mxu0 %v503
          %1092 = vmatmul.mubr.f32.gmra.mrb[0].mxu0 %v471
          %v1093 = vpop.f32.mrb[0].mxu0
          %v1094 = vadd.f32 %v880, %v1093
          %v1095 = vpop.f32.mrb[0].mxu0
          %1096 = vmatprep.mubr.f32.mxu0 %v504
          %1097 = vmatmul.mubr.f32.gmra.mrb[0].mxu0 %v472
          %v1098 = vpop.f32.mrb[0].mxu0
          %v1099 = vadd.f32 %v880, %v1098
          %v1100 = vpop.f32.mrb[0].mxu0
          %1101 = vmatprep.mubr.f32.mxu0 %v505
          %1102 = vmatmul.mubr.f32.gmra.mrb[0].mxu0 %v473
          %v1103 = vpop.f32.mrb[0].mxu0
          %v1104 = vadd.f32 %v880, %v1103
          %v1105 = vpop.f32.mrb[0].mxu0
          %1106 = vdwg.mxu0
          %1107 = vmatprep.subr.mxu0 0.0
          %1108 = vmatpush1.msra.mxu0 %v763
          %1109 = vmatprep.subr.mxu0 0.0
          %1110 = vmatpush1.msra.mxu0 %v764
          %1111 = vmatprep.subr.mxu0 0.0
          %1112 = vmatpush1.msra.mxu0 %v765
          %1113 = vmatprep.subr.mxu0 0.0
          %1114 = vmatpush1.msra.mxu0 %v766
          %1115 = vmatprep.subr.mxu0 0.0
          %1116 = vmatpush1.msra.mxu0 %v767
          %1117 = vmatprep.subr.mxu0 0.0
          %1118 = vmatpush1.msra.mxu0 %v768
          %1119 = vmatprep.subr.mxu0 0.0
          %1120 = vmatpush1.msra.mxu0 %v769
          %1121 = vmatprep.subr.mxu0 0.0
          %1122 = vmatpush1.msra.mxu0 %v770
          %1123 = vmatprep.subr.mxu0 0.0
          %1124 = vmatpush1.msra.mxu0 %v771
          %1125 = vmatprep.subr.mxu0 0.0
          %1126 = vmatpush1.msra.mxu0 %v772
          %1127 = vmatprep.subr.mxu0 0.0
          %1128 = vmatpush1.msra.mxu0 %v773
          %1129 = vmatprep.subr.mxu0 0.0
          %1130 = vmatpush1.msra.mxu0 %v774
          %1131 = vmatprep.subr.mxu0 0.0
          %1132 = vmatpush1.msra.mxu0 %v775
          %1133 = vmatprep.subr.mxu0 0.0
          %1134 = vmatpush1.msra.mxu0 %v776
          %1135 = vmatprep.subr.mxu0 0.0
          %1136 = vmatpush1.msra.mxu0 %v777
          %1137 = vmatprep.subr.mxu0 0.0
          %1138 = vmatpush1.msra.mxu0 %v778
          %1139 = vmatprep.subr.mxu0 0.0
          %1140 = vmatpush1.msra.mxu0 %v779
          %1141 = vmatprep.subr.mxu0 0.0
          %1142 = vmatpush1.msra.mxu0 %v780
          %1143 = vmatprep.subr.mxu0 0.0
          %1144 = vmatpush1.msra.mxu0 %v781
          %1145 = vmatprep.subr.mxu0 0.0
          %1146 = vmatpush1.msra.mxu0 %v782
          %1147 = vmatprep.subr.mxu0 0.0
          %1148 = vmatpush1.msra.mxu0 %v783
          %1149 = vmatprep.subr.mxu0 0.0
          %1150 = vmatpush1.msra.mxu0 %v784
          %1151 = vmatprep.subr.mxu0 0.0
          %1152 = vmatpush1.msra.mxu0 %v785
          %1153 = vmatprep.subr.mxu0 0.0
          %1154 = vmatpush1.msra.mxu0 %v786
          %1155 = vmatprep.subr.mxu0 0.0
          %1156 = vmatpush1.msra.mxu0 %v787
          %1157 = vmatprep.subr.mxu0 0.0
          %1158 = vmatpush1.msra.mxu0 %v788
          %1159 = vmatprep.subr.mxu0 0.0
          %1160 = vmatpush1.msra.mxu0 %v789
          %1161 = vmatprep.subr.mxu0 0.0
          %1162 = vmatpush1.msra.mxu0 %v790
          %1163 = vmatprep.subr.mxu0 0.0
          %1164 = vmatpush1.msra.mxu0 %v791
          %1165 = vmatprep.subr.mxu0 0.0
          %1166 = vmatpush1.msra.mxu0 %v792
          %1167 = vmatprep.subr.mxu0 0.0
          %1168 = vmatpush1.msra.mxu0 %v793
          %1169 = vmatprep.subr.mxu0 0.0
          %1170 = vmatpush1.msra.mxu0 %v794
          %1171 = vmatprep.mubr.f32.mxu0 %v538
          %1172 = vmatmul.mubr.f32.gmra.mrb[0].mxu0 %v506
          %v1173 = vpop.f32.mrb[0].mxu0
          %v1174 = vadd.f32 %v949, %v1173
          %v1175 = vpop.f32.mrb[0].mxu0
          %1176 = vmatprep.mubr.f32.mxu0 %v539
          %1177 = vmatmul.mubr.f32.gmra.mrb[0].mxu0 %v507
          %v1178 = vpop.f32.mrb[0].mxu0
          %v1179 = vadd.f32 %v954, %v1178
          %v1180 = vpop.f32.mrb[0].mxu0
          %1181 = vmatprep.mubr.f32.mxu0 %v540
          %1182 = vmatmul.mubr.f32.gmra.mrb[0].mxu0 %v508
          %v1183 = vpop.f32.mrb[0].mxu0
          %v1184 = vadd.f32 %v959, %v1183
          %v1185 = vpop.f32.mrb[0].mxu0
          %1186 = vmatprep.mubr.f32.mxu0 %v541
          %1187 = vmatmul.mubr.f32.gmra.mrb[0].mxu0 %v509
          %v1188 = vpop.f32.mrb[0].mxu0
          %v1189 = vadd.f32 %v964, %v1188
          %v1190 = vpop.f32.mrb[0].mxu0
          %1191 = vmatprep.mubr.f32.mxu0 %v542
          %1192 = vmatmul.mubr.f32.gmra.mrb[0].mxu0 %v510
          %v1193 = vpop.f32.mrb[0].mxu0
          %v1194 = vadd.f32 %v969, %v1193
          %v1195 = vpop.f32.mrb[0].mxu0
          %1196 = vmatprep.mubr.f32.mxu0 %v543
          %1197 = vmatmul.mubr.f32.gmra.mrb[0].mxu0 %v511
          %v1198 = vpop.f32.mrb[0].mxu0
          %v1199 = vadd.f32 %v974, %v1198
          %v1200 = vpop.f32.mrb[0].mxu0
          %1201 = vmatprep.mubr.f32.mxu0 %v544
          %1202 = vmatmul.mubr.f32.gmra.mrb[0].mxu0 %v512
          %v1203 = vpop.f32.mrb[0].mxu0
          %v1204 = vadd.f32 %v979, %v1203
          %v1205 = vpop.f32.mrb[0].mxu0
          %1206 = vmatprep.mubr.f32.mxu0 %v545
          %1207 = vmatmul.mubr.f32.gmra.mrb[0].mxu0 %v513
          %v1208 = vpop.f32.mrb[0].mxu0
          %v1209 = vadd.f32 %v984, %v1208
          %v1210 = vpop.f32.mrb[0].mxu0
          %1211 = vmatprep.mubr.f32.mxu0 %v546
          %1212 = vmatmul.mubr.f32.gmra.mrb[0].mxu0 %v514
          %v1213 = vpop.f32.mrb[0].mxu0
          %v1214 = vadd.f32 %v989, %v1213
          %v1215 = vpop.f32.mrb[0].mxu0
          %1216 = vmatprep.mubr.f32.mxu0 %v547
          %1217 = vmatmul.mubr.f32.gmra.mrb[0].mxu0 %v515
          %v1218 = vpop.f32.mrb[0].mxu0
          %v1219 = vadd.f32 %v994, %v1218
          %v1220 = vpop.f32.mrb[0].mxu0
          %1221 = vmatprep.mubr.f32.mxu0 %v548
          %1222 = vmatmul.mubr.f32.gmra.mrb[0].mxu0 %v516
          %v1223 = vpop.f32.mrb[0].mxu0
          %v1224 = vadd.f32 %v999, %v1223
          %v1225 = vpop.f32.mrb[0].mxu0
          %1226 = vmatprep.mubr.f32.mxu0 %v549
          %1227 = vmatmul.mubr.f32.gmra.mrb[0].mxu0 %v517
          %v1228 = vpop.f32.mrb[0].mxu0
          %v1229 = vadd.f32 %v1004, %v1228
          %v1230 = vpop.f32.mrb[0].mxu0
          %1231 = vmatprep.mubr.f32.mxu0 %v550
          %1232 = vmatmul.mubr.f32.gmra.mrb[0].mxu0 %v518
          %v1233 = vpop.f32.mrb[0].mxu0
          %v1234 = vadd.f32 %v1009, %v1233
          %v1235 = vpop.f32.mrb[0].mxu0
          %1236 = vmatprep.mubr.f32.mxu0 %v551
          %1237 = vmatmul.mubr.f32.gmra.mrb[0].mxu0 %v519
          %v1238 = vpop.f32.mrb[0].mxu0
          %v1239 = vadd.f32 %v1014, %v1238
          %v1240 = vpop.f32.mrb[0].mxu0
          %1241 = vmatprep.mubr.f32.mxu0 %v552
          %1242 = vmatmul.mubr.f32.gmra.mrb[0].mxu0 %v520
          %v1243 = vpop.f32.mrb[0].mxu0
          %v1244 = vadd.f32 %v1019, %v1243
          %v1245 = vpop.f32.mrb[0].mxu0
          %1246 = vmatprep.mubr.f32.mxu0 %v553
          %1247 = vmatmul.mubr.f32.gmra.mrb[0].mxu0 %v521
          %v1248 = vpop.f32.mrb[0].mxu0
          %v1249 = vadd.f32 %v1024, %v1248
          %v1250 = vpop.f32.mrb[0].mxu0
          %1251 = vmatprep.mubr.f32.mxu0 %v554
          %1252 = vmatmul.mubr.f32.gmra.mrb[0].mxu0 %v522
          %v1253 = vpop.f32.mrb[0].mxu0
          %v1254 = vadd.f32 %v1029, %v1253
          %v1255 = vpop.f32.mrb[0].mxu0
          %1256 = vmatprep.mubr.f32.mxu0 %v555
          %1257 = vmatmul.mubr.f32.gmra.mrb[0].mxu0 %v523
          %v1258 = vpop.f32.mrb[0].mxu0
          %v1259 = vadd.f32 %v1034, %v1258
          %v1260 = vpop.f32.mrb[0].mxu0
          %1261 = vmatprep.mubr.f32.mxu0 %v556
          %1262 = vmatmul.mubr.f32.gmra.mrb[0].mxu0 %v524
          %v1263 = vpop.f32.mrb[0].mxu0
          %v1264 = vadd.f32 %v1039, %v1263
          %v1265 = vpop.f32.mrb[0].mxu0
          %1266 = vmatprep.mubr.f32.mxu0 %v557
          %1267 = vmatmul.mubr.f32.gmra.mrb[0].mxu0 %v525
          %v1268 = vpop.f32.mrb[0].mxu0
          %v1269 = vadd.f32 %v1044, %v1268
          %v1270 = vpop.f32.mrb[0].mxu0
          %1271 = vmatprep.mubr.f32.mxu0 %v558
          %1272 = vmatmul.mubr.f32.gmra.mrb[0].mxu0 %v526
          %v1273 = vpop.f32.mrb[0].mxu0
          %v1274 = vadd.f32 %v1049, %v1273
          %v1275 = vpop.f32.mrb[0].mxu0
          %1276 = vmatprep.mubr.f32.mxu0 %v559
          %1277 = vmatmul.mubr.f32.gmra.mrb[0].mxu0 %v527
          %v1278 = vpop.f32.mrb[0].mxu0
          %v1279 = vadd.f32 %v1054, %v1278
          %v1280 = vpop.f32.mrb[0].mxu0
          %1281 = vmatprep.mubr.f32.mxu0 %v560
          %1282 = vmatmul.mubr.f32.gmra.mrb[0].mxu0 %v528
          %v1283 = vpop.f32.mrb[0].mxu0
          %v1284 = vadd.f32 %v1059, %v1283
          %v1285 = vpop.f32.mrb[0].mxu0
          %1286 = vmatprep.mubr.f32.mxu0 %v561
          %1287 = vmatmul.mubr.f32.gmra.mrb[0].mxu0 %v529
          %v1288 = vpop.f32.mrb[0].mxu0
          %v1289 = vadd.f32 %v1064, %v1288
          %v1290 = vpop.f32.mrb[0].mxu0
          %1291 = vmatprep.mubr.f32.mxu0 %v562
          %1292 = vmatmul.mubr.f32.gmra.mrb[0].mxu0 %v530
          %v1293 = vpop.f32.mrb[0].mxu0
          %v1294 = vadd.f32 %v1069, %v1293
          %v1295 = vpop.f32.mrb[0].mxu0
          %1296 = vmatprep.mubr.f32.mxu0 %v563
          %1297 = vmatmul.mubr.f32.gmra.mrb[0].mxu0 %v531
          %v1298 = vpop.f32.mrb[0].mxu0
          %v1299 = vadd.f32 %v1074, %v1298
          %v1300 = vpop.f32.mrb[0].mxu0
          %1301 = vmatprep.mubr.f32.mxu0 %v564
          %1302 = vmatmul.mubr.f32.gmra.mrb[0].mxu0 %v532
          %v1303 = vpop.f32.mrb[0].mxu0
          %v1304 = vadd.f32 %v1079, %v1303
          %v1305 = vpop.f32.mrb[0].mxu0
          %1306 = vmatprep.mubr.f32.mxu0 %v565
          %1307 = vmatmul.mubr.f32.gmra.mrb[0].mxu0 %v533
          %v1308 = vpop.f32.mrb[0].mxu0
          %v1309 = vadd.f32 %v1084, %v1308
          %v1310 = vpop.f32.mrb[0].mxu0
          %1311 = vmatprep.mubr.f32.mxu0 %v566
          %1312 = vmatmul.mubr.f32.gmra.mrb[0].mxu0 %v534
          %v1313 = vpop.f32.mrb[0].mxu0
          %v1314 = vadd.f32 %v1089, %v1313
          %v1315 = vpop.f32.mrb[0].mxu0
          %1316 = vmatprep.mubr.f32.mxu0 %v567
          %1317 = vmatmul.mubr.f32.gmra.mrb[0].mxu0 %v535
          %v1318 = vpop.f32.mrb[0].mxu0
          %v1319 = vadd.f32 %v1094, %v1318
          %v1320 = vpop.f32.mrb[0].mxu0
          %1321 = vmatprep.mubr.f32.mxu0 %v568
          %1322 = vmatmul.mubr.f32.gmra.mrb[0].mxu0 %v536
          %v1323 = vpop.f32.mrb[0].mxu0
          %v1324 = vadd.f32 %v1099, %v1323
          %v1325 = vpop.f32.mrb[0].mxu0
          %1326 = vmatprep.mubr.f32.mxu0 %v569
          %1327 = vmatmul.mubr.f32.gmra.mrb[0].mxu0 %v537
          %v1328 = vpop.f32.mrb[0].mxu0
          %v1329 = vadd.f32 %v1104, %v1328
          %v1330 = vpop.f32.mrb[0].mxu0
          %1331 = vdwg.mxu0
          %1332 = vmatprep.subr.mxu0 0.0
          %1333 = vmatpush1.msra.mxu0 %v795
          %1334 = vmatprep.subr.mxu0 0.0
          %1335 = vmatpush1.msra.mxu0 %v796
          %1336 = vmatprep.subr.mxu0 0.0
          %1337 = vmatpush1.msra.mxu0 %v797
          %1338 = vmatprep.subr.mxu0 0.0
          %1339 = vmatpush1.msra.mxu0 %v798
          %1340 = vmatprep.subr.mxu0 0.0
          %1341 = vmatpush1.msra.mxu0 %v799
          %1342 = vmatprep.subr.mxu0 0.0
          %1343 = vmatpush1.msra.mxu0 %v800
          %1344 = vmatprep.subr.mxu0 0.0
          %1345 = vmatpush1.msra.mxu0 %v801
          %1346 = vmatprep.subr.mxu0 0.0
          %1347 = vmatpush1.msra.mxu0 %v802
          %1348 = vmatprep.subr.mxu0 0.0
          %1349 = vmatpush1.msra.mxu0 %v803
          %1350 = vmatprep.subr.mxu0 0.0
          %1351 = vmatpush1.msra.mxu0 %v804
          %1352 = vmatprep.subr.mxu0 0.0
          %1353 = vmatpush1.msra.mxu0 %v805
          %1354 = vmatprep.subr.mxu0 0.0
          %1355 = vmatpush1.msra.mxu0 %v806
          %1356 = vmatprep.subr.mxu0 0.0
          %1357 = vmatpush1.msra.mxu0 %v807
          %1358 = vmatprep.subr.mxu0 0.0
          %1359 = vmatpush1.msra.mxu0 %v808
          %1360 = vmatprep.subr.mxu0 0.0
          %1361 = vmatpush1.msra.mxu0 %v809
          %1362 = vmatprep.subr.mxu0 0.0
          %1363 = vmatpush1.msra.mxu0 %v810
          %1364 = vmatprep.subr.mxu0 0.0
          %1365 = vmatpush1.msra.mxu0 %v811
          %1366 = vmatprep.subr.mxu0 0.0
          %1367 = vmatpush1.msra.mxu0 %v812
          %1368 = vmatprep.subr.mxu0 0.0
          %1369 = vmatpush1.msra.mxu0 %v813
          %1370 = vmatprep.subr.mxu0 0.0
          %1371 = vmatpush1.msra.mxu0 %v814
          %1372 = vmatprep.subr.mxu0 0.0
          %1373 = vmatpush1.msra.mxu0 %v815
          %1374 = vmatprep.subr.mxu0 0.0
          %1375 = vmatpush1.msra.mxu0 %v816
          %1376 = vmatprep.subr.mxu0 0.0
          %1377 = vmatpush1.msra.mxu0 %v817
          %1378 = vmatprep.subr.mxu0 0.0
          %1379 = vmatpush1.msra.mxu0 %v818
          %1380 = vmatprep.subr.mxu0 0.0
          %1381 = vmatpush1.msra.mxu0 %v819
          %1382 = vmatprep.subr.mxu0 0.0
          %1383 = vmatpush1.msra.mxu0 %v820
          %1384 = vmatprep.subr.mxu0 0.0
          %1385 = vmatpush1.msra.mxu0 %v821
          %1386 = vmatprep.subr.mxu0 0.0
          %1387 = vmatpush1.msra.mxu0 %v822
          %1388 = vmatprep.subr.mxu0 0.0
          %1389 = vmatpush1.msra.mxu0 %v823
          %1390 = vmatprep.subr.mxu0 0.0
          %1391 = vmatpush1.msra.mxu0 %v824
          %1392 = vmatprep.subr.mxu0 0.0
          %1393 = vmatpush1.msra.mxu0 %v825
          %1394 = vmatprep.subr.mxu0 0.0
          %1395 = vmatpush1.msra.mxu0 %v826
          %1396 = vmatprep.mubr.f32.mxu0 %v602
          %1397 = vmatmul.mubr.f32.gmra.mrb[0].mxu0 %v570
          %v1398 = vpop.f32.mrb[0].mxu0
          %v1399 = vadd.f32 %v1174, %v1398
          %v1400 = vpop.f32.mrb[0].mxu0
          %1401 = vmatprep.mubr.f32.mxu0 %v603
          %1402 = vmatmul.mubr.f32.gmra.mrb[0].mxu0 %v571
          %v1403 = vpop.f32.mrb[0].mxu0
          %v1404 = vadd.f32 %v1179, %v1403
          %v1405 = vpop.f32.mrb[0].mxu0
          %1406 = vmatprep.mubr.f32.mxu0 %v604
          %1407 = vmatmul.mubr.f32.gmra.mrb[0].mxu0 %v572
          %v1408 = vpop.f32.mrb[0].mxu0
          %v1409 = vadd.f32 %v1184, %v1408
          %v1410 = vpop.f32.mrb[0].mxu0
          %1411 = vmatprep.mubr.f32.mxu0 %v605
          %1412 = vmatmul.mubr.f32.gmra.mrb[0].mxu0 %v573
          %v1413 = vpop.f32.mrb[0].mxu0
          %v1414 = vadd.f32 %v1189, %v1413
          %v1415 = vpop.f32.mrb[0].mxu0
          %1416 = vmatprep.mubr.f32.mxu0 %v606
          %1417 = vmatmul.mubr.f32.gmra.mrb[0].mxu0 %v574
          %v1418 = vpop.f32.mrb[0].mxu0
          %v1419 = vadd.f32 %v1194, %v1418
          %v1420 = vpop.f32.mrb[0].mxu0
          %1421 = vmatprep.mubr.f32.mxu0 %v607
          %1422 = vmatmul.mubr.f32.gmra.mrb[0].mxu0 %v575
          %v1423 = vpop.f32.mrb[0].mxu0
          %v1424 = vadd.f32 %v1199, %v1423
          %v1425 = vpop.f32.mrb[0].mxu0
          %1426 = vmatprep.mubr.f32.mxu0 %v608
          %1427 = vmatmul.mubr.f32.gmra.mrb[0].mxu0 %v576
          %v1428 = vpop.f32.mrb[0].mxu0
          %v1429 = vadd.f32 %v1204, %v1428
          %v1430 = vpop.f32.mrb[0].mxu0
          %1431 = vmatprep.mubr.f32.mxu0 %v609
          %1432 = vmatmul.mubr.f32.gmra.mrb[0].mxu0 %v577
          %v1433 = vpop.f32.mrb[0].mxu0
          %v1434 = vadd.f32 %v1209, %v1433
          %v1435 = vpop.f32.mrb[0].mxu0
          %1436 = vmatprep.mubr.f32.mxu0 %v610
          %1437 = vmatmul.mubr.f32.gmra.mrb[0].mxu0 %v578
          %v1438 = vpop.f32.mrb[0].mxu0
          %v1439 = vadd.f32 %v1214, %v1438
          %v1440 = vpop.f32.mrb[0].mxu0
          %1441 = vmatprep.mubr.f32.mxu0 %v611
          %1442 = vmatmul.mubr.f32.gmra.mrb[0].mxu0 %v579
          %v1443 = vpop.f32.mrb[0].mxu0
          %v1444 = vadd.f32 %v1219, %v1443
          %v1445 = vpop.f32.mrb[0].mxu0
          %1446 = vmatprep.mubr.f32.mxu0 %v612
          %1447 = vmatmul.mubr.f32.gmra.mrb[0].mxu0 %v580
          %v1448 = vpop.f32.mrb[0].mxu0
          %v1449 = vadd.f32 %v1224, %v1448
          %v1450 = vpop.f32.mrb[0].mxu0
          %1451 = vmatprep.mubr.f32.mxu0 %v613
          %1452 = vmatmul.mubr.f32.gmra.mrb[0].mxu0 %v581
          %v1453 = vpop.f32.mrb[0].mxu0
          %v1454 = vadd.f32 %v1229, %v1453
          %v1455 = vpop.f32.mrb[0].mxu0
          %1456 = vmatprep.mubr.f32.mxu0 %v614
          %1457 = vmatmul.mubr.f32.gmra.mrb[0].mxu0 %v582
          %v1458 = vpop.f32.mrb[0].mxu0
          %v1459 = vadd.f32 %v1234, %v1458
          %v1460 = vpop.f32.mrb[0].mxu0
          %1461 = vmatprep.mubr.f32.mxu0 %v615
          %1462 = vmatmul.mubr.f32.gmra.mrb[0].mxu0 %v583
          %v1463 = vpop.f32.mrb[0].mxu0
          %v1464 = vadd.f32 %v1239, %v1463
          %v1465 = vpop.f32.mrb[0].mxu0
          %1466 = vmatprep.mubr.f32.mxu0 %v616
          %1467 = vmatmul.mubr.f32.gmra.mrb[0].mxu0 %v584
          %v1468 = vpop.f32.mrb[0].mxu0
          %v1469 = vadd.f32 %v1244, %v1468
          %v1470 = vpop.f32.mrb[0].mxu0
          %1471 = vmatprep.mubr.f32.mxu0 %v617
          %1472 = vmatmul.mubr.f32.gmra.mrb[0].mxu0 %v585
          %v1473 = vpop.f32.mrb[0].mxu0
          %v1474 = vadd.f32 %v1249, %v1473
          %v1475 = vpop.f32.mrb[0].mxu0
          %1476 = vmatprep.mubr.f32.mxu0 %v618
          %1477 = vmatmul.mubr.f32.gmra.mrb[0].mxu0 %v586
          %v1478 = vpop.f32.mrb[0].mxu0
          %v1479 = vadd.f32 %v1254, %v1478
          %v1480 = vpop.f32.mrb[0].mxu0
          %1481 = vmatprep.mubr.f32.mxu0 %v619
          %1482 = vmatmul.mubr.f32.gmra.mrb[0].mxu0 %v587
          %v1483 = vpop.f32.mrb[0].mxu0
          %v1484 = vadd.f32 %v1259, %v1483
          %v1485 = vpop.f32.mrb[0].mxu0
          %1486 = vmatprep.mubr.f32.mxu0 %v620
          %1487 = vmatmul.mubr.f32.gmra.mrb[0].mxu0 %v588
          %v1488 = vpop.f32.mrb[0].mxu0
          %v1489 = vadd.f32 %v1264, %v1488
          %v1490 = vpop.f32.mrb[0].mxu0
          %1491 = vmatprep.mubr.f32.mxu0 %v621
          %1492 = vmatmul.mubr.f32.gmra.mrb[0].mxu0 %v589
          %v1493 = vpop.f32.mrb[0].mxu0
          %v1494 = vadd.f32 %v1269, %v1493
          %v1495 = vpop.f32.mrb[0].mxu0
          %1496 = vmatprep.mubr.f32.mxu0 %v622
          %1497 = vmatmul.mubr.f32.gmra.mrb[0].mxu0 %v590
          %v1498 = vpop.f32.mrb[0].mxu0
          %v1499 = vadd.f32 %v1274, %v1498
          %v1500 = vpop.f32.mrb[0].mxu0
          %1501 = vmatprep.mubr.f32.mxu0 %v623
          %1502 = vmatmul.mubr.f32.gmra.mrb[0].mxu0 %v591
          %v1503 = vpop.f32.mrb[0].mxu0
          %v1504 = vadd.f32 %v1279, %v1503
          %v1505 = vpop.f32.mrb[0].mxu0
          %1506 = vmatprep.mubr.f32.mxu0 %v624
          %1507 = vmatmul.mubr.f32.gmra.mrb[0].mxu0 %v592
          %v1508 = vpop.f32.mrb[0].mxu0
          %v1509 = vadd.f32 %v1284, %v1508
          %v1510 = vpop.f32.mrb[0].mxu0
          %1511 = vmatprep.mubr.f32.mxu0 %v625
          %1512 = vmatmul.mubr.f32.gmra.mrb[0].mxu0 %v593
          %v1513 = vpop.f32.mrb[0].mxu0
          %v1514 = vadd.f32 %v1289, %v1513
          %v1515 = vpop.f32.mrb[0].mxu0
          %1516 = vmatprep.mubr.f32.mxu0 %v626
          %1517 = vmatmul.mubr.f32.gmra.mrb[0].mxu0 %v594
          %v1518 = vpop.f32.mrb[0].mxu0
          %v1519 = vadd.f32 %v1294, %v1518
          %v1520 = vpop.f32.mrb[0].mxu0
          %1521 = vmatprep.mubr.f32.mxu0 %v627
          %1522 = vmatmul.mubr.f32.gmra.mrb[0].mxu0 %v595
          %v1523 = vpop.f32.mrb[0].mxu0
          %v1524 = vadd.f32 %v1299, %v1523
          %v1525 = vpop.f32.mrb[0].mxu0
          %1526 = vmatprep.mubr.f32.mxu0 %v628
          %1527 = vmatmul.mubr.f32.gmra.mrb[0].mxu0 %v596
          %v1528 = vpop.f32.mrb[0].mxu0
          %v1529 = vadd.f32 %v1304, %v1528
          %v1530 = vpop.f32.mrb[0].mxu0
          %1531 = vmatprep.mubr.f32.mxu0 %v629
          %1532 = vmatmul.mubr.f32.gmra.mrb[0].mxu0 %v597
          %v1533 = vpop.f32.mrb[0].mxu0
          %v1534 = vadd.f32 %v1309, %v1533
          %v1535 = vpop.f32.mrb[0].mxu0
          %1536 = vmatprep.mubr.f32.mxu0 %v630
          %1537 = vmatmul.mubr.f32.gmra.mrb[0].mxu0 %v598
          %v1538 = vpop.f32.mrb[0].mxu0
          %v1539 = vadd.f32 %v1314, %v1538
          %v1540 = vpop.f32.mrb[0].mxu0
          %1541 = vmatprep.mubr.f32.mxu0 %v631
          %1542 = vmatmul.mubr.f32.gmra.mrb[0].mxu0 %v599
          %v1543 = vpop.f32.mrb[0].mxu0
          %v1544 = vadd.f32 %v1319, %v1543
          %v1545 = vpop.f32.mrb[0].mxu0
          %1546 = vmatprep.mubr.f32.mxu0 %v632
          %1547 = vmatmul.mubr.f32.gmra.mrb[0].mxu0 %v600
          %v1548 = vpop.f32.mrb[0].mxu0
          %v1549 = vadd.f32 %v1324, %v1548
          %v1550 = vpop.f32.mrb[0].mxu0
          %1551 = vmatprep.mubr.f32.mxu0 %v633
          %1552 = vmatmul.mubr.f32.gmra.mrb[0].mxu0 %v601
          %v1553 = vpop.f32.mrb[0].mxu0
          %v1554 = vadd.f32 %v1329, %v1553
          %v1555 = vpop.f32.mrb[0].mxu0
          %1556 = vdwg.mxu0
          %1557 = vmatprep.subr.mxu0 0.0
          %1558 = vmatpush1.msra.mxu0 %v827
          %1559 = vmatprep.subr.mxu0 0.0
          %1560 = vmatpush1.msra.mxu0 %v828
          %1561 = vmatprep.subr.mxu0 0.0
          %1562 = vmatpush1.msra.mxu0 %v829
          %1563 = vmatprep.subr.mxu0 0.0
          %1564 = vmatpush1.msra.mxu0 %v830
          %1565 = vmatprep.subr.mxu0 0.0
          %1566 = vmatpush1.msra.mxu0 %v831
          %1567 = vmatprep.subr.mxu0 0.0
          %1568 = vmatpush1.msra.mxu0 %v832
          %1569 = vmatprep.subr.mxu0 0.0
          %1570 = vmatpush1.msra.mxu0 %v833
          %1571 = vmatprep.subr.mxu0 0.0
          %1572 = vmatpush1.msra.mxu0 %v834
          %1573 = vmatprep.subr.mxu0 0.0
          %1574 = vmatpush1.msra.mxu0 %v835
          %1575 = vmatprep.subr.mxu0 0.0
          %1576 = vmatpush1.msra.mxu0 %v836
          %1577 = vmatprep.subr.mxu0 0.0
          %1578 = vmatpush1.msra.mxu0 %v837
          %1579 = vmatprep.subr.mxu0 0.0
          %1580 = vmatpush1.msra.mxu0 %v838
          %1581 = vmatprep.subr.mxu0 0.0
          %1582 = vmatpush1.msra.mxu0 %v839
          %1583 = vmatprep.subr.mxu0 0.0
          %1584 = vmatpush1.msra.mxu0 %v840
          %1585 = vmatprep.subr.mxu0 0.0
          %1586 = vmatpush1.msra.mxu0 %v841
          %1587 = vmatprep.subr.mxu0 0.0
          %1588 = vmatpush1.msra.mxu0 %v842
          %1589 = vmatprep.subr.mxu0 0.0
          %1590 = vmatpush1.msra.mxu0 %v843
          %1591 = vmatprep.subr.mxu0 0.0
          %1592 = vmatpush1.msra.mxu0 %v844
          %1593 = vmatprep.subr.mxu0 0.0
          %1594 = vmatpush1.msra.mxu0 %v845
          %1595 = vmatprep.subr.mxu0 0.0
          %1596 = vmatpush1.msra.mxu0 %v846
          %1597 = vmatprep.subr.mxu0 0.0
          %1598 = vmatpush1.msra.mxu0 %v847
          %1599 = vmatprep.subr.mxu0 0.0
          %1600 = vmatpush1.msra.mxu0 %v848
          %1601 = vmatprep.subr.mxu0 0.0
          %1602 = vmatpush1.msra.mxu0 %v849
          %1603 = vmatprep.subr.mxu0 0.0
          %1604 = vmatpush1.msra.mxu0 %v850
          %1605 = vmatprep.subr.mxu0 0.0
          %1606 = vmatpush1.msra.mxu0 %v851
          %1607 = vmatprep.subr.mxu0 0.0
          %1608 = vmatpush1.msra.mxu0 %v852
          %1609 = vmatprep.subr.mxu0 0.0
          %1610 = vmatpush1.msra.mxu0 %v853
          %1611 = vmatprep.subr.mxu0 0.0
          %1612 = vmatpush1.msra.mxu0 %v854
          %1613 = vmatprep.subr.mxu0 0.0
          %1614 = vmatpush1.msra.mxu0 %v855
          %1615 = vmatprep.subr.mxu0 0.0
          %1616 = vmatpush1.msra.mxu0 %v856
          %1617 = vmatprep.subr.mxu0 0.0
          %1618 = vmatpush1.msra.mxu0 %v857
          %1619 = vmatprep.subr.mxu0 0.0
          %1620 = vmatpush1.msra.mxu0 %v858
          %1621 = vmatprep.mubr.f32.mxu0 %v667
          %1622 = vmatmul.mubr.f32.gmra.mrb[0].mxu0 %v635
          %v1623 = vpop.f32.mrb[0].mxu0
          %v1624 = vadd.f32 %v1399, %v1623
          %v1625 = vpop.f32.mrb[0].mxu0
          %1626 = vmatprep.mubr.f32.mxu0 %v668
          %1627 = vmatmul.mubr.f32.gmra.mrb[0].mxu0 %v636
          %v1628 = vpop.f32.mrb[0].mxu0
          %v1629 = vadd.f32 %v1404, %v1628
          %v1630 = vpop.f32.mrb[0].mxu0
          %1631 = vmatprep.mubr.f32.mxu0 %v669
          %1632 = vmatmul.mubr.f32.gmra.mrb[0].mxu0 %v637
          %v1633 = vpop.f32.mrb[0].mxu0
          %v1634 = vadd.f32 %v1409, %v1633
          %v1635 = vpop.f32.mrb[0].mxu0
          %1636 = vmatprep.mubr.f32.mxu0 %v670
          %1637 = vmatmul.mubr.f32.gmra.mrb[0].mxu0 %v638
          %v1638 = vpop.f32.mrb[0].mxu0
          %v1639 = vadd.f32 %v1414, %v1638
          %v1640 = vpop.f32.mrb[0].mxu0
          %1641 = vmatprep.mubr.f32.mxu0 %v671
          %1642 = vmatmul.mubr.f32.gmra.mrb[0].mxu0 %v639
          %v1643 = vpop.f32.mrb[0].mxu0
          %v1644 = vadd.f32 %v1419, %v1643
          %v1645 = vpop.f32.mrb[0].mxu0
          %1646 = vmatprep.mubr.f32.mxu0 %v672
          %1647 = vmatmul.mubr.f32.gmra.mrb[0].mxu0 %v640
          %v1648 = vpop.f32.mrb[0].mxu0
          %v1649 = vadd.f32 %v1424, %v1648
          %v1650 = vpop.f32.mrb[0].mxu0
          %1651 = vmatprep.mubr.f32.mxu0 %v673
          %1652 = vmatmul.mubr.f32.gmra.mrb[0].mxu0 %v641
          %v1653 = vpop.f32.mrb[0].mxu0
          %v1654 = vadd.f32 %v1429, %v1653
          %v1655 = vpop.f32.mrb[0].mxu0
          %1656 = vmatprep.mubr.f32.mxu0 %v674
          %1657 = vmatmul.mubr.f32.gmra.mrb[0].mxu0 %v642
          %v1658 = vpop.f32.mrb[0].mxu0
          %v1659 = vadd.f32 %v1434, %v1658
          %v1660 = vpop.f32.mrb[0].mxu0
          %1661 = vmatprep.mubr.f32.mxu0 %v675
          %1662 = vmatmul.mubr.f32.gmra.mrb[0].mxu0 %v643
          %v1663 = vpop.f32.mrb[0].mxu0
          %v1664 = vadd.f32 %v1439, %v1663
          %v1665 = vpop.f32.mrb[0].mxu0
          %1666 = vmatprep.mubr.f32.mxu0 %v676
          %1667 = vmatmul.mubr.f32.gmra.mrb[0].mxu0 %v644
          %v1668 = vpop.f32.mrb[0].mxu0
          %v1669 = vadd.f32 %v1444, %v1668
          %v1670 = vpop.f32.mrb[0].mxu0
          %1671 = vmatprep.mubr.f32.mxu0 %v677
          %1672 = vmatmul.mubr.f32.gmra.mrb[0].mxu0 %v645
          %v1673 = vpop.f32.mrb[0].mxu0
          %v1674 = vadd.f32 %v1449, %v1673
          %v1675 = vpop.f32.mrb[0].mxu0
          %1676 = vmatprep.mubr.f32.mxu0 %v678
          %1677 = vmatmul.mubr.f32.gmra.mrb[0].mxu0 %v646
          %v1678 = vpop.f32.mrb[0].mxu0
          %v1679 = vadd.f32 %v1454, %v1678
          %v1680 = vpop.f32.mrb[0].mxu0
          %1681 = vmatprep.mubr.f32.mxu0 %v679
          %1682 = vmatmul.mubr.f32.gmra.mrb[0].mxu0 %v647
          %v1683 = vpop.f32.mrb[0].mxu0
          %v1684 = vadd.f32 %v1459, %v1683
          %v1685 = vpop.f32.mrb[0].mxu0
          %1686 = vmatprep.mubr.f32.mxu0 %v680
          %1687 = vmatmul.mubr.f32.gmra.mrb[0].mxu0 %v648
          %v1688 = vpop.f32.mrb[0].mxu0
          %v1689 = vadd.f32 %v1464, %v1688
          %v1690 = vpop.f32.mrb[0].mxu0
          %1691 = vmatprep.mubr.f32.mxu0 %v681
          %1692 = vmatmul.mubr.f32.gmra.mrb[0].mxu0 %v649
          %v1693 = vpop.f32.mrb[0].mxu0
          %v1694 = vadd.f32 %v1469, %v1693
          %v1695 = vpop.f32.mrb[0].mxu0
          %1696 = vmatprep.mubr.f32.mxu0 %v682
          %1697 = vmatmul.mubr.f32.gmra.mrb[0].mxu0 %v650
          %v1698 = vpop.f32.mrb[0].mxu0
          %v1699 = vadd.f32 %v1474, %v1698
          %v1700 = vpop.f32.mrb[0].mxu0
          %1701 = vmatprep.mubr.f32.mxu0 %v683
          %1702 = vmatmul.mubr.f32.gmra.mrb[0].mxu0 %v651
          %v1703 = vpop.f32.mrb[0].mxu0
          %v1704 = vadd.f32 %v1479, %v1703
          %v1705 = vpop.f32.mrb[0].mxu0
          %1706 = vmatprep.mubr.f32.mxu0 %v684
          %1707 = vmatmul.mubr.f32.gmra.mrb[0].mxu0 %v652
          %v1708 = vpop.f32.mrb[0].mxu0
          %v1709 = vadd.f32 %v1484, %v1708
          %v1710 = vpop.f32.mrb[0].mxu0
          %1711 = vmatprep.mubr.f32.mxu0 %v685
          %1712 = vmatmul.mubr.f32.gmra.mrb[0].mxu0 %v653
          %v1713 = vpop.f32.mrb[0].mxu0
          %v1714 = vadd.f32 %v1489, %v1713
          %v1715 = vpop.f32.mrb[0].mxu0
          %1716 = vmatprep.mubr.f32.mxu0 %v686
          %1717 = vmatmul.mubr.f32.gmra.mrb[0].mxu0 %v654
          %v1718 = vpop.f32.mrb[0].mxu0
          %v1719 = vadd.f32 %v1494, %v1718
          %v1720 = vpop.f32.mrb[0].mxu0
          %1721 = vmatprep.mubr.f32.mxu0 %v687
          %1722 = vmatmul.mubr.f32.gmra.mrb[0].mxu0 %v655
          %v1723 = vpop.f32.mrb[0].mxu0
          %v1724 = vadd.f32 %v1499, %v1723
          %v1725 = vpop.f32.mrb[0].mxu0
          %1726 = vmatprep.mubr.f32.mxu0 %v688
          %1727 = vmatmul.mubr.f32.gmra.mrb[0].mxu0 %v656
          %v1728 = vpop.f32.mrb[0].mxu0
          %v1729 = vadd.f32 %v1504, %v1728
          %v1730 = vpop.f32.mrb[0].mxu0
          %1731 = vmatprep.mubr.f32.mxu0 %v689
          %1732 = vmatmul.mubr.f32.gmra.mrb[0].mxu0 %v657
          %v1733 = vpop.f32.mrb[0].mxu0
          %v1734 = vadd.f32 %v1509, %v1733
          %v1735 = vpop.f32.mrb[0].mxu0
          %1736 = vmatprep.mubr.f32.mxu0 %v690
          %1737 = vmatmul.mubr.f32.gmra.mrb[0].mxu0 %v658
          %v1738 = vpop.f32.mrb[0].mxu0
          %v1739 = vadd.f32 %v1514, %v1738
          %v1740 = vpop.f32.mrb[0].mxu0
          %1741 = vmatprep.mubr.f32.mxu0 %v691
          %1742 = vmatmul.mubr.f32.gmra.mrb[0].mxu0 %v659
          %v1743 = vpop.f32.mrb[0].mxu0
          %v1744 = vadd.f32 %v1519, %v1743
          %v1745 = vpop.f32.mrb[0].mxu0
          %1746 = vmatprep.mubr.f32.mxu0 %v692
          %1747 = vmatmul.mubr.f32.gmra.mrb[0].mxu0 %v660
          %v1748 = vpop.f32.mrb[0].mxu0
          %v1749 = vadd.f32 %v1524, %v1748
          %v1750 = vpop.f32.mrb[0].mxu0
          %1751 = vmatprep.mubr.f32.mxu0 %v693
          %1752 = vmatmul.mubr.f32.gmra.mrb[0].mxu0 %v661
          %v1753 = vpop.f32.mrb[0].mxu0
          %v1754 = vadd.f32 %v1529, %v1753
          %v1755 = vpop.f32.mrb[0].mxu0
          %1756 = vmatprep.mubr.f32.mxu0 %v694
          %1757 = vmatmul.mubr.f32.gmra.mrb[0].mxu0 %v662
          %v1758 = vpop.f32.mrb[0].mxu0
          %v1759 = vadd.f32 %v1534, %v1758
          %v1760 = vpop.f32.mrb[0].mxu0
          %1761 = vmatprep.mubr.f32.mxu0 %v695
          %1762 = vmatmul.mubr.f32.gmra.mrb[0].mxu0 %v663
          %v1763 = vpop.f32.mrb[0].mxu0
          %v1764 = vadd.f32 %v1539, %v1763
          %v1765 = vpop.f32.mrb[0].mxu0
          %1766 = vmatprep.mubr.f32.mxu0 %v696
          %1767 = vmatmul.mubr.f32.gmra.mrb[0].mxu0 %v664
          %v1768 = vpop.f32.mrb[0].mxu0
          %v1769 = vadd.f32 %v1544, %v1768
          %v1770 = vpop.f32.mrb[0].mxu0
          %1771 = vmatprep.mubr.f32.mxu0 %v697
          %1772 = vmatmul.mubr.f32.gmra.mrb[0].mxu0 %v665
          %v1773 = vpop.f32.mrb[0].mxu0
          %v1774 = vadd.f32 %v1549, %v1773
          %v1775 = vpop.f32.mrb[0].mxu0
          %1776 = vmatprep.mubr.f32.mxu0 %v698
          %1777 = vmatmul.mubr.f32.gmra.mrb[0].mxu0 %v666
          %v1778 = vpop.f32.mrb[0].mxu0
          %v1779 = vadd.f32 %v1554, %v1778
          %v1780 = vpop.f32.mrb[0].mxu0
          %1781 = vdwg.mxu0
          %1782 = vmatprep.subr.mxu0 0.0
          %1783 = vmatpush1.msra.mxu0 %v859
          %1784 = vmatprep.subr.mxu0 0.0
          %1785 = vmatpush1.msra.mxu0 %v860
          %1786 = vmatprep.subr.mxu0 0.0
          %1787 = vmatpush1.msra.mxu0 %v861
          %1788 = vmatprep.subr.mxu0 0.0
          %1789 = vmatpush1.msra.mxu0 %v862
          %1790 = vmatprep.subr.mxu0 0.0
          %1791 = vmatpush1.msra.mxu0 %v863
          %1792 = vmatprep.subr.mxu0 0.0
          %1793 = vmatpush1.msra.mxu0 %v864
          %1794 = vmatprep.subr.mxu0 0.0
          %1795 = vmatpush1.msra.mxu0 %v865
          %1796 = vmatprep.subr.mxu0 0.0
          %1797 = vmatpush1.msra.mxu0 %v866
          %1798 = vmatprep.subr.mxu0 0.0
          %1799 = vmatpush1.msra.mxu0 %v867
          %1800 = vmatprep.subr.mxu0 0.0
          %1801 = vmatpush1.msra.mxu0 %v868
          %1802 = vmatprep.subr.mxu0 0.0
          %1803 = vmatpush1.msra.mxu0 %v869
          %1804 = vmatprep.subr.mxu0 0.0
          %1805 = vmatpush1.msra.mxu0 %v870
          %1806 = vmatprep.subr.mxu0 0.0
          %1807 = vmatpush1.msra.mxu0 %v871
          %1808 = vmatprep.subr.mxu0 0.0
          %1809 = vmatpush1.msra.mxu0 %v872
          %1810 = vmatprep.subr.mxu0 0.0
          %1811 = vmatpush1.msra.mxu0 %v873
          %1812 = vmatprep.subr.mxu0 0.0
          %1813 = vmatpush1.msra.mxu0 %v874
          %1814 = vmatprep.subr.mxu0 0.0
          %1815 = vmatpush1.msra.mxu0 0.0
          %1816 = vmatprep.subr.mxu0 0.0
          %1817 = vmatpush1.msra.mxu0 0.0
          %1818 = vmatprep.subr.mxu0 0.0
          %1819 = vmatpush1.msra.mxu0 0.0
          %1820 = vmatprep.subr.mxu0 0.0
          %1821 = vmatpush1.msra.mxu0 0.0
          %1822 = vmatprep.subr.mxu0 0.0
          %1823 = vmatpush1.msra.mxu0 0.0
          %1824 = vmatprep.subr.mxu0 0.0
          %1825 = vmatpush1.msra.mxu0 0.0
          %1826 = vmatprep.subr.mxu0 0.0
          %1827 = vmatpush1.msra.mxu0 0.0
          %1828 = vmatprep.subr.mxu0 0.0
          %1829 = vmatpush1.msra.mxu0 0.0
          %1830 = vmatprep.subr.mxu0 0.0
          %1831 = vmatpush1.msra.mxu0 0.0
          %1832 = vmatprep.subr.mxu0 0.0
          %1833 = vmatpush1.msra.mxu0 0.0
          %1834 = vmatprep.subr.mxu0 0.0
          %1835 = vmatpush1.msra.mxu0 0.0
          %1836 = vmatprep.subr.mxu0 0.0
          %1837 = vmatpush1.msra.mxu0 0.0
          %1838 = vmatprep.subr.mxu0 0.0
          %1839 = vmatpush1.msra.mxu0 0.0
          %1840 = vmatprep.subr.mxu0 0.0
          %1841 = vmatpush1.msra.mxu0 0.0
          %1842 = vmatprep.subr.mxu0 0.0
          %1843 = vmatpush1.msra.mxu0 0.0
          %1844 = vmatprep.subr.mxu0 0.0
          %1845 = vmatpush1.msra.mxu0 0.0
          %1846 = vmatprep.mubr.f32.mxu0 0.0
          %1847 = vmatmul.mubr.f32.gmra.mrb[0].mxu0 %v699
          %v1848 = vpop.f32.mrb[0].mxu0
          %v1849 = vadd.f32 %v1624, %v1848
          %v1850 = vpop.f32.mrb[0].mxu0
          %1851 = vmatprep.mubr.f32.mxu0 0.0
          %1852 = vmatmul.mubr.f32.gmra.mrb[0].mxu0 %v700
          %v1853 = vpop.f32.mrb[0].mxu0
          %v1854 = vadd.f32 %v1629, %v1853
          %v1855 = vpop.f32.mrb[0].mxu0
          %1856 = vmatprep.mubr.f32.mxu0 0.0
          %1857 = vmatmul.mubr.f32.gmra.mrb[0].mxu0 %v701
          %v1858 = vpop.f32.mrb[0].mxu0
          %v1859 = vadd.f32 %v1634, %v1858
          %v1860 = vpop.f32.mrb[0].mxu0
          %1861 = vmatprep.mubr.f32.mxu0 0.0
          %1862 = vmatmul.mubr.f32.gmra.mrb[0].mxu0 %v702
          %v1863 = vpop.f32.mrb[0].mxu0
          %v1864 = vadd.f32 %v1639, %v1863
          %v1865 = vpop.f32.mrb[0].mxu0
          %1866 = vmatprep.mubr.f32.mxu0 0.0
          %1867 = vmatmul.mubr.f32.gmra.mrb[0].mxu0 %v703
          %v1868 = vpop.f32.mrb[0].mxu0
          %v1869 = vadd.f32 %v1644, %v1868
          %v1870 = vpop.f32.mrb[0].mxu0
          %1871 = vmatprep.mubr.f32.mxu0 0.0
          %1872 = vmatmul.mubr.f32.gmra.mrb[0].mxu0 %v704
          %v1873 = vpop.f32.mrb[0].mxu0
          %v1874 = vadd.f32 %v1649, %v1873
          %v1875 = vpop.f32.mrb[0].mxu0
          %1876 = vmatprep.mubr.f32.mxu0 0.0
          %1877 = vmatmul.mubr.f32.gmra.mrb[0].mxu0 %v705
          %v1878 = vpop.f32.mrb[0].mxu0
          %v1879 = vadd.f32 %v1654, %v1878
          %v1880 = vpop.f32.mrb[0].mxu0
          %1881 = vmatprep.mubr.f32.mxu0 0.0
          %1882 = vmatmul.mubr.f32.gmra.mrb[0].mxu0 %v706
          %v1883 = vpop.f32.mrb[0].mxu0
          %v1884 = vadd.f32 %v1659, %v1883
          %v1885 = vpop.f32.mrb[0].mxu0
          %1886 = vmatprep.mubr.f32.mxu0 0.0
          %1887 = vmatmul.mubr.f32.gmra.mrb[0].mxu0 %v707
          %v1888 = vpop.f32.mrb[0].mxu0
          %v1889 = vadd.f32 %v1664, %v1888
          %v1890 = vpop.f32.mrb[0].mxu0
          %1891 = vmatprep.mubr.f32.mxu0 0.0
          %1892 = vmatmul.mubr.f32.gmra.mrb[0].mxu0 %v708
          %v1893 = vpop.f32.mrb[0].mxu0
          %v1894 = vadd.f32 %v1669, %v1893
          %v1895 = vpop.f32.mrb[0].mxu0
          %1896 = vmatprep.mubr.f32.mxu0 0.0
          %1897 = vmatmul.mubr.f32.gmra.mrb[0].mxu0 %v709
          %v1898 = vpop.f32.mrb[0].mxu0
          %v1899 = vadd.f32 %v1674, %v1898
          %v1900 = vpop.f32.mrb[0].mxu0
          %1901 = vmatprep.mubr.f32.mxu0 0.0
          %1902 = vmatmul.mubr.f32.gmra.mrb[0].mxu0 %v710
          %v1903 = vpop.f32.mrb[0].mxu0
          %v1904 = vadd.f32 %v1679, %v1903
          %v1905 = vpop.f32.mrb[0].mxu0
          %1906 = vmatprep.mubr.f32.mxu0 0.0
          %1907 = vmatmul.mubr.f32.gmra.mrb[0].mxu0 %v711
          %v1908 = vpop.f32.mrb[0].mxu0
          %v1909 = vadd.f32 %v1684, %v1908
          %v1910 = vpop.f32.mrb[0].mxu0
          %1911 = vmatprep.mubr.f32.mxu0 0.0
          %1912 = vmatmul.mubr.f32.gmra.mrb[0].mxu0 %v712
          %v1913 = vpop.f32.mrb[0].mxu0
          %v1914 = vadd.f32 %v1689, %v1913
          %v1915 = vpop.f32.mrb[0].mxu0
          %1916 = vmatprep.mubr.f32.mxu0 0.0
          %1917 = vmatmul.mubr.f32.gmra.mrb[0].mxu0 %v713
          %v1918 = vpop.f32.mrb[0].mxu0
          %v1919 = vadd.f32 %v1694, %v1918
          %v1920 = vpop.f32.mrb[0].mxu0
          %1921 = vmatprep.mubr.f32.mxu0 0.0
          %1922 = vmatmul.mubr.f32.gmra.mrb[0].mxu0 %v714
          %v1923 = vpop.f32.mrb[0].mxu0
          %v1924 = vadd.f32 %v1699, %v1923
          %v1925 = vpop.f32.mrb[0].mxu0
          %1926 = vmatprep.mubr.f32.mxu0 0.0
          %1927 = vmatmul.mubr.f32.gmra.mrb[0].mxu0 %v715
          %v1928 = vpop.f32.mrb[0].mxu0
          %v1929 = vadd.f32 %v1704, %v1928
          %v1930 = vpop.f32.mrb[0].mxu0
          %1931 = vmatprep.mubr.f32.mxu0 0.0
          %1932 = vmatmul.mubr.f32.gmra.mrb[0].mxu0 %v716
          %v1933 = vpop.f32.mrb[0].mxu0
          %v1934 = vadd.f32 %v1709, %v1933
          %v1935 = vpop.f32.mrb[0].mxu0
          %1936 = vmatprep.mubr.f32.mxu0 0.0
          %1937 = vmatmul.mubr.f32.gmra.mrb[0].mxu0 %v717
          %v1938 = vpop.f32.mrb[0].mxu0
          %v1939 = vadd.f32 %v1714, %v1938
          %v1940 = vpop.f32.mrb[0].mxu0
          %1941 = vmatprep.mubr.f32.mxu0 0.0
          %1942 = vmatmul.mubr.f32.gmra.mrb[0].mxu0 %v718
          %v1943 = vpop.f32.mrb[0].mxu0
          %v1944 = vadd.f32 %v1719, %v1943
          %v1945 = vpop.f32.mrb[0].mxu0
          %1946 = vmatprep.mubr.f32.mxu0 0.0
          %1947 = vmatmul.mubr.f32.gmra.mrb[0].mxu0 %v719
          %v1948 = vpop.f32.mrb[0].mxu0
          %v1949 = vadd.f32 %v1724, %v1948
          %v1950 = vpop.f32.mrb[0].mxu0
          %1951 = vmatprep.mubr.f32.mxu0 0.0
          %1952 = vmatmul.mubr.f32.gmra.mrb[0].mxu0 %v720
          %v1953 = vpop.f32.mrb[0].mxu0
          %v1954 = vadd.f32 %v1729, %v1953
          %v1955 = vpop.f32.mrb[0].mxu0
          %1956 = vmatprep.mubr.f32.mxu0 0.0
          %1957 = vmatmul.mubr.f32.gmra.mrb[0].mxu0 %v721
          %v1958 = vpop.f32.mrb[0].mxu0
          %v1959 = vadd.f32 %v1734, %v1958
          %v1960 = vpop.f32.mrb[0].mxu0
          %1961 = vmatprep.mubr.f32.mxu0 0.0
          %1962 = vmatmul.mubr.f32.gmra.mrb[0].mxu0 %v722
          %v1963 = vpop.f32.mrb[0].mxu0
          %v1964 = vadd.f32 %v1739, %v1963
          %v1965 = vpop.f32.mrb[0].mxu0
          %1966 = vmatprep.mubr.f32.mxu0 0.0
          %1967 = vmatmul.mubr.f32.gmra.mrb[0].mxu0 %v723
          %v1968 = vpop.f32.mrb[0].mxu0
          %v1969 = vadd.f32 %v1744, %v1968
          %v1970 = vpop.f32.mrb[0].mxu0
          %1971 = vmatprep.mubr.f32.mxu0 0.0
          %1972 = vmatmul.mubr.f32.gmra.mrb[0].mxu0 %v724
          %v1973 = vpop.f32.mrb[0].mxu0
          %v1974 = vadd.f32 %v1749, %v1973
          %v1975 = vpop.f32.mrb[0].mxu0
          %1976 = vmatprep.mubr.f32.mxu0 0.0
          %1977 = vmatmul.mubr.f32.gmra.mrb[0].mxu0 %v725
          %v1978 = vpop.f32.mrb[0].mxu0
          %v1979 = vadd.f32 %v1754, %v1978
          %v1980 = vpop.f32.mrb[0].mxu0
          %1981 = vmatprep.mubr.f32.mxu0 0.0
          %1982 = vmatmul.mubr.f32.gmra.mrb[0].mxu0 %v726
          %v1983 = vpop.f32.mrb[0].mxu0
          %v1984 = vadd.f32 %v1759, %v1983
          %v1985 = vpop.f32.mrb[0].mxu0
          %1986 = vmatprep.mubr.f32.mxu0 0.0
          %1987 = vmatmul.mubr.f32.gmra.mrb[0].mxu0 %v727
          %v1988 = vpop.f32.mrb[0].mxu0
          %v1989 = vadd.f32 %v1764, %v1988
          %v1990 = vpop.f32.mrb[0].mxu0
          %1991 = vmatprep.mubr.f32.mxu0 0.0
          %1992 = vmatmul.mubr.f32.gmra.mrb[0].mxu0 %v728
          %v1993 = vpop.f32.mrb[0].mxu0
          %v1994 = vadd.f32 %v1769, %v1993
          %v1995 = vpop.f32.mrb[0].mxu0
          %1996 = vmatprep.mubr.f32.mxu0 0.0
          %1997 = vmatmul.mubr.f32.gmra.mrb[0].mxu0 %v729
          %v1998 = vpop.f32.mrb[0].mxu0
          %v1999 = vadd.f32 %v1774, %v1998
          %v2000 = vpop.f32.mrb[0].mxu0
          %2001 = vmatprep.mubr.f32.mxu0 0.0
          %2002 = vmatmul.mubr.f32.gmra.mrb[0].mxu0 %v730
          %v2003 = vpop.f32.mrb[0].mxu0
          %v2004 = vadd.f32 %v1779, %v2003
          %v2005 = vpop.f32.mrb[0].mxu0
          %2006 = vdwg.mxu0
          %v2007 = vmax.f32 %v1849, 0.0
          %v2008 = vmax.f32 %v1854, 0.0
          %v2009 = vmax.f32 %v1859, 0.0
          %v2010 = vmax.f32 %v1864, 0.0
          %v2011 = vmax.f32 %v1869, 0.0
          %v2012 = vmax.f32 %v1874, 0.0
          %v2013 = vmax.f32 %v1879, 0.0
          %v2014 = vmax.f32 %v1884, 0.0
          %v2015 = vmax.f32 %v1889, 0.0
          %v2016 = vmax.f32 %v1894, 0.0
          %v2017 = vmax.f32 %v1899, 0.0
          %v2018 = vmax.f32 %v1904, 0.0
          %v2019 = vmax.f32 %v1909, 0.0
          %v2020 = vmax.f32 %v1914, 0.0
          %v2021 = vmax.f32 %v1919, 0.0
          %v2022 = vmax.f32 %v1924, 0.0
          %v2023 = vmax.f32 %v1929, 0.0
          %v2024 = vmax.f32 %v1934, 0.0
          %v2025 = vmax.f32 %v1939, 0.0
          %v2026 = vmax.f32 %v1944, 0.0
          %v2027 = vmax.f32 %v1949, 0.0
          %v2028 = vmax.f32 %v1954, 0.0
          %v2029 = vmax.f32 %v1959, 0.0
          %v2030 = vmax.f32 %v1964, 0.0
          %v2031 = vmax.f32 %v1969, 0.0
          %v2032 = vmax.f32 %v1974, 0.0
          %v2033 = vmax.f32 %v1979, 0.0
          %v2034 = vmax.f32 %v1984, 0.0
          %v2035 = vmax.f32 %v1989, 0.0
          %v2036 = vmax.f32 %v1994, 0.0
          %v2037 = vmax.f32 %v1999, 0.0
          %v2038 = vmax.f32 %v2004, 0.0
          %s2039 = scalar_lea.vmem [#allocation3], 24
          %2040 = vst [vmem:[%s2039 + $0x1] sm:$0xff] %v2007
          %2041 = vst [vmem:[%s2039 + $0x9] sm:$0xff] %v2008
          %2042 = vst [vmem:[%s2039 + $0x19] sm:$0xff] %v2009
          %2043 = vst [vmem:[%s2039 + $0x21] sm:$0xff] %v2010
          %2044 = vst [vmem:[%s2039 + $0x31] sm:$0xff] %v2011
          %2045 = vst [vmem:[%s2039 + $0x39] sm:$0xff] %v2012
          %2046 = vst [vmem:[%s2039 + $0x49] sm:$0xff] %v2013
          %2047 = vst [vmem:[%s2039 + $0x51] sm:$0xff] %v2014
          %2048 = vst [vmem:[%s2039 + $0x61] sm:$0xff] %v2015
          %2049 = vst [vmem:[%s2039 + $0x69] sm:$0xff] %v2016
          %2050 = vst [vmem:[%s2039 + $0x79] sm:$0xff] %v2017
          %2051 = vst [vmem:[%s2039 + $0x81] sm:$0xff] %v2018
          %2052 = vst [vmem:[%s2039 + $0x91] sm:$0xff] %v2019
          %2053 = vst [vmem:[%s2039 + $0x99] sm:$0xff] %v2020
          %2054 = vst [vmem:[%s2039 + $0xa9] sm:$0xff] %v2021
          %2055 = vst [vmem:[%s2039 + $0xb1] sm:$0xff] %v2022
          %2056 = vst [vmem:[%s2039 + $0xc1] sm:$0xff] %v2023
          %2057 = vst [vmem:[%s2039 + $0xc9] sm:$0xff] %v2024
          %2058 = vst [vmem:[%s2039 + $0xd9] sm:$0xff] %v2025
          %2059 = vst [vmem:[%s2039 + $0xe1] sm:$0xff] %v2026
          %2060 = vst [vmem:[%s2039 + $0xf1] sm:$0xff] %v2027
          %2061 = vst [vmem:[%s2039 + $0xf9] sm:$0xff] %v2028
          %2062 = vst [vmem:[%s2039 + $0x109] sm:$0xff] %v2029
          %2063 = vst [vmem:[%s2039 + $0x111] sm:$0xff] %v2030
          %2064 = vst [vmem:[%s2039 + $0x121] sm:$0xff] %v2031
          %2065 = vst [vmem:[%s2039 + $0x129] sm:$0xff] %v2032
          %2066 = vst [vmem:[%s2039 + $0x139] sm:$0xff] %v2033
          %2067 = vst [vmem:[%s2039 + $0x141] sm:$0xff] %v2034
          %2068 = vst [vmem:[%s2039 + $0x151] sm:$0xff] %v2035
          %2069 = vst [vmem:[%s2039 + $0x159] sm:$0xff] %v2036
          %2070 = vst [vmem:[%s2039 + $0x169] sm:$0xff] %v2037
          %2071 = vst [vmem:[%s2039 + $0x171] sm:$0xff] %v2038
        $region56: #{tpu_custom_call.1} parent=39 // pred_fallthru
          _
        %s2072 = smul.u32 %s28, 8
        %s2073 = smul.u32 %s2072, 24
        %s2074 = scalar_lea.vmem [#allocation3], %s2073
        %v2075 = vld [vmem:[%s2074] sm:$0xff]
        %v2076 = vld [vmem:[%s2074 + $0x8] sm:$0xff]
        %v2077 = vld [vmem:[%s2074 + $0x10] sm:$0x3]
        %v2078 = vld [vmem:[%s2074 + $0x18] sm:$0xff]
        %v2079 = vld [vmem:[%s2074 + $0x20] sm:$0xff]
        %v2080 = vld [vmem:[%s2074 + $0x28] sm:$0x3]
        %v2081 = vld [vmem:[%s2074 + $0x30] sm:$0xff]
        %v2082 = vld [vmem:[%s2074 + $0x38] sm:$0xff]
        %v2083 = vld [vmem:[%s2074 + $0x40] sm:$0x3]
        %v2084 = vld [vmem:[%s2074 + $0x48] sm:$0xff]
        %v2085 = vld [vmem:[%s2074 + $0x50] sm:$0xff]
        %v2086 = vld [vmem:[%s2074 + $0x58] sm:$0x3]
        %v2087 = vld [vmem:[%s2074 + $0x60] sm:$0xff]
        %v2088 = vld [vmem:[%s2074 + $0x68] sm:$0xff]
        %v2089 = vld [vmem:[%s2074 + $0x70] sm:$0x3]
        %v2090 = vld [vmem:[%s2074 + $0x78] sm:$0xff]
        %v2091 = vld [vmem:[%s2074 + $0x80] sm:$0xff]
        %v2092 = vld [vmem:[%s2074 + $0x88] sm:$0x3]
        %v2093 = vld [vmem:[%s2074 + $0x90] sm:$0xff]
        %v2094 = vld [vmem:[%s2074 + $0x98] sm:$0xff]
        %v2095 = vld [vmem:[%s2074 + $0xa0] sm:$0x3]
        %v2096 = vld [vmem:[%s2074 + $0xa8] sm:$0xff]
        %v2097 = vld [vmem:[%s2074 + $0xb0] sm:$0xff]
        %v2098 = vld [vmem:[%s2074 + $0xb8] sm:$0x3]
        %v2099 = vld [vmem:[%s2074 + $0xc0] sm:$0xff]
        %v2100 = vld [vmem:[%s2074 + $0xc8] sm:$0xff]
        %v2101 = vld [vmem:[%s2074 + $0xd0] sm:$0x3]
        %v2102 = vld [vmem:[%s2074 + $0xd8] sm:$0xff]
        %v2103 = vld [vmem:[%s2074 + $0xe0] sm:$0xff]
        %v2104 = vld [vmem:[%s2074 + $0xe8] sm:$0x3]
        %vm2129 = vcmask 1046528
        %v2130 = vrot.slane %v2075, 1
        %v2131 = vrot.slane %v2076, 1
        %v2132 = vsel %vm2129, %v2130, %v2131
        %v2133 = vrot.slane %v2077, 1
        %v2134 = vsel %vm2129, %v2131, %v2133
        %v2135 = vrot.slane %v2078, 1
        %v2136 = vrot.slane %v2079, 1
        %v2137 = vsel %vm2129, %v2135, %v2136
        %v2138 = vrot.slane %v2080, 1
        %v2139 = vsel %vm2129, %v2136, %v2138
        %v2140 = vrot.slane %v2081, 1
        %v2141 = vrot.slane %v2082, 1
        %v2142 = vsel %vm2129, %v2140, %v2141
        %v2143 = vrot.slane %v2083, 1
        %v2144 = vsel %vm2129, %v2141, %v2143
        %v2145 = vrot.slane %v2084, 1
        %v2146 = vrot.slane %v2085, 1
        %v2147 = vsel %vm2129, %v2145, %v2146
        %v2148 = vrot.slane %v2086, 1
        %v2149 = vsel %vm2129, %v2146, %v2148
        %v2150 = vrot.slane %v2087, 1
        %v2151 = vrot.slane %v2088, 1
        %v2152 = vsel %vm2129, %v2150, %v2151
        %v2153 = vrot.slane %v2089, 1
        %v2154 = vsel %vm2129, %v2151, %v2153
        %v2155 = vrot.slane %v2090, 1
        %v2156 = vrot.slane %v2091, 1
        %v2157 = vsel %vm2129, %v2155, %v2156
        %v2158 = vrot.slane %v2092, 1
        %v2159 = vsel %vm2129, %v2156, %v2158
        %v2160 = vrot.slane %v2093, 1
        %v2161 = vrot.slane %v2094, 1
        %v2162 = vsel %vm2129, %v2160, %v2161
        %v2163 = vrot.slane %v2095, 1
        %v2164 = vsel %vm2129, %v2161, %v2163
        %v2165 = vrot.slane %v2096, 1
        %v2166 = vrot.slane %v2097, 1
        %v2167 = vsel %vm2129, %v2165, %v2166
        %v2168 = vrot.slane %v2098, 1
        %v2169 = vsel %vm2129, %v2166, %v2168
        %vm2186 = vcmask 1045504
        %v2187 = vrot.slane %v2075, 2
        %v2188 = vrot.slane %v2076, 2
        %v2189 = vsel %vm2186, %v2187, %v2188
        %v2190 = vrot.slane %v2077, 2
        %v2191 = vsel %vm2186, %v2188, %v2190
        %v2192 = vrot.slane %v2078, 2
        %v2193 = vrot.slane %v2079, 2
        %v2194 = vsel %vm2186, %v2192, %v2193
        %v2195 = vrot.slane %v2080, 2
        %v2196 = vsel %vm2186, %v2193, %v2195
        %v2197 = vrot.slane %v2081, 2
        %v2198 = vrot.slane %v2082, 2
        %v2199 = vsel %vm2186, %v2197, %v2198
        %v2200 = vrot.slane %v2083, 2
        %v2201 = vsel %vm2186, %v2198, %v2200
        %v2202 = vrot.slane %v2084, 2
        %v2203 = vrot.slane %v2085, 2
        %v2204 = vsel %vm2186, %v2202, %v2203
        %v2205 = vrot.slane %v2086, 2
        %v2206 = vsel %vm2186, %v2203, %v2205
        %v2207 = vrot.slane %v2087, 2
        %v2208 = vrot.slane %v2088, 2
        %v2209 = vsel %vm2186, %v2207, %v2208
        %v2210 = vrot.slane %v2089, 2
        %v2211 = vsel %vm2186, %v2208, %v2210
        %v2212 = vrot.slane %v2090, 2
        %v2213 = vrot.slane %v2091, 2
        %v2214 = vsel %vm2186, %v2212, %v2213
        %v2215 = vrot.slane %v2092, 2
        %v2216 = vsel %vm2186, %v2213, %v2215
        %v2217 = vrot.slane %v2093, 2
        %v2218 = vrot.slane %v2094, 2
        %v2219 = vsel %vm2186, %v2217, %v2218
        %v2220 = vrot.slane %v2095, 2
        %v2221 = vsel %vm2186, %v2218, %v2220
        %v2222 = vrot.slane %v2096, 2
        %v2223 = vrot.slane %v2097, 2
        %v2224 = vsel %vm2186, %v2222, %v2223
        %v2225 = vrot.slane %v2098, 2
        %v2226 = vsel %vm2186, %v2223, %v2225
        %v2246 = vrot.slane %v2099, 1
        %v2247 = vrot.slane %v2100, 1
        %v2248 = vsel %vm2129, %v2246, %v2247
        %v2249 = vrot.slane %v2101, 1
        %v2250 = vsel %vm2129, %v2247, %v2249
        %v2253 = vrot.slane %v2099, 2
        %v2254 = vrot.slane %v2100, 2
        %v2255 = vsel %vm2186, %v2253, %v2254
        %v2256 = vrot.slane %v2101, 2
        %v2257 = vsel %vm2186, %v2254, %v2256
        %v2263 = vrot.slane %v2102, 1
        %v2264 = vrot.slane %v2103, 1
        %v2265 = vsel %vm2129, %v2263, %v2264
        %v2266 = vrot.slane %v2104, 1
        %v2267 = vsel %vm2129, %v2264, %v2266
        %v2270 = vrot.slane %v2102, 2
        %v2271 = vrot.slane %v2103, 2
        %v2272 = vsel %vm2186, %v2270, %v2271
        %v2273 = vrot.slane %v2104, 2
        %v2274 = vsel %vm2186, %v2271, %v2273
        %v2277 = vld [vmem:[#allocation9] sm:$0xff]
        %v2278 = vld [vmem:[#allocation9 + $0x8] sm:$0xff]
        %v2279 = vld [vmem:[#allocation9 + $0x10] sm:$0xff]
        %v2280 = vld [vmem:[#allocation9 + $0x18] sm:$0xff]
        %v2281 = vld [vmem:[#allocation9 + $0x20] sm:$0xff]
        %v2282 = vld [vmem:[#allocation9 + $0x28] sm:$0xff]
        %v2283 = vld [vmem:[#allocation9 + $0x30] sm:$0xff]
        %v2284 = vld [vmem:[#allocation9 + $0x38] sm:$0xff]
        %v2285 = vld [vmem:[#allocation9 + $0x40] sm:$0xff]
        %v2286 = vld [vmem:[#allocation9 + $0x48] sm:$0xff]
        %v2287 = vld [vmem:[#allocation9 + $0x50] sm:$0xff]
        %v2288 = vld [vmem:[#allocation9 + $0x58] sm:$0xff]
        %v2289 = vld [vmem:[#allocation9 + $0x60] sm:$0xff]
        %v2290 = vld [vmem:[#allocation9 + $0x68] sm:$0xff]
        %v2291 = vld [vmem:[#allocation9 + $0x70] sm:$0xff]
        %v2292 = vld [vmem:[#allocation9 + $0x78] sm:$0xff]
        %v2293 = vld [vmem:[#allocation9 + $0x80] sm:$0xff]
        %v2294 = vld [vmem:[#allocation9 + $0x88] sm:$0xff]
        %v2295 = vld [vmem:[#allocation9 + $0x90] sm:$0xff]
        %v2296 = vld [vmem:[#allocation9 + $0x98] sm:$0xff]
        %v2297 = vld [vmem:[#allocation9 + $0xa0] sm:$0xff]
        %v2298 = vld [vmem:[#allocation9 + $0xa8] sm:$0xff]
        %v2299 = vld [vmem:[#allocation9 + $0xb0] sm:$0xff]
        %v2300 = vld [vmem:[#allocation9 + $0xb8] sm:$0xff]
        %v2301 = vld [vmem:[#allocation9 + $0xc0] sm:$0xff]
        %v2302 = vld [vmem:[#allocation9 + $0xc8] sm:$0xff]
        %v2303 = vld [vmem:[#allocation9 + $0xd0] sm:$0xff]
        %v2304 = vld [vmem:[#allocation9 + $0xd8] sm:$0xff]
        %v2305 = vld [vmem:[#allocation9 + $0xe0] sm:$0xff]
        %v2306 = vld [vmem:[#allocation9 + $0xe8] sm:$0xff]
        %v2307 = vld [vmem:[#allocation9 + $0xf0] sm:$0xff]
        %v2308 = vld [vmem:[#allocation9 + $0xf8] sm:$0xff]
        %v2309 = vld [vmem:[#allocation9 + $0x100] sm:$0xff]
        %v2310 = vld [vmem:[#allocation9 + $0x108] sm:$0xff]
        %v2311 = vld [vmem:[#allocation9 + $0x110] sm:$0xff]
        %v2312 = vld [vmem:[#allocation9 + $0x118] sm:$0xff]
        %v2313 = vld [vmem:[#allocation9 + $0x120] sm:$0xff]
        %v2314 = vld [vmem:[#allocation9 + $0x128] sm:$0xff]
        %v2315 = vld [vmem:[#allocation9 + $0x130] sm:$0xff]
        %v2316 = vld [vmem:[#allocation9 + $0x138] sm:$0xff]
        %v2317 = vld [vmem:[#allocation9 + $0x140] sm:$0xff]
        %v2318 = vld [vmem:[#allocation9 + $0x148] sm:$0xff]
        %v2319 = vld [vmem:[#allocation9 + $0x150] sm:$0xff]
        %v2320 = vld [vmem:[#allocation9 + $0x158] sm:$0xff]
        %v2321 = vld [vmem:[#allocation9 + $0x160] sm:$0xff]
        %v2322 = vld [vmem:[#allocation9 + $0x168] sm:$0xff]
        %v2323 = vld [vmem:[#allocation9 + $0x170] sm:$0xff]
        %v2324 = vld [vmem:[#allocation9 + $0x178] sm:$0xff]
        %v2325 = vld [vmem:[#allocation9 + $0x180] sm:$0xff]
        %v2326 = vld [vmem:[#allocation9 + $0x188] sm:$0xff]
        %v2327 = vld [vmem:[#allocation9 + $0x190] sm:$0xff]
        %v2328 = vld [vmem:[#allocation9 + $0x198] sm:$0xff]
        %v2329 = vld [vmem:[#allocation9 + $0x1a0] sm:$0xff]
        %v2330 = vld [vmem:[#allocation9 + $0x1a8] sm:$0xff]
        %v2331 = vld [vmem:[#allocation9 + $0x1b0] sm:$0xff]
        %v2332 = vld [vmem:[#allocation9 + $0x1b8] sm:$0xff]
        %v2333 = vld [vmem:[#allocation9 + $0x1c0] sm:$0xff]
        %v2334 = vld [vmem:[#allocation9 + $0x1c8] sm:$0xff]
        %v2335 = vld [vmem:[#allocation9 + $0x1d0] sm:$0xff]
        %v2336 = vld [vmem:[#allocation9 + $0x1d8] sm:$0xff]
        %v2337 = vld [vmem:[#allocation9 + $0x1e0] sm:$0xff]
        %v2338 = vld [vmem:[#allocation9 + $0x1e8] sm:$0xff]
        %v2339 = vld [vmem:[#allocation9 + $0x1f0] sm:$0xff]
        %v2340 = vld [vmem:[#allocation9 + $0x1f8] sm:$0xff]
        %v2341 = vld [vmem:[#allocation9 + $0x200] sm:$0xff]
        %v2342 = vld [vmem:[#allocation9 + $0x208] sm:$0xff]
        %v2343 = vld [vmem:[#allocation9 + $0x210] sm:$0xff]
        %v2344 = vld [vmem:[#allocation9 + $0x218] sm:$0xff]
        %v2345 = vld [vmem:[#allocation9 + $0x220] sm:$0xff]
        %v2346 = vld [vmem:[#allocation9 + $0x228] sm:$0xff]
        %v2347 = vld [vmem:[#allocation9 + $0x230] sm:$0xff]
        %v2348 = vld [vmem:[#allocation9 + $0x238] sm:$0xff]
        %v2349 = vld [vmem:[#allocation9 + $0x240] sm:$0xff]
        %v2350 = vld [vmem:[#allocation9 + $0x248] sm:$0xff]
        %v2351 = vld [vmem:[#allocation9 + $0x250] sm:$0xff]
        %v2352 = vld [vmem:[#allocation9 + $0x258] sm:$0xff]
        %v2353 = vld [vmem:[#allocation9 + $0x260] sm:$0xff]
        %v2354 = vld [vmem:[#allocation9 + $0x268] sm:$0xff]
        %v2355 = vld [vmem:[#allocation9 + $0x270] sm:$0xff]
        %v2356 = vld [vmem:[#allocation9 + $0x278] sm:$0xff]
        %v2357 = vld [vmem:[#allocation9 + $0x280] sm:$0xff]
        %v2358 = vld [vmem:[#allocation9 + $0x288] sm:$0xff]
        %v2359 = vld [vmem:[#allocation9 + $0x290] sm:$0xff]
        %v2360 = vld [vmem:[#allocation9 + $0x298] sm:$0xff]
        %v2361 = vld [vmem:[#allocation9 + $0x2a0] sm:$0xff]
        %v2362 = vld [vmem:[#allocation9 + $0x2a8] sm:$0xff]
        %v2363 = vld [vmem:[#allocation9 + $0x2b0] sm:$0xff]
        %v2364 = vld [vmem:[#allocation9 + $0x2b8] sm:$0xff]
        %v2365 = vld [vmem:[#allocation9 + $0x2c0] sm:$0xff]
        %v2366 = vld [vmem:[#allocation9 + $0x2c8] sm:$0xff]
        %v2367 = vld [vmem:[#allocation9 + $0x2d0] sm:$0xff]
        %v2368 = vld [vmem:[#allocation9 + $0x2d8] sm:$0xff]
        %v2369 = vld [vmem:[#allocation9 + $0x2e0] sm:$0xff]
        %v2370 = vld [vmem:[#allocation9 + $0x2e8] sm:$0xff]
        %v2371 = vld [vmem:[#allocation9 + $0x2f0] sm:$0xff]
        %v2372 = vld [vmem:[#allocation9 + $0x2f8] sm:$0xff]
        %v2373 = vld [vmem:[#allocation9 + $0x300] sm:$0xff]
        %v2374 = vld [vmem:[#allocation9 + $0x308] sm:$0xff]
        %v2375 = vld [vmem:[#allocation9 + $0x310] sm:$0xff]
        %v2376 = vld [vmem:[#allocation9 + $0x318] sm:$0xff]
        %v2377 = vld [vmem:[#allocation9 + $0x320] sm:$0xff]
        %v2378 = vld [vmem:[#allocation9 + $0x328] sm:$0xff]
        %v2379 = vld [vmem:[#allocation9 + $0x330] sm:$0xff]
        %v2380 = vld [vmem:[#allocation9 + $0x338] sm:$0xff]
        %v2381 = vld [vmem:[#allocation9 + $0x340] sm:$0xff]
        %v2382 = vld [vmem:[#allocation9 + $0x348] sm:$0xff]
        %v2383 = vld [vmem:[#allocation9 + $0x350] sm:$0xff]
        %v2384 = vld [vmem:[#allocation9 + $0x358] sm:$0xff]
        %v2385 = vld [vmem:[#allocation9 + $0x360] sm:$0xff]
        %v2386 = vld [vmem:[#allocation9 + $0x368] sm:$0xff]
        %v2387 = vld [vmem:[#allocation9 + $0x370] sm:$0xff]
        %v2388 = vld [vmem:[#allocation9 + $0x378] sm:$0xff]
        %v2389 = vld [vmem:[#allocation9 + $0x380] sm:$0xff]
        %v2390 = vld [vmem:[#allocation9 + $0x388] sm:$0xff]
        %v2391 = vld [vmem:[#allocation9 + $0x390] sm:$0xff]
        %v2392 = vld [vmem:[#allocation9 + $0x398] sm:$0xff]
        %v2393 = vld [vmem:[#allocation9 + $0x3a0] sm:$0xff]
        %v2394 = vld [vmem:[#allocation9 + $0x3a8] sm:$0xff]
        %v2395 = vld [vmem:[#allocation9 + $0x3b0] sm:$0xff]
        %v2396 = vld [vmem:[#allocation9 + $0x3b8] sm:$0xff]
        %v2397 = vld [vmem:[#allocation9 + $0x3c0] sm:$0xff]
        %v2398 = vld [vmem:[#allocation9 + $0x3c8] sm:$0xff]
        %v2399 = vld [vmem:[#allocation9 + $0x3d0] sm:$0xff]
        %v2400 = vld [vmem:[#allocation9 + $0x3d8] sm:$0xff]
        %v2401 = vld [vmem:[#allocation9 + $0x3e0] sm:$0xff]
        %v2402 = vld [vmem:[#allocation9 + $0x3e8] sm:$0xff]
        %v2403 = vld [vmem:[#allocation9 + $0x3f0] sm:$0xff]
        %v2404 = vld [vmem:[#allocation9 + $0x3f8] sm:$0xff]
        %v2405 = vld [vmem:[#allocation9 + $0x400] sm:$0xff]
        %v2406 = vld [vmem:[#allocation9 + $0x408] sm:$0xff]
        %v2407 = vld [vmem:[#allocation9 + $0x410] sm:$0xff]
        %v2408 = vld [vmem:[#allocation9 + $0x418] sm:$0xff]
        %v2409 = vld [vmem:[#allocation9 + $0x420] sm:$0xff]
        %v2410 = vld [vmem:[#allocation9 + $0x428] sm:$0xff]
        %v2411 = vld [vmem:[#allocation9 + $0x430] sm:$0xff]
        %v2412 = vld [vmem:[#allocation9 + $0x438] sm:$0xff]
        %v2413 = vld [vmem:[#allocation9 + $0x440] sm:$0xff]
        %v2414 = vld [vmem:[#allocation9 + $0x448] sm:$0xff]
        %v2415 = vld [vmem:[#allocation9 + $0x450] sm:$0xff]
        %v2416 = vld [vmem:[#allocation9 + $0x458] sm:$0xff]
        %v2417 = vld [vmem:[#allocation9 + $0x460] sm:$0xff]
        %v2418 = vld [vmem:[#allocation9 + $0x468] sm:$0xff]
        %v2419 = vld [vmem:[#allocation9 + $0x470] sm:$0xff]
        %v2420 = vld [vmem:[#allocation9 + $0x478] sm:$0xff]
        %v2421 = vld [vmem:[%s4] sm:$0x1]
        %v2423 = vlaneseq
        %v2424 = vshrl.u32 %v2423, 7
        %v2425 = vsub.s32 0, %v2424
        %v2426 = vrot.slane %v2421, %v2425
        %2428 = vmatprep.subr.mxu0 0.0
        %2429 = vmatpush1.msra.mxu0 %v2277
        %2430 = vmatprep.subr.mxu0 0.0
        %2431 = vmatpush1.msra.mxu0 %v2278
        %2432 = vmatprep.subr.mxu0 0.0
        %2433 = vmatpush1.msra.mxu0 %v2279
        %2434 = vmatprep.subr.mxu0 0.0
        %2435 = vmatpush1.msra.mxu0 %v2280
        %2436 = vmatprep.subr.mxu0 0.0
        %2437 = vmatpush1.msra.mxu0 %v2281
        %2438 = vmatprep.subr.mxu0 0.0
        %2439 = vmatpush1.msra.mxu0 %v2282
        %2440 = vmatprep.subr.mxu0 0.0
        %2441 = vmatpush1.msra.mxu0 %v2283
        %2442 = vmatprep.subr.mxu0 0.0
        %2443 = vmatpush1.msra.mxu0 %v2284
        %2444 = vmatprep.subr.mxu0 0.0
        %2445 = vmatpush1.msra.mxu0 %v2285
        %2446 = vmatprep.subr.mxu0 0.0
        %2447 = vmatpush1.msra.mxu0 %v2286
        %2448 = vmatprep.subr.mxu0 0.0
        %2449 = vmatpush1.msra.mxu0 %v2287
        %2450 = vmatprep.subr.mxu0 0.0
        %2451 = vmatpush1.msra.mxu0 %v2288
        %2452 = vmatprep.subr.mxu0 0.0
        %2453 = vmatpush1.msra.mxu0 %v2289
        %2454 = vmatprep.subr.mxu0 0.0
        %2455 = vmatpush1.msra.mxu0 %v2290
        %2456 = vmatprep.subr.mxu0 0.0
        %2457 = vmatpush1.msra.mxu0 %v2291
        %2458 = vmatprep.subr.mxu0 0.0
        %2459 = vmatpush1.msra.mxu0 %v2292
        %2460 = vmatprep.subr.mxu0 0.0
        %2461 = vmatpush1.msra.mxu0 %v2293
        %2462 = vmatprep.subr.mxu0 0.0
        %2463 = vmatpush1.msra.mxu0 %v2294
        %2464 = vmatprep.subr.mxu0 0.0
        %2465 = vmatpush1.msra.mxu0 %v2295
        %2466 = vmatprep.subr.mxu0 0.0
        %2467 = vmatpush1.msra.mxu0 %v2296
        %2468 = vmatprep.subr.mxu0 0.0
        %2469 = vmatpush1.msra.mxu0 %v2297
        %2470 = vmatprep.subr.mxu0 0.0
        %2471 = vmatpush1.msra.mxu0 %v2298
        %2472 = vmatprep.subr.mxu0 0.0
        %2473 = vmatpush1.msra.mxu0 %v2299
        %2474 = vmatprep.subr.mxu0 0.0
        %2475 = vmatpush1.msra.mxu0 %v2300
        %2476 = vmatprep.subr.mxu0 0.0
        %2477 = vmatpush1.msra.mxu0 %v2301
        %2478 = vmatprep.subr.mxu0 0.0
        %2479 = vmatpush1.msra.mxu0 %v2302
        %2480 = vmatprep.subr.mxu0 0.0
        %2481 = vmatpush1.msra.mxu0 %v2303
        %2482 = vmatprep.subr.mxu0 0.0
        %2483 = vmatpush1.msra.mxu0 %v2304
        %2484 = vmatprep.subr.mxu0 0.0
        %2485 = vmatpush1.msra.mxu0 %v2305
        %2486 = vmatprep.subr.mxu0 0.0
        %2487 = vmatpush1.msra.mxu0 %v2306
        %2488 = vmatprep.subr.mxu0 0.0
        %2489 = vmatpush1.msra.mxu0 %v2307
        %2490 = vmatprep.subr.mxu0 0.0
        %2491 = vmatpush1.msra.mxu0 %v2308
        %2492 = vmatprep.mubr.f32.mxu0 %v2132
        %2493 = vmatmul.mubr.f32.gmra.mrb[0].mxu0 %v2075
        %v2494 = vpop.f32.mrb[0].mxu0
        %v2495 = vadd.f32 %v2426, %v2494
        %v2496 = vpop.f32.mrb[0].mxu0
        %2497 = vmatprep.mubr.f32.mxu0 %v2134
        %2498 = vmatmul.mubr.f32.gmra.mrb[0].mxu0 %v2076
        %v2499 = vpop.f32.mrb[0].mxu0
        %v2500 = vadd.f32 %v2426, %v2499
        %v2501 = vpop.f32.mrb[0].mxu0
        %2502 = vmatprep.mubr.f32.mxu0 %v2137
        %2503 = vmatmul.mubr.f32.gmra.mrb[0].mxu0 %v2078
        %v2504 = vpop.f32.mrb[0].mxu0
        %v2505 = vadd.f32 %v2426, %v2504
        %v2506 = vpop.f32.mrb[0].mxu0
        %2507 = vmatprep.mubr.f32.mxu0 %v2139
        %2508 = vmatmul.mubr.f32.gmra.mrb[0].mxu0 %v2079
        %v2509 = vpop.f32.mrb[0].mxu0
        %v2510 = vadd.f32 %v2426, %v2509
        %v2511 = vpop.f32.mrb[0].mxu0
        %2512 = vmatprep.mubr.f32.mxu0 %v2142
        %2513 = vmatmul.mubr.f32.gmra.mrb[0].mxu0 %v2081
        %v2514 = vpop.f32.mrb[0].mxu0
        %v2515 = vadd.f32 %v2426, %v2514
        %v2516 = vpop.f32.mrb[0].mxu0
        %2517 = vmatprep.mubr.f32.mxu0 %v2144
        %2518 = vmatmul.mubr.f32.gmra.mrb[0].mxu0 %v2082
        %v2519 = vpop.f32.mrb[0].mxu0
        %v2520 = vadd.f32 %v2426, %v2519
        %v2521 = vpop.f32.mrb[0].mxu0
        %2522 = vmatprep.mubr.f32.mxu0 %v2147
        %2523 = vmatmul.mubr.f32.gmra.mrb[0].mxu0 %v2084
        %v2524 = vpop.f32.mrb[0].mxu0
        %v2525 = vadd.f32 %v2426, %v2524
        %v2526 = vpop.f32.mrb[0].mxu0
        %2527 = vmatprep.mubr.f32.mxu0 %v2149
        %2528 = vmatmul.mubr.f32.gmra.mrb[0].mxu0 %v2085
        %v2529 = vpop.f32.mrb[0].mxu0
        %v2530 = vadd.f32 %v2426, %v2529
        %v2531 = vpop.f32.mrb[0].mxu0
        %2532 = vmatprep.mubr.f32.mxu0 %v2152
        %2533 = vmatmul.mubr.f32.gmra.mrb[0].mxu0 %v2087
        %v2534 = vpop.f32.mrb[0].mxu0
        %v2535 = vadd.f32 %v2426, %v2534
        %v2536 = vpop.f32.mrb[0].mxu0
        %2537 = vmatprep.mubr.f32.mxu0 %v2154
        %2538 = vmatmul.mubr.f32.gmra.mrb[0].mxu0 %v2088
        %v2539 = vpop.f32.mrb[0].mxu0
        %v2540 = vadd.f32 %v2426, %v2539
        %v2541 = vpop.f32.mrb[0].mxu0
        %2542 = vmatprep.mubr.f32.mxu0 %v2157
        %2543 = vmatmul.mubr.f32.gmra.mrb[0].mxu0 %v2090
        %v2544 = vpop.f32.mrb[0].mxu0
        %v2545 = vadd.f32 %v2426, %v2544
        %v2546 = vpop.f32.mrb[0].mxu0
        %2547 = vmatprep.mubr.f32.mxu0 %v2159
        %2548 = vmatmul.mubr.f32.gmra.mrb[0].mxu0 %v2091
        %v2549 = vpop.f32.mrb[0].mxu0
        %v2550 = vadd.f32 %v2426, %v2549
        %v2551 = vpop.f32.mrb[0].mxu0
        %2552 = vmatprep.mubr.f32.mxu0 %v2162
        %2553 = vmatmul.mubr.f32.gmra.mrb[0].mxu0 %v2093
        %v2554 = vpop.f32.mrb[0].mxu0
        %v2555 = vadd.f32 %v2426, %v2554
        %v2556 = vpop.f32.mrb[0].mxu0
        %2557 = vmatprep.mubr.f32.mxu0 %v2164
        %2558 = vmatmul.mubr.f32.gmra.mrb[0].mxu0 %v2094
        %v2559 = vpop.f32.mrb[0].mxu0
        %v2560 = vadd.f32 %v2426, %v2559
        %v2561 = vpop.f32.mrb[0].mxu0
        %2562 = vmatprep.mubr.f32.mxu0 %v2167
        %2563 = vmatmul.mubr.f32.gmra.mrb[0].mxu0 %v2096
        %v2564 = vpop.f32.mrb[0].mxu0
        %v2565 = vadd.f32 %v2426, %v2564
        %v2566 = vpop.f32.mrb[0].mxu0
        %2567 = vmatprep.mubr.f32.mxu0 %v2169
        %2568 = vmatmul.mubr.f32.gmra.mrb[0].mxu0 %v2097
        %v2569 = vpop.f32.mrb[0].mxu0
        %v2570 = vadd.f32 %v2426, %v2569
        %v2571 = vpop.f32.mrb[0].mxu0
        %2572 = vdwg.mxu0
        %2573 = vmatprep.subr.mxu0 0.0
        %2574 = vmatpush1.msra.mxu0 %v2309
        %2575 = vmatprep.subr.mxu0 0.0
        %2576 = vmatpush1.msra.mxu0 %v2310
        %2577 = vmatprep.subr.mxu0 0.0
        %2578 = vmatpush1.msra.mxu0 %v2311
        %2579 = vmatprep.subr.mxu0 0.0
        %2580 = vmatpush1.msra.mxu0 %v2312
        %2581 = vmatprep.subr.mxu0 0.0
        %2582 = vmatpush1.msra.mxu0 %v2313
        %2583 = vmatprep.subr.mxu0 0.0
        %2584 = vmatpush1.msra.mxu0 %v2314
        %2585 = vmatprep.subr.mxu0 0.0
        %2586 = vmatpush1.msra.mxu0 %v2315
        %2587 = vmatprep.subr.mxu0 0.0
        %2588 = vmatpush1.msra.mxu0 %v2316
        %2589 = vmatprep.subr.mxu0 0.0
        %2590 = vmatpush1.msra.mxu0 %v2317
        %2591 = vmatprep.subr.mxu0 0.0
        %2592 = vmatpush1.msra.mxu0 %v2318
        %2593 = vmatprep.subr.mxu0 0.0
        %2594 = vmatpush1.msra.mxu0 %v2319
        %2595 = vmatprep.subr.mxu0 0.0
        %2596 = vmatpush1.msra.mxu0 %v2320
        %2597 = vmatprep.subr.mxu0 0.0
        %2598 = vmatpush1.msra.mxu0 %v2321
        %2599 = vmatprep.subr.mxu0 0.0
        %2600 = vmatpush1.msra.mxu0 %v2322
        %2601 = vmatprep.subr.mxu0 0.0
        %2602 = vmatpush1.msra.mxu0 %v2323
        %2603 = vmatprep.subr.mxu0 0.0
        %2604 = vmatpush1.msra.mxu0 %v2324
        %2605 = vmatprep.subr.mxu0 0.0
        %2606 = vmatpush1.msra.mxu0 %v2325
        %2607 = vmatprep.subr.mxu0 0.0
        %2608 = vmatpush1.msra.mxu0 %v2326
        %2609 = vmatprep.subr.mxu0 0.0
        %2610 = vmatpush1.msra.mxu0 %v2327
        %2611 = vmatprep.subr.mxu0 0.0
        %2612 = vmatpush1.msra.mxu0 %v2328
        %2613 = vmatprep.subr.mxu0 0.0
        %2614 = vmatpush1.msra.mxu0 %v2329
        %2615 = vmatprep.subr.mxu0 0.0
        %2616 = vmatpush1.msra.mxu0 %v2330
        %2617 = vmatprep.subr.mxu0 0.0
        %2618 = vmatpush1.msra.mxu0 %v2331
        %2619 = vmatprep.subr.mxu0 0.0
        %2620 = vmatpush1.msra.mxu0 %v2332
        %2621 = vmatprep.subr.mxu0 0.0
        %2622 = vmatpush1.msra.mxu0 %v2333
        %2623 = vmatprep.subr.mxu0 0.0
        %2624 = vmatpush1.msra.mxu0 %v2334
        %2625 = vmatprep.subr.mxu0 0.0
        %2626 = vmatpush1.msra.mxu0 %v2335
        %2627 = vmatprep.subr.mxu0 0.0
        %2628 = vmatpush1.msra.mxu0 %v2336
        %2629 = vmatprep.subr.mxu0 0.0
        %2630 = vmatpush1.msra.mxu0 %v2337
        %2631 = vmatprep.subr.mxu0 0.0
        %2632 = vmatpush1.msra.mxu0 %v2338
        %2633 = vmatprep.subr.mxu0 0.0
        %2634 = vmatpush1.msra.mxu0 %v2339
        %2635 = vmatprep.subr.mxu0 0.0
        %2636 = vmatpush1.msra.mxu0 %v2340
        %2637 = vmatprep.mubr.f32.mxu0 %v2078
        %2638 = vmatmul.mubr.f32.gmra.mrb[0].mxu0 %v2189
        %v2639 = vpop.f32.mrb[0].mxu0
        %v2640 = vadd.f32 %v2495, %v2639
        %v2641 = vpop.f32.mrb[0].mxu0
        %2642 = vmatprep.mubr.f32.mxu0 %v2079
        %2643 = vmatmul.mubr.f32.gmra.mrb[0].mxu0 %v2191
        %v2644 = vpop.f32.mrb[0].mxu0
        %v2645 = vadd.f32 %v2500, %v2644
        %v2646 = vpop.f32.mrb[0].mxu0
        %2647 = vmatprep.mubr.f32.mxu0 %v2081
        %2648 = vmatmul.mubr.f32.gmra.mrb[0].mxu0 %v2194
        %v2649 = vpop.f32.mrb[0].mxu0
        %v2650 = vadd.f32 %v2505, %v2649
        %v2651 = vpop.f32.mrb[0].mxu0
        %2652 = vmatprep.mubr.f32.mxu0 %v2082
        %2653 = vmatmul.mubr.f32.gmra.mrb[0].mxu0 %v2196
        %v2654 = vpop.f32.mrb[0].mxu0
        %v2655 = vadd.f32 %v2510, %v2654
        %v2656 = vpop.f32.mrb[0].mxu0
        %2657 = vmatprep.mubr.f32.mxu0 %v2084
        %2658 = vmatmul.mubr.f32.gmra.mrb[0].mxu0 %v2199
        %v2659 = vpop.f32.mrb[0].mxu0
        %v2660 = vadd.f32 %v2515, %v2659
        %v2661 = vpop.f32.mrb[0].mxu0
        %2662 = vmatprep.mubr.f32.mxu0 %v2085
        %2663 = vmatmul.mubr.f32.gmra.mrb[0].mxu0 %v2201
        %v2664 = vpop.f32.mrb[0].mxu0
        %v2665 = vadd.f32 %v2520, %v2664
        %v2666 = vpop.f32.mrb[0].mxu0
        %2667 = vmatprep.mubr.f32.mxu0 %v2087
        %2668 = vmatmul.mubr.f32.gmra.mrb[0].mxu0 %v2204
        %v2669 = vpop.f32.mrb[0].mxu0
        %v2670 = vadd.f32 %v2525, %v2669
        %v2671 = vpop.f32.mrb[0].mxu0
        %2672 = vmatprep.mubr.f32.mxu0 %v2088
        %2673 = vmatmul.mubr.f32.gmra.mrb[0].mxu0 %v2206
        %v2674 = vpop.f32.mrb[0].mxu0
        %v2675 = vadd.f32 %v2530, %v2674
        %v2676 = vpop.f32.mrb[0].mxu0
        %2677 = vmatprep.mubr.f32.mxu0 %v2090
        %2678 = vmatmul.mubr.f32.gmra.mrb[0].mxu0 %v2209
        %v2679 = vpop.f32.mrb[0].mxu0
        %v2680 = vadd.f32 %v2535, %v2679
        %v2681 = vpop.f32.mrb[0].mxu0
        %2682 = vmatprep.mubr.f32.mxu0 %v2091
        %2683 = vmatmul.mubr.f32.gmra.mrb[0].mxu0 %v2211
        %v2684 = vpop.f32.mrb[0].mxu0
        %v2685 = vadd.f32 %v2540, %v2684
        %v2686 = vpop.f32.mrb[0].mxu0
        %2687 = vmatprep.mubr.f32.mxu0 %v2093
        %2688 = vmatmul.mubr.f32.gmra.mrb[0].mxu0 %v2214
        %v2689 = vpop.f32.mrb[0].mxu0
        %v2690 = vadd.f32 %v2545, %v2689
        %v2691 = vpop.f32.mrb[0].mxu0
        %2692 = vmatprep.mubr.f32.mxu0 %v2094
        %2693 = vmatmul.mubr.f32.gmra.mrb[0].mxu0 %v2216
        %v2694 = vpop.f32.mrb[0].mxu0
        %v2695 = vadd.f32 %v2550, %v2694
        %v2696 = vpop.f32.mrb[0].mxu0
        %2697 = vmatprep.mubr.f32.mxu0 %v2096
        %2698 = vmatmul.mubr.f32.gmra.mrb[0].mxu0 %v2219
        %v2699 = vpop.f32.mrb[0].mxu0
        %v2700 = vadd.f32 %v2555, %v2699
        %v2701 = vpop.f32.mrb[0].mxu0
        %2702 = vmatprep.mubr.f32.mxu0 %v2097
        %2703 = vmatmul.mubr.f32.gmra.mrb[0].mxu0 %v2221
        %v2704 = vpop.f32.mrb[0].mxu0
        %v2705 = vadd.f32 %v2560, %v2704
        %v2706 = vpop.f32.mrb[0].mxu0
        %2707 = vmatprep.mubr.f32.mxu0 %v2099
        %2708 = vmatmul.mubr.f32.gmra.mrb[0].mxu0 %v2224
        %v2709 = vpop.f32.mrb[0].mxu0
        %v2710 = vadd.f32 %v2565, %v2709
        %v2711 = vpop.f32.mrb[0].mxu0
        %2712 = vmatprep.mubr.f32.mxu0 %v2100
        %2713 = vmatmul.mubr.f32.gmra.mrb[0].mxu0 %v2226
        %v2714 = vpop.f32.mrb[0].mxu0
        %v2715 = vadd.f32 %v2570, %v2714
        %v2716 = vpop.f32.mrb[0].mxu0
        %2717 = vdwg.mxu0
        %2718 = vmatprep.subr.mxu0 0.0
        %2719 = vmatpush1.msra.mxu0 %v2341
        %2720 = vmatprep.subr.mxu0 0.0
        %2721 = vmatpush1.msra.mxu0 %v2342
        %2722 = vmatprep.subr.mxu0 0.0
        %2723 = vmatpush1.msra.mxu0 %v2343
        %2724 = vmatprep.subr.mxu0 0.0
        %2725 = vmatpush1.msra.mxu0 %v2344
        %2726 = vmatprep.subr.mxu0 0.0
        %2727 = vmatpush1.msra.mxu0 %v2345
        %2728 = vmatprep.subr.mxu0 0.0
        %2729 = vmatpush1.msra.mxu0 %v2346
        %2730 = vmatprep.subr.mxu0 0.0
        %2731 = vmatpush1.msra.mxu0 %v2347
        %2732 = vmatprep.subr.mxu0 0.0
        %2733 = vmatpush1.msra.mxu0 %v2348
        %2734 = vmatprep.subr.mxu0 0.0
        %2735 = vmatpush1.msra.mxu0 %v2349
        %2736 = vmatprep.subr.mxu0 0.0
        %2737 = vmatpush1.msra.mxu0 %v2350
        %2738 = vmatprep.subr.mxu0 0.0
        %2739 = vmatpush1.msra.mxu0 %v2351
        %2740 = vmatprep.subr.mxu0 0.0
        %2741 = vmatpush1.msra.mxu0 %v2352
        %2742 = vmatprep.subr.mxu0 0.0
        %2743 = vmatpush1.msra.mxu0 %v2353
        %2744 = vmatprep.subr.mxu0 0.0
        %2745 = vmatpush1.msra.mxu0 %v2354
        %2746 = vmatprep.subr.mxu0 0.0
        %2747 = vmatpush1.msra.mxu0 %v2355
        %2748 = vmatprep.subr.mxu0 0.0
        %2749 = vmatpush1.msra.mxu0 %v2356
        %2750 = vmatprep.subr.mxu0 0.0
        %2751 = vmatpush1.msra.mxu0 %v2357
        %2752 = vmatprep.subr.mxu0 0.0
        %2753 = vmatpush1.msra.mxu0 %v2358
        %2754 = vmatprep.subr.mxu0 0.0
        %2755 = vmatpush1.msra.mxu0 %v2359
        %2756 = vmatprep.subr.mxu0 0.0
        %2757 = vmatpush1.msra.mxu0 %v2360
        %2758 = vmatprep.subr.mxu0 0.0
        %2759 = vmatpush1.msra.mxu0 %v2361
        %2760 = vmatprep.subr.mxu0 0.0
        %2761 = vmatpush1.msra.mxu0 %v2362
        %2762 = vmatprep.subr.mxu0 0.0
        %2763 = vmatpush1.msra.mxu0 %v2363
        %2764 = vmatprep.subr.mxu0 0.0
        %2765 = vmatpush1.msra.mxu0 %v2364
        %2766 = vmatprep.subr.mxu0 0.0
        %2767 = vmatpush1.msra.mxu0 %v2365
        %2768 = vmatprep.subr.mxu0 0.0
        %2769 = vmatpush1.msra.mxu0 %v2366
        %2770 = vmatprep.subr.mxu0 0.0
        %2771 = vmatpush1.msra.mxu0 %v2367
        %2772 = vmatprep.subr.mxu0 0.0
        %2773 = vmatpush1.msra.mxu0 %v2368
        %2774 = vmatprep.subr.mxu0 0.0
        %2775 = vmatpush1.msra.mxu0 %v2369
        %2776 = vmatprep.subr.mxu0 0.0
        %2777 = vmatpush1.msra.mxu0 %v2370
        %2778 = vmatprep.subr.mxu0 0.0
        %2779 = vmatpush1.msra.mxu0 %v2371
        %2780 = vmatprep.subr.mxu0 0.0
        %2781 = vmatpush1.msra.mxu0 %v2372
        %2782 = vmatprep.mubr.f32.mxu0 %v2194
        %2783 = vmatmul.mubr.f32.gmra.mrb[0].mxu0 %v2137
        %v2784 = vpop.f32.mrb[0].mxu0
        %v2785 = vadd.f32 %v2640, %v2784
        %v2786 = vpop.f32.mrb[0].mxu0
        %2787 = vmatprep.mubr.f32.mxu0 %v2196
        %2788 = vmatmul.mubr.f32.gmra.mrb[0].mxu0 %v2139
        %v2789 = vpop.f32.mrb[0].mxu0
        %v2790 = vadd.f32 %v2645, %v2789
        %v2791 = vpop.f32.mrb[0].mxu0
        %2792 = vmatprep.mubr.f32.mxu0 %v2199
        %2793 = vmatmul.mubr.f32.gmra.mrb[0].mxu0 %v2142
        %v2794 = vpop.f32.mrb[0].mxu0
        %v2795 = vadd.f32 %v2650, %v2794
        %v2796 = vpop.f32.mrb[0].mxu0
        %2797 = vmatprep.mubr.f32.mxu0 %v2201
        %2798 = vmatmul.mubr.f32.gmra.mrb[0].mxu0 %v2144
        %v2799 = vpop.f32.mrb[0].mxu0
        %v2800 = vadd.f32 %v2655, %v2799
        %v2801 = vpop.f32.mrb[0].mxu0
        %2802 = vmatprep.mubr.f32.mxu0 %v2204
        %2803 = vmatmul.mubr.f32.gmra.mrb[0].mxu0 %v2147
        %v2804 = vpop.f32.mrb[0].mxu0
        %v2805 = vadd.f32 %v2660, %v2804
        %v2806 = vpop.f32.mrb[0].mxu0
        %2807 = vmatprep.mubr.f32.mxu0 %v2206
        %2808 = vmatmul.mubr.f32.gmra.mrb[0].mxu0 %v2149
        %v2809 = vpop.f32.mrb[0].mxu0
        %v2810 = vadd.f32 %v2665, %v2809
        %v2811 = vpop.f32.mrb[0].mxu0
        %2812 = vmatprep.mubr.f32.mxu0 %v2209
        %2813 = vmatmul.mubr.f32.gmra.mrb[0].mxu0 %v2152
        %v2814 = vpop.f32.mrb[0].mxu0
        %v2815 = vadd.f32 %v2670, %v2814
        %v2816 = vpop.f32.mrb[0].mxu0
        %2817 = vmatprep.mubr.f32.mxu0 %v2211
        %2818 = vmatmul.mubr.f32.gmra.mrb[0].mxu0 %v2154
        %v2819 = vpop.f32.mrb[0].mxu0
        %v2820 = vadd.f32 %v2675, %v2819
        %v2821 = vpop.f32.mrb[0].mxu0
        %2822 = vmatprep.mubr.f32.mxu0 %v2214
        %2823 = vmatmul.mubr.f32.gmra.mrb[0].mxu0 %v2157
        %v2824 = vpop.f32.mrb[0].mxu0
        %v2825 = vadd.f32 %v2680, %v2824
        %v2826 = vpop.f32.mrb[0].mxu0
        %2827 = vmatprep.mubr.f32.mxu0 %v2216
        %2828 = vmatmul.mubr.f32.gmra.mrb[0].mxu0 %v2159
        %v2829 = vpop.f32.mrb[0].mxu0
        %v2830 = vadd.f32 %v2685, %v2829
        %v2831 = vpop.f32.mrb[0].mxu0
        %2832 = vmatprep.mubr.f32.mxu0 %v2219
        %2833 = vmatmul.mubr.f32.gmra.mrb[0].mxu0 %v2162
        %v2834 = vpop.f32.mrb[0].mxu0
        %v2835 = vadd.f32 %v2690, %v2834
        %v2836 = vpop.f32.mrb[0].mxu0
        %2837 = vmatprep.mubr.f32.mxu0 %v2221
        %2838 = vmatmul.mubr.f32.gmra.mrb[0].mxu0 %v2164
        %v2839 = vpop.f32.mrb[0].mxu0
        %v2840 = vadd.f32 %v2695, %v2839
        %v2841 = vpop.f32.mrb[0].mxu0
        %2842 = vmatprep.mubr.f32.mxu0 %v2224
        %2843 = vmatmul.mubr.f32.gmra.mrb[0].mxu0 %v2167
        %v2844 = vpop.f32.mrb[0].mxu0
        %v2845 = vadd.f32 %v2700, %v2844
        %v2846 = vpop.f32.mrb[0].mxu0
        %2847 = vmatprep.mubr.f32.mxu0 %v2226
        %2848 = vmatmul.mubr.f32.gmra.mrb[0].mxu0 %v2169
        %v2849 = vpop.f32.mrb[0].mxu0
        %v2850 = vadd.f32 %v2705, %v2849
        %v2851 = vpop.f32.mrb[0].mxu0
        %2852 = vmatprep.mubr.f32.mxu0 %v2255
        %2853 = vmatmul.mubr.f32.gmra.mrb[0].mxu0 %v2248
        %v2854 = vpop.f32.mrb[0].mxu0
        %v2855 = vadd.f32 %v2710, %v2854
        %v2856 = vpop.f32.mrb[0].mxu0
        %2857 = vmatprep.mubr.f32.mxu0 %v2257
        %2858 = vmatmul.mubr.f32.gmra.mrb[0].mxu0 %v2250
        %v2859 = vpop.f32.mrb[0].mxu0
        %v2860 = vadd.f32 %v2715, %v2859
        %v2861 = vpop.f32.mrb[0].mxu0
        %2862 = vdwg.mxu0
        %2863 = vmatprep.subr.mxu0 0.0
        %2864 = vmatpush1.msra.mxu0 %v2373
        %2865 = vmatprep.subr.mxu0 0.0
        %2866 = vmatpush1.msra.mxu0 %v2374
        %2867 = vmatprep.subr.mxu0 0.0
        %2868 = vmatpush1.msra.mxu0 %v2375
        %2869 = vmatprep.subr.mxu0 0.0
        %2870 = vmatpush1.msra.mxu0 %v2376
        %2871 = vmatprep.subr.mxu0 0.0
        %2872 = vmatpush1.msra.mxu0 %v2377
        %2873 = vmatprep.subr.mxu0 0.0
        %2874 = vmatpush1.msra.mxu0 %v2378
        %2875 = vmatprep.subr.mxu0 0.0
        %2876 = vmatpush1.msra.mxu0 %v2379
        %2877 = vmatprep.subr.mxu0 0.0
        %2878 = vmatpush1.msra.mxu0 %v2380
        %2879 = vmatprep.subr.mxu0 0.0
        %2880 = vmatpush1.msra.mxu0 %v2381
        %2881 = vmatprep.subr.mxu0 0.0
        %2882 = vmatpush1.msra.mxu0 %v2382
        %2883 = vmatprep.subr.mxu0 0.0
        %2884 = vmatpush1.msra.mxu0 %v2383
        %2885 = vmatprep.subr.mxu0 0.0
        %2886 = vmatpush1.msra.mxu0 %v2384
        %2887 = vmatprep.subr.mxu0 0.0
        %2888 = vmatpush1.msra.mxu0 %v2385
        %2889 = vmatprep.subr.mxu0 0.0
        %2890 = vmatpush1.msra.mxu0 %v2386
        %2891 = vmatprep.subr.mxu0 0.0
        %2892 = vmatpush1.msra.mxu0 %v2387
        %2893 = vmatprep.subr.mxu0 0.0
        %2894 = vmatpush1.msra.mxu0 %v2388
        %2895 = vmatprep.subr.mxu0 0.0
        %2896 = vmatpush1.msra.mxu0 %v2389
        %2897 = vmatprep.subr.mxu0 0.0
        %2898 = vmatpush1.msra.mxu0 %v2390
        %2899 = vmatprep.subr.mxu0 0.0
        %2900 = vmatpush1.msra.mxu0 %v2391
        %2901 = vmatprep.subr.mxu0 0.0
        %2902 = vmatpush1.msra.mxu0 %v2392
        %2903 = vmatprep.subr.mxu0 0.0
        %2904 = vmatpush1.msra.mxu0 %v2393
        %2905 = vmatprep.subr.mxu0 0.0
        %2906 = vmatpush1.msra.mxu0 %v2394
        %2907 = vmatprep.subr.mxu0 0.0
        %2908 = vmatpush1.msra.mxu0 %v2395
        %2909 = vmatprep.subr.mxu0 0.0
        %2910 = vmatpush1.msra.mxu0 %v2396
        %2911 = vmatprep.subr.mxu0 0.0
        %2912 = vmatpush1.msra.mxu0 %v2397
        %2913 = vmatprep.subr.mxu0 0.0
        %2914 = vmatpush1.msra.mxu0 %v2398
        %2915 = vmatprep.subr.mxu0 0.0
        %2916 = vmatpush1.msra.mxu0 %v2399
        %2917 = vmatprep.subr.mxu0 0.0
        %2918 = vmatpush1.msra.mxu0 %v2400
        %2919 = vmatprep.subr.mxu0 0.0
        %2920 = vmatpush1.msra.mxu0 %v2401
        %2921 = vmatprep.subr.mxu0 0.0
        %2922 = vmatpush1.msra.mxu0 %v2402
        %2923 = vmatprep.subr.mxu0 0.0
        %2924 = vmatpush1.msra.mxu0 %v2403
        %2925 = vmatprep.subr.mxu0 0.0
        %2926 = vmatpush1.msra.mxu0 %v2404
        %2927 = vmatprep.mubr.f32.mxu0 %v2142
        %2928 = vmatmul.mubr.f32.gmra.mrb[0].mxu0 %v2081
        %v2929 = vpop.f32.mrb[0].mxu0
        %v2930 = vadd.f32 %v2785, %v2929
        %v2931 = vpop.f32.mrb[0].mxu0
        %2932 = vmatprep.mubr.f32.mxu0 %v2144
        %2933 = vmatmul.mubr.f32.gmra.mrb[0].mxu0 %v2082
        %v2934 = vpop.f32.mrb[0].mxu0
        %v2935 = vadd.f32 %v2790, %v2934
        %v2936 = vpop.f32.mrb[0].mxu0
        %2937 = vmatprep.mubr.f32.mxu0 %v2147
        %2938 = vmatmul.mubr.f32.gmra.mrb[0].mxu0 %v2084
        %v2939 = vpop.f32.mrb[0].mxu0
        %v2940 = vadd.f32 %v2795, %v2939
        %v2941 = vpop.f32.mrb[0].mxu0
        %2942 = vmatprep.mubr.f32.mxu0 %v2149
        %2943 = vmatmul.mubr.f32.gmra.mrb[0].mxu0 %v2085
        %v2944 = vpop.f32.mrb[0].mxu0
        %v2945 = vadd.f32 %v2800, %v2944
        %v2946 = vpop.f32.mrb[0].mxu0
        %2947 = vmatprep.mubr.f32.mxu0 %v2152
        %2948 = vmatmul.mubr.f32.gmra.mrb[0].mxu0 %v2087
        %v2949 = vpop.f32.mrb[0].mxu0
        %v2950 = vadd.f32 %v2805, %v2949
        %v2951 = vpop.f32.mrb[0].mxu0
        %2952 = vmatprep.mubr.f32.mxu0 %v2154
        %2953 = vmatmul.mubr.f32.gmra.mrb[0].mxu0 %v2088
        %v2954 = vpop.f32.mrb[0].mxu0
        %v2955 = vadd.f32 %v2810, %v2954
        %v2956 = vpop.f32.mrb[0].mxu0
        %2957 = vmatprep.mubr.f32.mxu0 %v2157
        %2958 = vmatmul.mubr.f32.gmra.mrb[0].mxu0 %v2090
        %v2959 = vpop.f32.mrb[0].mxu0
        %v2960 = vadd.f32 %v2815, %v2959
        %v2961 = vpop.f32.mrb[0].mxu0
        %2962 = vmatprep.mubr.f32.mxu0 %v2159
        %2963 = vmatmul.mubr.f32.gmra.mrb[0].mxu0 %v2091
        %v2964 = vpop.f32.mrb[0].mxu0
        %v2965 = vadd.f32 %v2820, %v2964
        %v2966 = vpop.f32.mrb[0].mxu0
        %2967 = vmatprep.mubr.f32.mxu0 %v2162
        %2968 = vmatmul.mubr.f32.gmra.mrb[0].mxu0 %v2093
        %v2969 = vpop.f32.mrb[0].mxu0
        %v2970 = vadd.f32 %v2825, %v2969
        %v2971 = vpop.f32.mrb[0].mxu0
        %2972 = vmatprep.mubr.f32.mxu0 %v2164
        %2973 = vmatmul.mubr.f32.gmra.mrb[0].mxu0 %v2094
        %v2974 = vpop.f32.mrb[0].mxu0
        %v2975 = vadd.f32 %v2830, %v2974
        %v2976 = vpop.f32.mrb[0].mxu0
        %2977 = vmatprep.mubr.f32.mxu0 %v2167
        %2978 = vmatmul.mubr.f32.gmra.mrb[0].mxu0 %v2096
        %v2979 = vpop.f32.mrb[0].mxu0
        %v2980 = vadd.f32 %v2835, %v2979
        %v2981 = vpop.f32.mrb[0].mxu0
        %2982 = vmatprep.mubr.f32.mxu0 %v2169
        %2983 = vmatmul.mubr.f32.gmra.mrb[0].mxu0 %v2097
        %v2984 = vpop.f32.mrb[0].mxu0
        %v2985 = vadd.f32 %v2840, %v2984
        %v2986 = vpop.f32.mrb[0].mxu0
        %2987 = vmatprep.mubr.f32.mxu0 %v2248
        %2988 = vmatmul.mubr.f32.gmra.mrb[0].mxu0 %v2099
        %v2989 = vpop.f32.mrb[0].mxu0
        %v2990 = vadd.f32 %v2845, %v2989
        %v2991 = vpop.f32.mrb[0].mxu0
        %2992 = vmatprep.mubr.f32.mxu0 %v2250
        %2993 = vmatmul.mubr.f32.gmra.mrb[0].mxu0 %v2100
        %v2994 = vpop.f32.mrb[0].mxu0
        %v2995 = vadd.f32 %v2850, %v2994
        %v2996 = vpop.f32.mrb[0].mxu0
        %2997 = vmatprep.mubr.f32.mxu0 %v2265
        %2998 = vmatmul.mubr.f32.gmra.mrb[0].mxu0 %v2102
        %v2999 = vpop.f32.mrb[0].mxu0
        %v3000 = vadd.f32 %v2855, %v2999
        %v3001 = vpop.f32.mrb[0].mxu0
        %3002 = vmatprep.mubr.f32.mxu0 %v2267
        %3003 = vmatmul.mubr.f32.gmra.mrb[0].mxu0 %v2103
        %v3004 = vpop.f32.mrb[0].mxu0
        %v3005 = vadd.f32 %v2860, %v3004
        %v3006 = vpop.f32.mrb[0].mxu0
        %3007 = vdwg.mxu0
        %3008 = vmatprep.subr.mxu0 0.0
        %3009 = vmatpush1.msra.mxu0 %v2405
        %3010 = vmatprep.subr.mxu0 0.0
        %3011 = vmatpush1.msra.mxu0 %v2406
        %3012 = vmatprep.subr.mxu0 0.0
        %3013 = vmatpush1.msra.mxu0 %v2407
        %3014 = vmatprep.subr.mxu0 0.0
        %3015 = vmatpush1.msra.mxu0 %v2408
        %3016 = vmatprep.subr.mxu0 0.0
        %3017 = vmatpush1.msra.mxu0 %v2409
        %3018 = vmatprep.subr.mxu0 0.0
        %3019 = vmatpush1.msra.mxu0 %v2410
        %3020 = vmatprep.subr.mxu0 0.0
        %3021 = vmatpush1.msra.mxu0 %v2411
        %3022 = vmatprep.subr.mxu0 0.0
        %3023 = vmatpush1.msra.mxu0 %v2412
        %3024 = vmatprep.subr.mxu0 0.0
        %3025 = vmatpush1.msra.mxu0 %v2413
        %3026 = vmatprep.subr.mxu0 0.0
        %3027 = vmatpush1.msra.mxu0 %v2414
        %3028 = vmatprep.subr.mxu0 0.0
        %3029 = vmatpush1.msra.mxu0 %v2415
        %3030 = vmatprep.subr.mxu0 0.0
        %3031 = vmatpush1.msra.mxu0 %v2416
        %3032 = vmatprep.subr.mxu0 0.0
        %3033 = vmatpush1.msra.mxu0 %v2417
        %3034 = vmatprep.subr.mxu0 0.0
        %3035 = vmatpush1.msra.mxu0 %v2418
        %3036 = vmatprep.subr.mxu0 0.0
        %3037 = vmatpush1.msra.mxu0 %v2419
        %3038 = vmatprep.subr.mxu0 0.0
        %3039 = vmatpush1.msra.mxu0 %v2420
        %3040 = vmatprep.subr.mxu0 0.0
        %3041 = vmatpush1.msra.mxu0 0.0
        %3042 = vmatprep.subr.mxu0 0.0
        %3043 = vmatpush1.msra.mxu0 0.0
        %3044 = vmatprep.subr.mxu0 0.0
        %3045 = vmatpush1.msra.mxu0 0.0
        %3046 = vmatprep.subr.mxu0 0.0
        %3047 = vmatpush1.msra.mxu0 0.0
        %3048 = vmatprep.subr.mxu0 0.0
        %3049 = vmatpush1.msra.mxu0 0.0
        %3050 = vmatprep.subr.mxu0 0.0
        %3051 = vmatpush1.msra.mxu0 0.0
        %3052 = vmatprep.subr.mxu0 0.0
        %3053 = vmatpush1.msra.mxu0 0.0
        %3054 = vmatprep.subr.mxu0 0.0
        %3055 = vmatpush1.msra.mxu0 0.0
        %3056 = vmatprep.subr.mxu0 0.0
        %3057 = vmatpush1.msra.mxu0 0.0
        %3058 = vmatprep.subr.mxu0 0.0
        %3059 = vmatpush1.msra.mxu0 0.0
        %3060 = vmatprep.subr.mxu0 0.0
        %3061 = vmatpush1.msra.mxu0 0.0
        %3062 = vmatprep.subr.mxu0 0.0
        %3063 = vmatpush1.msra.mxu0 0.0
        %3064 = vmatprep.subr.mxu0 0.0
        %3065 = vmatpush1.msra.mxu0 0.0
        %3066 = vmatprep.subr.mxu0 0.0
        %3067 = vmatpush1.msra.mxu0 0.0
        %3068 = vmatprep.subr.mxu0 0.0
        %3069 = vmatpush1.msra.mxu0 0.0
        %3070 = vmatprep.subr.mxu0 0.0
        %3071 = vmatpush1.msra.mxu0 0.0
        %3072 = vmatprep.mubr.f32.mxu0 0.0
        %3073 = vmatmul.mubr.f32.gmra.mrb[0].mxu0 %v2199
        %v3074 = vpop.f32.mrb[0].mxu0
        %v3075 = vadd.f32 %v2930, %v3074
        %v3076 = vpop.f32.mrb[0].mxu0
        %3077 = vmatprep.mubr.f32.mxu0 0.0
        %3078 = vmatmul.mubr.f32.gmra.mrb[0].mxu0 %v2201
        %v3079 = vpop.f32.mrb[0].mxu0
        %v3080 = vadd.f32 %v2935, %v3079
        %v3081 = vpop.f32.mrb[0].mxu0
        %3082 = vmatprep.mubr.f32.mxu0 0.0
        %3083 = vmatmul.mubr.f32.gmra.mrb[0].mxu0 %v2204
        %v3084 = vpop.f32.mrb[0].mxu0
        %v3085 = vadd.f32 %v2940, %v3084
        %v3086 = vpop.f32.mrb[0].mxu0
        %3087 = vmatprep.mubr.f32.mxu0 0.0
        %3088 = vmatmul.mubr.f32.gmra.mrb[0].mxu0 %v2206
        %v3089 = vpop.f32.mrb[0].mxu0
        %v3090 = vadd.f32 %v2945, %v3089
        %v3091 = vpop.f32.mrb[0].mxu0
        %3092 = vmatprep.mubr.f32.mxu0 0.0
        %3093 = vmatmul.mubr.f32.gmra.mrb[0].mxu0 %v2209
        %v3094 = vpop.f32.mrb[0].mxu0
        %v3095 = vadd.f32 %v2950, %v3094
        %v3096 = vpop.f32.mrb[0].mxu0
        %3097 = vmatprep.mubr.f32.mxu0 0.0
        %3098 = vmatmul.mubr.f32.gmra.mrb[0].mxu0 %v2211
        %v3099 = vpop.f32.mrb[0].mxu0
        %v3100 = vadd.f32 %v2955, %v3099
        %v3101 = vpop.f32.mrb[0].mxu0
        %3102 = vmatprep.mubr.f32.mxu0 0.0
        %3103 = vmatmul.mubr.f32.gmra.mrb[0].mxu0 %v2214
        %v3104 = vpop.f32.mrb[0].mxu0
        %v3105 = vadd.f32 %v2960, %v3104
        %v3106 = vpop.f32.mrb[0].mxu0
        %3107 = vmatprep.mubr.f32.mxu0 0.0
        %3108 = vmatmul.mubr.f32.gmra.mrb[0].mxu0 %v2216
        %v3109 = vpop.f32.mrb[0].mxu0
        %v3110 = vadd.f32 %v2965, %v3109
        %v3111 = vpop.f32.mrb[0].mxu0
        %3112 = vmatprep.mubr.f32.mxu0 0.0
        %3113 = vmatmul.mubr.f32.gmra.mrb[0].mxu0 %v2219
        %v3114 = vpop.f32.mrb[0].mxu0
        %v3115 = vadd.f32 %v2970, %v3114
        %v3116 = vpop.f32.mrb[0].mxu0
        %3117 = vmatprep.mubr.f32.mxu0 0.0
        %3118 = vmatmul.mubr.f32.gmra.mrb[0].mxu0 %v2221
        %v3119 = vpop.f32.mrb[0].mxu0
        %v3120 = vadd.f32 %v2975, %v3119
        %v3121 = vpop.f32.mrb[0].mxu0
        %3122 = vmatprep.mubr.f32.mxu0 0.0
        %3123 = vmatmul.mubr.f32.gmra.mrb[0].mxu0 %v2224
        %v3124 = vpop.f32.mrb[0].mxu0
        %v3125 = vadd.f32 %v2980, %v3124
        %v3126 = vpop.f32.mrb[0].mxu0
        %3127 = vmatprep.mubr.f32.mxu0 0.0
        %3128 = vmatmul.mubr.f32.gmra.mrb[0].mxu0 %v2226
        %v3129 = vpop.f32.mrb[0].mxu0
        %v3130 = vadd.f32 %v2985, %v3129
        %v3131 = vpop.f32.mrb[0].mxu0
        %3132 = vmatprep.mubr.f32.mxu0 0.0
        %3133 = vmatmul.mubr.f32.gmra.mrb[0].mxu0 %v2255
        %v3134 = vpop.f32.mrb[0].mxu0
        %v3135 = vadd.f32 %v2990, %v3134
        %v3136 = vpop.f32.mrb[0].mxu0
        %3137 = vmatprep.mubr.f32.mxu0 0.0
        %3138 = vmatmul.mubr.f32.gmra.mrb[0].mxu0 %v2257
        %v3139 = vpop.f32.mrb[0].mxu0
        %v3140 = vadd.f32 %v2995, %v3139
        %v3141 = vpop.f32.mrb[0].mxu0
        %3142 = vmatprep.mubr.f32.mxu0 0.0
        %3143 = vmatmul.mubr.f32.gmra.mrb[0].mxu0 %v2272
        %v3144 = vpop.f32.mrb[0].mxu0
        %v3145 = vadd.f32 %v3000, %v3144
        %v3146 = vpop.f32.mrb[0].mxu0
        %3147 = vmatprep.mubr.f32.mxu0 0.0
        %3148 = vmatmul.mubr.f32.gmra.mrb[0].mxu0 %v2274
        %v3149 = vpop.f32.mrb[0].mxu0
        %v3150 = vadd.f32 %v3005, %v3149
        %v3151 = vpop.f32.mrb[0].mxu0
        %3152 = vdwg.mxu0
        %s3153 = smul.u32 %s2072, 16
        %s3154 = scalar_lea.vmem %s251, %s3153 [#allocation4]
        %v3155 = vld [vmem:[%s3154] sm:$0xff]
        %v3156 = vld [vmem:[%s3154 + $0x8] sm:$0xff]
        %v3157 = vld [vmem:[%s3154 + $0x10] sm:$0xff]
        %v3158 = vld [vmem:[%s3154 + $0x18] sm:$0xff]
        %v3159 = vld [vmem:[%s3154 + $0x20] sm:$0xff]
        %v3160 = vld [vmem:[%s3154 + $0x28] sm:$0xff]
        %v3161 = vld [vmem:[%s3154 + $0x30] sm:$0xff]
        %v3162 = vld [vmem:[%s3154 + $0x38] sm:$0xff]
        %v3163 = vld [vmem:[%s3154 + $0x40] sm:$0xff]
        %v3164 = vld [vmem:[%s3154 + $0x48] sm:$0xff]
        %v3165 = vld [vmem:[%s3154 + $0x50] sm:$0xff]
        %v3166 = vld [vmem:[%s3154 + $0x58] sm:$0xff]
        %v3167 = vld [vmem:[%s3154 + $0x60] sm:$0xff]
        %v3168 = vld [vmem:[%s3154 + $0x68] sm:$0xff]
        %v3169 = vld [vmem:[%s3154 + $0x70] sm:$0xff]
        %v3170 = vld [vmem:[%s3154 + $0x78] sm:$0xff]
        %v3171 = vadd.f32 %v3075, %v3155
        %v3172 = vadd.f32 %v3080, %v3156
        %v3173 = vadd.f32 %v3085, %v3157
        %v3174 = vadd.f32 %v3090, %v3158
        %v3175 = vadd.f32 %v3095, %v3159
        %v3176 = vadd.f32 %v3100, %v3160
        %v3177 = vadd.f32 %v3105, %v3161
        %v3178 = vadd.f32 %v3110, %v3162
        %v3179 = vadd.f32 %v3115, %v3163
        %v3180 = vadd.f32 %v3120, %v3164
        %v3181 = vadd.f32 %v3125, %v3165
        %v3182 = vadd.f32 %v3130, %v3166
        %v3183 = vadd.f32 %v3135, %v3167
        %v3184 = vadd.f32 %v3140, %v3168
        %v3185 = vadd.f32 %v3145, %v3169
        %v3186 = vadd.f32 %v3150, %v3170
        %v3187 = vmax.f32 %v3171, 0.0
        %v3188 = vmax.f32 %v3172, 0.0
        %v3189 = vmax.f32 %v3173, 0.0
        %v3190 = vmax.f32 %v3174, 0.0
        %v3191 = vmax.f32 %v3175, 0.0
        %v3192 = vmax.f32 %v3176, 0.0
        %v3193 = vmax.f32 %v3177, 0.0
        %v3194 = vmax.f32 %v3178, 0.0
        %v3195 = vmax.f32 %v3179, 0.0
        %v3196 = vmax.f32 %v3180, 0.0
        %v3197 = vmax.f32 %v3181, 0.0
        %v3198 = vmax.f32 %v3182, 0.0
        %v3199 = vmax.f32 %v3183, 0.0
        %v3200 = vmax.f32 %v3184, 0.0
        %v3201 = vmax.f32 %v3185, 0.0
        %v3202 = vmax.f32 %v3186, 0.0
        %3203 = vst [vmem:[%s285] sm:$0xff] %v3187
        %3204 = vst [vmem:[%s285 + $0x8] sm:$0xff] %v3188
        %3205 = vst [vmem:[%s285 + $0x10] sm:$0xff] %v3189
        %3206 = vst [vmem:[%s285 + $0x18] sm:$0xff] %v3190
        %3207 = vst [vmem:[%s285 + $0x20] sm:$0xff] %v3191
        %3208 = vst [vmem:[%s285 + $0x28] sm:$0xff] %v3192
        %3209 = vst [vmem:[%s285 + $0x30] sm:$0xff] %v3193
        %3210 = vst [vmem:[%s285 + $0x38] sm:$0xff] %v3194
        %3211 = vst [vmem:[%s285 + $0x40] sm:$0xff] %v3195
        %3212 = vst [vmem:[%s285 + $0x48] sm:$0xff] %v3196
        %3213 = vst [vmem:[%s285 + $0x50] sm:$0xff] %v3197
        %3214 = vst [vmem:[%s285 + $0x58] sm:$0xff] %v3198
        %3215 = vst [vmem:[%s285 + $0x60] sm:$0xff] %v3199
        %3216 = vst [vmem:[%s285 + $0x68] sm:$0xff] %v3200
        %3217 = vst [vmem:[%s285 + $0x70] sm:$0xff] %v3201
        %3218 = vst [vmem:[%s285 + $0x78] sm:$0xff] %v3202
        %s3219 = sand.u32 %s155, 1
        %s3220 = scalar_lea.sflag [#allocation6], %s3219
        %s3221 = sand.u32 %s155, 1
        %s3222 = smul.addr %s3221, 128
        %s3223 = scalar_lea.vmem [#allocation10], %s3222
        // Predicated region
        $region57: #{tpu_custom_call.1} parent=39 // pred_check
          %p3224 = pneg %p165
        $region58: #{tpu_custom_call.1} parent=39 // pred_check_branch
          %3226 = sbr.rel (%p3224) target = $region60
        $region59: #{tpu_custom_call.1} parent=39 // pred_region
          %s3227 = smul.u32 8, %s28
          %s3229 = ssub.s32 2048, 2048
          %3230 = vsyncadd %s3220, %s3229
          %s3231 = smul.addr %s3227, 2
          %s3232 = smul.addr %s27, 32
          %s3233 = sadd.s32 %s3231, %s3232
          %s3234 = smul.addr %s3233, 128
          %s3235 = scalar_lea.hbm %s5, %s3234
          %s3236 = sshll.u32 %s3223, 4
          %s3237 = int_to_ptr.vmem [resolvable:$true] %s3236
          %3242 = dma.vmem_to_hbm [thread:$0]  %s3237, 2048, %s3235, %s3220, 128, 128, 8
        $region60: #{tpu_custom_call.1} parent=39 // pred_fallthru
          _
      $region40: #{tpu_custom_call.1} parent=5 // pred_fallthru
        _
      %p3243 = scmp.le.s32.totalorder 2, %s18
      // Predicated region
      $region61: #{tpu_custom_call.1} parent=5 // pred_check
        %p3244 = pneg %p3243
      $region62: #{tpu_custom_call.1} parent=5 // pred_check_branch
        %3246 = sbr.rel (%p3244) target = $region64
      $region63: #{tpu_custom_call.1} parent=5 // pred_region
        %s3247 = ssub.s32 %s18, 2
        // Predicated region
        $region65: #{tpu_custom_call.1} parent=63 // pred_check
          %p3248 = pneg %p171
        $region66: #{tpu_custom_call.1} parent=63 // pred_check_branch
          %3250 = sbr.rel (%p3248) target = $region68
        $region67: #{tpu_custom_call.1} parent=63 // pred_region
          %s3251 = sand.u32 %s156, 1
          %s3252 = scalar_lea.sflag [#allocation6], %s3251
          %s3253 = sand.u32 %s156, 1
          %s3254 = smul.addr %s3253, 128
          %s3255 = scalar_lea.vmem [#allocation10], %s3254
          %3256 = dma.done %s3252, 2048
        $region68: #{tpu_custom_call.1} parent=63 // pred_fallthru
          _
      $region64: #{tpu_custom_call.1} parent=5 // pred_fallthru
        _
    $region6: #{tpu_custom_call.1} parent=1 // loop_footer
      %s22 = sadd.s32 1, %s18
    $region7: #{tpu_custom_call.1} parent=1 // loop_footer_branch
      %17 = sbr.rel target = $region3
    $region8: #{tpu_custom_call.1} parent=1 // loop_exit
      _
    %3257 = vsyncpa [#allocation5], 1
    %s3258 = scalar_lea.sflag [#allocation5], 1
    %3259 = vsyncpa %s3258, 1
    %3260 = vsyncpa [#allocation8], 1
    %3261 = vsyncpa [#allocation6], 1
    %s3262 = scalar_lea.sflag [#allocation6], 1
    %3263 = vsyncpa %s3262, 1

</llo_original>
